<compile_context>
chip_gen: v6e
topology: v6e:2x2x1
jax: 0.10.0
libtpu: 0.0.40
codegen_flags: <defaults>
</compile_context>

<pallas_src>
import functools

import jax
import jax.numpy as jnp
from jax import lax
from jax.experimental import pallas as pl
from jax.experimental.pallas import tpu as pltpu


def _ccat_kernel(x_ref, wa_ref, wv_ref, wp_ref, bp_ref, o_ref, *,
                 Bb, N, C, H, D, mm_dtype):
    f32 = jnp.float32
    xm = x_ref[...].astype(mm_dtype)        # (Bb*N, C)   batch block, flattened
    wa = wa_ref[...].astype(mm_dtype)       # (C, H)      W_A^T
    wv = wv_ref[...].astype(mm_dtype)       # (C, C)      W_V^T
    wp = wp_ref[...].astype(mm_dtype)       # (C, C)      proj W^T
    bp = bp_ref[...]                        # (1, C)      proj bias (f32)

    # ---- projections, folded over the batch block (MXU M dim = Bb*N) ----
    z = jnp.dot(xm, wa, preferred_element_type=f32)      # (Bb*N, H)
    V = jnp.dot(xm, wv, preferred_element_type=f32)      # (Bb*N, C)

    # ---- causal mask scaled by 1/N, built once per grid step ----
    i_idx = lax.broadcasted_iota(jnp.int32, (N, N), 0)
    j_idx = lax.broadcasted_iota(jnp.int32, (N, N), 1)
    mask = jnp.where(j_idx <= i_idx, 1.0 / N, 0.0).astype(f32)   # (N, N)

    outs = []
    for b in range(Bb):
        zb = z[b * N:(b + 1) * N, :]                             # (N, H)
        # softmax over the sequence axis (torch dim=1 of (B, N, H)), f32
        zmax = jnp.max(zb, axis=0, keepdims=True)
        ez = jnp.exp(zb - zmax)
        zs = ez / jnp.sum(ez, axis=0, keepdims=True)             # (N, H)
        zs_t = zs.T                                              # (H, N) small XLU transpose
        Vb = V[b * N:(b + 1) * N, :]                             # (N, C)

        head_outs = []
        for h in range(H):
            row = zs_t[h:h + 1, :]                               # (1, N)
            # circ[i, j] = zs[(j - i) % N, h]: row i rolled by +i (strided XLU roll)
            circ = pltpu.roll(jnp.broadcast_to(row, (N, N)),
                              shift=0, axis=1, stride=1, stride_axis=0)
            w_h = circ * mask                                    # causal + 1/N, f32
            v_h = Vb[:, h * D:(h + 1) * D]                       # (N, D) static slice
            head_outs.append(
                jnp.dot(w_h.astype(mm_dtype), v_h.astype(mm_dtype),
                        preferred_element_type=f32))             # (N, D)
        outs.append(jnp.concatenate(head_outs, axis=1))          # (N, C)

    attn = outs[0] if Bb == 1 else jnp.concatenate(outs, axis=0)  # (Bb*N, C)

    # ---- output projection ----
    y = jnp.dot(attn.astype(mm_dtype), wp, preferred_element_type=f32) + bp
    o_ref[...] = y.astype(o_ref.dtype)                           # lane-dense store


def _pick_batch_block(B, N, C, *, itemsize=4, vmem_budget_bytes=8 << 20):
    """Largest divisor of B whose double-buffered in/out blocks fit the budget,
    preferring >= 2 grid steps so both v7x TensorCores get work."""
    def fits(d):
        return 4 * d * N * C * itemsize <= vmem_budget_bytes   # (in + out) x 2 buffers
    divs = [d for d in range(1, B + 1) if B % d == 0 and fits(d)]
    if not divs:
        return 1
    pref = [d for d in divs if B // d >= 2]
    return max(pref) if pref else max(divs)


def ccat_forward(x, wa_t, wv_t, wp_t, proj_bias, num_heads, *,
                 mm_dtype=jnp.float32, batch_block=None):
    """x: (B, N, C); weights pre-transposed to (in, out); returns (B, N, C)."""
    B, N, C = x.shape
    H = num_heads
    D = C // H
    Bb = batch_block if batch_block is not None else _pick_batch_block(B, N, C)
    assert B % Bb == 0, (B, Bb)

    out_dtype = x.dtype
    x2 = x.reshape(B * N, C).astype(mm_dtype)      # contiguous; bf16 halves input DMA
    wa = wa_t.astype(mm_dtype)
    wv = wv_t.astype(mm_dtype)
    wp = wp_t.astype(mm_dtype)
    bp = proj_bias.reshape(1, C).astype(jnp.float32)

    kernel = functools.partial(_ccat_kernel, Bb=Bb, N=N, C=C, H=H, D=D,
                               mm_dtype=mm_dtype)
    y2 = pl.pallas_call(
        kernel,
        out_shape=jax.ShapeDtypeStruct((B * N, C), out_dtype),
        grid_spec=pltpu.PrefetchScalarGridSpec(
            num_scalar_prefetch=0,
            grid=(B // Bb,),
            in_specs=[
                pl.BlockSpec((Bb * N, C), lambda g: (g, 0)),   # x slab
                pl.BlockSpec((C, H), lambda g: (0, 0)),        # W_A^T (resident)
                pl.BlockSpec((C, C), lambda g: (0, 0)),        # W_V^T (resident)
                pl.BlockSpec((C, C), lambda g: (0, 0)),        # proj W^T (resident)
                pl.BlockSpec((1, C), lambda g: (0, 0)),        # proj bias
            ],
            out_specs=pl.BlockSpec((Bb * N, C), lambda g: (g, 0)),
        ),
        compiler_params=pltpu.CompilerParams(
            dimension_semantics=("parallel",)),
    )(x2, wa, wv, wp, bp)
    return y2.reshape(B, N, C)


def ccat_reference(x, wa_t, wv_t, wp_t, proj_bias, num_heads):
    """Pure-JAX reference mirroring the PyTorch module exactly."""
    B, N, C = x.shape
    H, D = num_heads, C // num_heads
    z = x @ wa_t                                                  # (B, N, H)
    z_star = jax.nn.softmax(z, axis=1)
    z_star = jnp.transpose(z_star, (0, 2, 1))                     # (B, H, N)
    V = (x @ wv_t).reshape(B, N, H, D).transpose(0, 2, 1, 3)      # (B, H, N, D)
    j = jnp.arange(N)[None, :]
    i = jnp.arange(N)[:, None]
    idx = (j - i) % N                                             # (N, N)
    roll = z_star[:, :, idx] / N                                  # (B, H, N, N)
    roll = jnp.where((j <= i)[None, None], roll, 0.0)
    out = jnp.einsum('bhij,bhjd->bhid', roll, V)
    out = out.transpose(0, 2, 1, 3).reshape(B, N, C)
    return out @ wp_t + proj_bias[None, None, :]


if __name__ == "__main__":
    # dim=128, num_heads=8 (head_dim=16), qkv_bias=False, seq=128, batch=4.
    # C=128 keeps every tile lane-native and the output stores unmasked.
    B, N, C, H = 4, 128, 128, 8
    key = jax.random.PRNGKey(0)
    kx, ka, kv, kp, kb = jax.random.split(key, 5)

    x = jax.random.normal(kx, (B, N, C), jnp.float32)
    wa_t = jax.random.normal(ka, (C, H), jnp.float32) * 0.1    # W_A.weight.T
    wv_t = jax.random.normal(kv, (C, C), jnp.float32) * 0.1    # W_V.weight.T
    wp_t = jax.random.normal(kp, (C, C), jnp.float32) * 0.1    # proj.weight.T
    bp = jax.random.normal(kb, (C,), jnp.float32) * 0.1        # proj.bias

    y_ref = ccat_reference(x, wa_t, wv_t, wp_t, bp, H)

    # f32 MXU path (v5e default): strict check.
    y32 = ccat_forward(x, wa_t, wv_t, wp_t, bp, H, mm_dtype=jnp.float32)
    jax.block_until_ready(y32)
    err32 = float(jnp.max(jnp.abs(y32 - y_ref)))
    assert jnp.allclose(y32, y_ref, atol=1e-3, rtol=1e-3), f"f32 max abs err {err32}"

    # bf16 MXU-feed path (v6e/v7x recommendation, f32 accumulation): looser check.
    ybf = ccat_forward(x, wa_t, wv_t, wp_t, bp, H, mm_dtype=jnp.bfloat16)
    jax.block_until_ready(ybf)
    errbf = float(jnp.max(jnp.abs(ybf - y_ref)))
    assert jnp.allclose(ybf, y_ref, atol=1e-2, rtol=1e-2), f"bf16 max abs err {errbf}"

    print("KERNEL_OK")
</pallas_src>

<mosaic_0001>
module attributes {stable_mosaic.version = 11 : i64} {
  func.func @_ccat_kernel(%arg0: i32, %arg1: memref<256x128xf32, #tpu.memory_space<vmem>>, %arg2: memref<128x8xf32, #tpu.memory_space<vmem>>, %arg3: memref<128x128xf32, #tpu.memory_space<vmem>>, %arg4: memref<128x128xf32, #tpu.memory_space<vmem>>, %arg5: memref<1x128xf32, #tpu.memory_space<vmem>>, %arg6: memref<256x128xf32, #tpu.memory_space<vmem>>) attributes {dimension_semantics = [#tpu.dimension_semantics<parallel>], iteration_bounds = array<i64: 2>, scalar_prefetch = 0 : i64, scratch_operands = 0 : i64, tpu.core_type = #tpu.core_type<tc>, window_params = [{transform_indices = @transform_0, window_bounds = array<i64: 256, 128>}, {pipeline_mode = #tpu.pipeline_mode<synchronous>, transform_indices = @transform_1, window_bounds = array<i64: 128, 8>}, {pipeline_mode = #tpu.pipeline_mode<synchronous>, transform_indices = @transform_2, window_bounds = array<i64: 128, 128>}, {pipeline_mode = #tpu.pipeline_mode<synchronous>, transform_indices = @transform_3, window_bounds = array<i64: 128, 128>}, {pipeline_mode = #tpu.pipeline_mode<synchronous>, transform_indices = @transform_4, window_bounds = array<i64: 1, 128>}, {transform_indices = @transform_5, window_bounds = array<i64: 256, 128>}]} {
    %c0 = arith.constant 0 : index
    %c0_0 = arith.constant 0 : index
    %0 = vector.load %arg1[%c0, %c0_0] : memref<256x128xf32, #tpu.memory_space<vmem>>, vector<256x128xf32>
    %c0_1 = arith.constant 0 : index
    %c0_2 = arith.constant 0 : index
    %1 = vector.load %arg2[%c0_1, %c0_2] : memref<128x8xf32, #tpu.memory_space<vmem>>, vector<128x8xf32>
    %c0_3 = arith.constant 0 : index
    %c0_4 = arith.constant 0 : index
    %2 = vector.load %arg3[%c0_3, %c0_4] : memref<128x128xf32, #tpu.memory_space<vmem>>, vector<128x128xf32>
    %c0_5 = arith.constant 0 : index
    %c0_6 = arith.constant 0 : index
    %3 = vector.load %arg4[%c0_5, %c0_6] : memref<128x128xf32, #tpu.memory_space<vmem>>, vector<128x128xf32>
    %c0_7 = arith.constant 0 : index
    %c0_8 = arith.constant 0 : index
    %4 = vector.load %arg5[%c0_7, %c0_8] : memref<1x128xf32, #tpu.memory_space<vmem>>, vector<1x128xf32>
    %cst = arith.constant dense<0.000000e+00> : vector<256x8xf32>
    %5 = tpu.matmul %0, %1, %cst {dimension_numbers = #tpu.dot_dimension_numbers<[1], [0], [0], [1], [0, 0, 1, 1], [], []>} : vector<256x128xf32>, vector<128x8xf32>, vector<256x8xf32> -> vector<256x8xf32>
    %cst_9 = arith.constant dense<0.000000e+00> : vector<256x128xf32>
    %6 = tpu.matmul %0, %2, %cst_9 {dimension_numbers = #tpu.dot_dimension_numbers<[1], [0], [0], [1], [0, 0, 1, 1], [], []>} : vector<256x128xf32>, vector<128x128xf32>, vector<256x128xf32> -> vector<256x128xf32>
    %7 = tpu.iota {dimensions = array<i32: 0>} : vector<128x128xi32>
    %8 = tpu.iota {dimensions = array<i32: 1>} : vector<128x128xi32>
    %9 = arith.cmpi sle, %8, %7 : vector<128x128xi32>
    %cst_10 = arith.constant 7.812500e-03 : f32
    %cst_11 = arith.constant 0.000000e+00 : f32
    %10 = vector.broadcast %cst_10 : f32 to vector<128x128xf32>
    %11 = vector.broadcast %cst_11 : f32 to vector<128x128xf32>
    %12 = arith.select %9, %10, %11 : vector<128x128xi1>, vector<128x128xf32>
    %13 = vector.extract_strided_slice %5 {offsets = [0, 0], sizes = [128, 8], strides = [1, 1]} : vector<256x8xf32> to vector<128x8xf32>
    %cst_12 = arith.constant dense<0xFF800000> : vector<8xf32>
    %14 = vector.multi_reduction <maximumf>, %13, %cst_12 [0] : vector<128x8xf32> to vector<8xf32>
    %15 = vector.shape_cast %14 : vector<8xf32> to vector<1x8xf32>
    %16 = vector.broadcast %15 : vector<1x8xf32> to vector<128x8xf32>
    %17 = arith.subf %13, %16 : vector<128x8xf32>
    %18 = math.exp %17 : vector<128x8xf32>
    %cst_13 = arith.constant dense<0.000000e+00> : vector<8xf32>
    %19 = vector.multi_reduction <add>, %18, %cst_13 [0] : vector<128x8xf32> to vector<8xf32>
    %20 = vector.shape_cast %19 : vector<8xf32> to vector<1x8xf32>
    %21 = vector.broadcast %20 : vector<1x8xf32> to vector<128x8xf32>
    %22 = arith.divf %18, %21 : vector<128x8xf32>
    %23 = tpu.transpose %22, [1, 0] : vector<128x8xf32> -> vector<8x128xf32>
    %24 = vector.extract_strided_slice %6 {offsets = [0, 0], sizes = [128, 128], strides = [1, 1]} : vector<256x128xf32> to vector<128x128xf32>
    %25 = vector.extract_strided_slice %23 {offsets = [0, 0], sizes = [1, 128], strides = [1, 1]} : vector<8x128xf32> to vector<1x128xf32>
    %26 = vector.shape_cast %25 : vector<1x128xf32> to vector<1x128xf32>
    %27 = vector.broadcast %26 : vector<1x128xf32> to vector<128x128xf32>
    %c0_i32 = arith.constant 0 : i32
    %28 = tpu.dynamic_rotate %27 by %c0_i32 dim 1 {stride = 1 : si32, stride_dimension = 0 : si32} : vector<128x128xf32>, i32 -> vector<128x128xf32>
    %29 = arith.mulf %28, %12 : vector<128x128xf32>
    %30 = vector.extract_strided_slice %24 {offsets = [0, 0], sizes = [128, 16], strides = [1, 1]} : vector<128x128xf32> to vector<128x16xf32>
    %cst_14 = arith.constant dense<0.000000e+00> : vector<128x16xf32>
    %31 = tpu.matmul %29, %30, %cst_14 {dimension_numbers = #tpu.dot_dimension_numbers<[1], [0], [0], [1], [0, 0, 1, 1], [], []>} : vector<128x128xf32>, vector<128x16xf32>, vector<128x16xf32> -> vector<128x16xf32>
    %32 = vector.extract_strided_slice %23 {offsets = [1, 0], sizes = [1, 128], strides = [1, 1]} : vector<8x128xf32> to vector<1x128xf32>
    %33 = vector.shape_cast %32 : vector<1x128xf32> to vector<1x128xf32>
    %34 = vector.broadcast %33 : vector<1x128xf32> to vector<128x128xf32>
    %c0_i32_15 = arith.constant 0 : i32
    %35 = tpu.dynamic_rotate %34 by %c0_i32_15 dim 1 {stride = 1 : si32, stride_dimension = 0 : si32} : vector<128x128xf32>, i32 -> vector<128x128xf32>
    %36 = arith.mulf %35, %12 : vector<128x128xf32>
    %37 = vector.extract_strided_slice %24 {offsets = [0, 16], sizes = [128, 16], strides = [1, 1]} : vector<128x128xf32> to vector<128x16xf32>
    %cst_16 = arith.constant dense<0.000000e+00> : vector<128x16xf32>
    %38 = tpu.matmul %36, %37, %cst_16 {dimension_numbers = #tpu.dot_dimension_numbers<[1], [0], [0], [1], [0, 0, 1, 1], [], []>} : vector<128x128xf32>, vector<128x16xf32>, vector<128x16xf32> -> vector<128x16xf32>
    %39 = vector.extract_strided_slice %23 {offsets = [2, 0], sizes = [1, 128], strides = [1, 1]} : vector<8x128xf32> to vector<1x128xf32>
    %40 = vector.shape_cast %39 : vector<1x128xf32> to vector<1x128xf32>
    %41 = vector.broadcast %40 : vector<1x128xf32> to vector<128x128xf32>
    %c0_i32_17 = arith.constant 0 : i32
    %42 = tpu.dynamic_rotate %41 by %c0_i32_17 dim 1 {stride = 1 : si32, stride_dimension = 0 : si32} : vector<128x128xf32>, i32 -> vector<128x128xf32>
    %43 = arith.mulf %42, %12 : vector<128x128xf32>
    %44 = vector.extract_strided_slice %24 {offsets = [0, 32], sizes = [128, 16], strides = [1, 1]} : vector<128x128xf32> to vector<128x16xf32>
    %cst_18 = arith.constant dense<0.000000e+00> : vector<128x16xf32>
    %45 = tpu.matmul %43, %44, %cst_18 {dimension_numbers = #tpu.dot_dimension_numbers<[1], [0], [0], [1], [0, 0, 1, 1], [], []>} : vector<128x128xf32>, vector<128x16xf32>, vector<128x16xf32> -> vector<128x16xf32>
    %46 = vector.extract_strided_slice %23 {offsets = [3, 0], sizes = [1, 128], strides = [1, 1]} : vector<8x128xf32> to vector<1x128xf32>
    %47 = vector.shape_cast %46 : vector<1x128xf32> to vector<1x128xf32>
    %48 = vector.broadcast %47 : vector<1x128xf32> to vector<128x128xf32>
    %c0_i32_19 = arith.constant 0 : i32
    %49 = tpu.dynamic_rotate %48 by %c0_i32_19 dim 1 {stride = 1 : si32, stride_dimension = 0 : si32} : vector<128x128xf32>, i32 -> vector<128x128xf32>
    %50 = arith.mulf %49, %12 : vector<128x128xf32>
    %51 = vector.extract_strided_slice %24 {offsets = [0, 48], sizes = [128, 16], strides = [1, 1]} : vector<128x128xf32> to vector<128x16xf32>
    %cst_20 = arith.constant dense<0.000000e+00> : vector<128x16xf32>
    %52 = tpu.matmul %50, %51, %cst_20 {dimension_numbers = #tpu.dot_dimension_numbers<[1], [0], [0], [1], [0, 0, 1, 1], [], []>} : vector<128x128xf32>, vector<128x16xf32>, vector<128x16xf32> -> vector<128x16xf32>
    %53 = vector.extract_strided_slice %23 {offsets = [4, 0], sizes = [1, 128], strides = [1, 1]} : vector<8x128xf32> to vector<1x128xf32>
    %54 = vector.shape_cast %53 : vector<1x128xf32> to vector<1x128xf32>
    %55 = vector.broadcast %54 : vector<1x128xf32> to vector<128x128xf32>
    %c0_i32_21 = arith.constant 0 : i32
    %56 = tpu.dynamic_rotate %55 by %c0_i32_21 dim 1 {stride = 1 : si32, stride_dimension = 0 : si32} : vector<128x128xf32>, i32 -> vector<128x128xf32>
    %57 = arith.mulf %56, %12 : vector<128x128xf32>
    %58 = vector.extract_strided_slice %24 {offsets = [0, 64], sizes = [128, 16], strides = [1, 1]} : vector<128x128xf32> to vector<128x16xf32>
    %cst_22 = arith.constant dense<0.000000e+00> : vector<128x16xf32>
    %59 = tpu.matmul %57, %58, %cst_22 {dimension_numbers = #tpu.dot_dimension_numbers<[1], [0], [0], [1], [0, 0, 1, 1], [], []>} : vector<128x128xf32>, vector<128x16xf32>, vector<128x16xf32> -> vector<128x16xf32>
    %60 = vector.extract_strided_slice %23 {offsets = [5, 0], sizes = [1, 128], strides = [1, 1]} : vector<8x128xf32> to vector<1x128xf32>
    %61 = vector.shape_cast %60 : vector<1x128xf32> to vector<1x128xf32>
    %62 = vector.broadcast %61 : vector<1x128xf32> to vector<128x128xf32>
    %c0_i32_23 = arith.constant 0 : i32
    %63 = tpu.dynamic_rotate %62 by %c0_i32_23 dim 1 {stride = 1 : si32, stride_dimension = 0 : si32} : vector<128x128xf32>, i32 -> vector<128x128xf32>
    %64 = arith.mulf %63, %12 : vector<128x128xf32>
    %65 = vector.extract_strided_slice %24 {offsets = [0, 80], sizes = [128, 16], strides = [1, 1]} : vector<128x128xf32> to vector<128x16xf32>
    %cst_24 = arith.constant dense<0.000000e+00> : vector<128x16xf32>
    %66 = tpu.matmul %64, %65, %cst_24 {dimension_numbers = #tpu.dot_dimension_numbers<[1], [0], [0], [1], [0, 0, 1, 1], [], []>} : vector<128x128xf32>, vector<128x16xf32>, vector<128x16xf32> -> vector<128x16xf32>
    %67 = vector.extract_strided_slice %23 {offsets = [6, 0], sizes = [1, 128], strides = [1, 1]} : vector<8x128xf32> to vector<1x128xf32>
    %68 = vector.shape_cast %67 : vector<1x128xf32> to vector<1x128xf32>
    %69 = vector.broadcast %68 : vector<1x128xf32> to vector<128x128xf32>
    %c0_i32_25 = arith.constant 0 : i32
    %70 = tpu.dynamic_rotate %69 by %c0_i32_25 dim 1 {stride = 1 : si32, stride_dimension = 0 : si32} : vector<128x128xf32>, i32 -> vector<128x128xf32>
    %71 = arith.mulf %70, %12 : vector<128x128xf32>
    %72 = vector.extract_strided_slice %24 {offsets = [0, 96], sizes = [128, 16], strides = [1, 1]} : vector<128x128xf32> to vector<128x16xf32>
    %cst_26 = arith.constant dense<0.000000e+00> : vector<128x16xf32>
    %73 = tpu.matmul %71, %72, %cst_26 {dimension_numbers = #tpu.dot_dimension_numbers<[1], [0], [0], [1], [0, 0, 1, 1], [], []>} : vector<128x128xf32>, vector<128x16xf32>, vector<128x16xf32> -> vector<128x16xf32>
    %74 = vector.extract_strided_slice %23 {offsets = [7, 0], sizes = [1, 128], strides = [1, 1]} : vector<8x128xf32> to vector<1x128xf32>
    %75 = vector.shape_cast %74 : vector<1x128xf32> to vector<1x128xf32>
    %76 = vector.broadcast %75 : vector<1x128xf32> to vector<128x128xf32>
    %c0_i32_27 = arith.constant 0 : i32
    %77 = tpu.dynamic_rotate %76 by %c0_i32_27 dim 1 {stride = 1 : si32, stride_dimension = 0 : si32} : vector<128x128xf32>, i32 -> vector<128x128xf32>
    %78 = arith.mulf %77, %12 : vector<128x128xf32>
    %79 = vector.extract_strided_slice %24 {offsets = [0, 112], sizes = [128, 16], strides = [1, 1]} : vector<128x128xf32> to vector<128x16xf32>
    %cst_28 = arith.constant dense<0.000000e+00> : vector<128x16xf32>
    %80 = tpu.matmul %78, %79, %cst_28 {dimension_numbers = #tpu.dot_dimension_numbers<[1], [0], [0], [1], [0, 0, 1, 1], [], []>} : vector<128x128xf32>, vector<128x16xf32>, vector<128x16xf32> -> vector<128x16xf32>
    %81 = tpu.concatenate %31, %38, %45, %52, %59, %66, %73, %80 in 1 : vector<128x16xf32>, vector<128x16xf32>, vector<128x16xf32>, vector<128x16xf32>, vector<128x16xf32>, vector<128x16xf32>, vector<128x16xf32>, vector<128x16xf32> -> vector<128x128xf32>
    %82 = vector.extract_strided_slice %5 {offsets = [128, 0], sizes = [128, 8], strides = [1, 1]} : vector<256x8xf32> to vector<128x8xf32>
    %cst_29 = arith.constant dense<0xFF800000> : vector<8xf32>
    %83 = vector.multi_reduction <maximumf>, %82, %cst_29 [0] : vector<128x8xf32> to vector<8xf32>
    %84 = vector.shape_cast %83 : vector<8xf32> to vector<1x8xf32>
    %85 = vector.broadcast %84 : vector<1x8xf32> to vector<128x8xf32>
    %86 = arith.subf %82, %85 : vector<128x8xf32>
    %87 = math.exp %86 : vector<128x8xf32>
    %cst_30 = arith.constant dense<0.000000e+00> : vector<8xf32>
    %88 = vector.multi_reduction <add>, %87, %cst_30 [0] : vector<128x8xf32> to vector<8xf32>
    %89 = vector.shape_cast %88 : vector<8xf32> to vector<1x8xf32>
    %90 = vector.broadcast %89 : vector<1x8xf32> to vector<128x8xf32>
    %91 = arith.divf %87, %90 : vector<128x8xf32>
    %92 = tpu.transpose %91, [1, 0] : vector<128x8xf32> -> vector<8x128xf32>
    %93 = vector.extract_strided_slice %6 {offsets = [128, 0], sizes = [128, 128], strides = [1, 1]} : vector<256x128xf32> to vector<128x128xf32>
    %94 = vector.extract_strided_slice %92 {offsets = [0, 0], sizes = [1, 128], strides = [1, 1]} : vector<8x128xf32> to vector<1x128xf32>
    %95 = vector.shape_cast %94 : vector<1x128xf32> to vector<1x128xf32>
    %96 = vector.broadcast %95 : vector<1x128xf32> to vector<128x128xf32>
    %c0_i32_31 = arith.constant 0 : i32
    %97 = tpu.dynamic_rotate %96 by %c0_i32_31 dim 1 {stride = 1 : si32, stride_dimension = 0 : si32} : vector<128x128xf32>, i32 -> vector<128x128xf32>
    %98 = arith.mulf %97, %12 : vector<128x128xf32>
    %99 = vector.extract_strided_slice %93 {offsets = [0, 0], sizes = [128, 16], strides = [1, 1]} : vector<128x128xf32> to vector<128x16xf32>
    %cst_32 = arith.constant dense<0.000000e+00> : vector<128x16xf32>
    %100 = tpu.matmul %98, %99, %cst_32 {dimension_numbers = #tpu.dot_dimension_numbers<[1], [0], [0], [1], [0, 0, 1, 1], [], []>} : vector<128x128xf32>, vector<128x16xf32>, vector<128x16xf32> -> vector<128x16xf32>
    %101 = vector.extract_strided_slice %92 {offsets = [1, 0], sizes = [1, 128], strides = [1, 1]} : vector<8x128xf32> to vector<1x128xf32>
    %102 = vector.shape_cast %101 : vector<1x128xf32> to vector<1x128xf32>
    %103 = vector.broadcast %102 : vector<1x128xf32> to vector<128x128xf32>
    %c0_i32_33 = arith.constant 0 : i32
    %104 = tpu.dynamic_rotate %103 by %c0_i32_33 dim 1 {stride = 1 : si32, stride_dimension = 0 : si32} : vector<128x128xf32>, i32 -> vector<128x128xf32>
    %105 = arith.mulf %104, %12 : vector<128x128xf32>
    %106 = vector.extract_strided_slice %93 {offsets = [0, 16], sizes = [128, 16], strides = [1, 1]} : vector<128x128xf32> to vector<128x16xf32>
    %cst_34 = arith.constant dense<0.000000e+00> : vector<128x16xf32>
    %107 = tpu.matmul %105, %106, %cst_34 {dimension_numbers = #tpu.dot_dimension_numbers<[1], [0], [0], [1], [0, 0, 1, 1], [], []>} : vector<128x128xf32>, vector<128x16xf32>, vector<128x16xf32> -> vector<128x16xf32>
    %108 = vector.extract_strided_slice %92 {offsets = [2, 0], sizes = [1, 128], strides = [1, 1]} : vector<8x128xf32> to vector<1x128xf32>
    %109 = vector.shape_cast %108 : vector<1x128xf32> to vector<1x128xf32>
    %110 = vector.broadcast %109 : vector<1x128xf32> to vector<128x128xf32>
    %c0_i32_35 = arith.constant 0 : i32
    %111 = tpu.dynamic_rotate %110 by %c0_i32_35 dim 1 {stride = 1 : si32, stride_dimension = 0 : si32} : vector<128x128xf32>, i32 -> vector<128x128xf32>
    %112 = arith.mulf %111, %12 : vector<128x128xf32>
    %113 = vector.extract_strided_slice %93 {offsets = [0, 32], sizes = [128, 16], strides = [1, 1]} : vector<128x128xf32> to vector<128x16xf32>
    %cst_36 = arith.constant dense<0.000000e+00> : vector<128x16xf32>
    %114 = tpu.matmul %112, %113, %cst_36 {dimension_numbers = #tpu.dot_dimension_numbers<[1], [0], [0], [1], [0, 0, 1, 1], [], []>} : vector<128x128xf32>, vector<128x16xf32>, vector<128x16xf32> -> vector<128x16xf32>
    %115 = vector.extract_strided_slice %92 {offsets = [3, 0], sizes = [1, 128], strides = [1, 1]} : vector<8x128xf32> to vector<1x128xf32>
    %116 = vector.shape_cast %115 : vector<1x128xf32> to vector<1x128xf32>
    %117 = vector.broadcast %116 : vector<1x128xf32> to vector<128x128xf32>
    %c0_i32_37 = arith.constant 0 : i32
    %118 = tpu.dynamic_rotate %117 by %c0_i32_37 dim 1 {stride = 1 : si32, stride_dimension = 0 : si32} : vector<128x128xf32>, i32 -> vector<128x128xf32>
    %119 = arith.mulf %118, %12 : vector<128x128xf32>
    %120 = vector.extract_strided_slice %93 {offsets = [0, 48], sizes = [128, 16], strides = [1, 1]} : vector<128x128xf32> to vector<128x16xf32>
    %cst_38 = arith.constant dense<0.000000e+00> : vector<128x16xf32>
    %121 = tpu.matmul %119, %120, %cst_38 {dimension_numbers = #tpu.dot_dimension_numbers<[1], [0], [0], [1], [0, 0, 1, 1], [], []>} : vector<128x128xf32>, vector<128x16xf32>, vector<128x16xf32> -> vector<128x16xf32>
    %122 = vector.extract_strided_slice %92 {offsets = [4, 0], sizes = [1, 128], strides = [1, 1]} : vector<8x128xf32> to vector<1x128xf32>
    %123 = vector.shape_cast %122 : vector<1x128xf32> to vector<1x128xf32>
    %124 = vector.broadcast %123 : vector<1x128xf32> to vector<128x128xf32>
    %c0_i32_39 = arith.constant 0 : i32
    %125 = tpu.dynamic_rotate %124 by %c0_i32_39 dim 1 {stride = 1 : si32, stride_dimension = 0 : si32} : vector<128x128xf32>, i32 -> vector<128x128xf32>
    %126 = arith.mulf %125, %12 : vector<128x128xf32>
    %127 = vector.extract_strided_slice %93 {offsets = [0, 64], sizes = [128, 16], strides = [1, 1]} : vector<128x128xf32> to vector<128x16xf32>
    %cst_40 = arith.constant dense<0.000000e+00> : vector<128x16xf32>
    %128 = tpu.matmul %126, %127, %cst_40 {dimension_numbers = #tpu.dot_dimension_numbers<[1], [0], [0], [1], [0, 0, 1, 1], [], []>} : vector<128x128xf32>, vector<128x16xf32>, vector<128x16xf32> -> vector<128x16xf32>
    %129 = vector.extract_strided_slice %92 {offsets = [5, 0], sizes = [1, 128], strides = [1, 1]} : vector<8x128xf32> to vector<1x128xf32>
    %130 = vector.shape_cast %129 : vector<1x128xf32> to vector<1x128xf32>
    %131 = vector.broadcast %130 : vector<1x128xf32> to vector<128x128xf32>
    %c0_i32_41 = arith.constant 0 : i32
    %132 = tpu.dynamic_rotate %131 by %c0_i32_41 dim 1 {stride = 1 : si32, stride_dimension = 0 : si32} : vector<128x128xf32>, i32 -> vector<128x128xf32>
    %133 = arith.mulf %132, %12 : vector<128x128xf32>
    %134 = vector.extract_strided_slice %93 {offsets = [0, 80], sizes = [128, 16], strides = [1, 1]} : vector<128x128xf32> to vector<128x16xf32>
    %cst_42 = arith.constant dense<0.000000e+00> : vector<128x16xf32>
    %135 = tpu.matmul %133, %134, %cst_42 {dimension_numbers = #tpu.dot_dimension_numbers<[1], [0], [0], [1], [0, 0, 1, 1], [], []>} : vector<128x128xf32>, vector<128x16xf32>, vector<128x16xf32> -> vector<128x16xf32>
    %136 = vector.extract_strided_slice %92 {offsets = [6, 0], sizes = [1, 128], strides = [1, 1]} : vector<8x128xf32> to vector<1x128xf32>
    %137 = vector.shape_cast %136 : vector<1x128xf32> to vector<1x128xf32>
    %138 = vector.broadcast %137 : vector<1x128xf32> to vector<128x128xf32>
    %c0_i32_43 = arith.constant 0 : i32
    %139 = tpu.dynamic_rotate %138 by %c0_i32_43 dim 1 {stride = 1 : si32, stride_dimension = 0 : si32} : vector<128x128xf32>, i32 -> vector<128x128xf32>
    %140 = arith.mulf %139, %12 : vector<128x128xf32>
    %141 = vector.extract_strided_slice %93 {offsets = [0, 96], sizes = [128, 16], strides = [1, 1]} : vector<128x128xf32> to vector<128x16xf32>
    %cst_44 = arith.constant dense<0.000000e+00> : vector<128x16xf32>
    %142 = tpu.matmul %140, %141, %cst_44 {dimension_numbers = #tpu.dot_dimension_numbers<[1], [0], [0], [1], [0, 0, 1, 1], [], []>} : vector<128x128xf32>, vector<128x16xf32>, vector<128x16xf32> -> vector<128x16xf32>
    %143 = vector.extract_strided_slice %92 {offsets = [7, 0], sizes = [1, 128], strides = [1, 1]} : vector<8x128xf32> to vector<1x128xf32>
    %144 = vector.shape_cast %143 : vector<1x128xf32> to vector<1x128xf32>
    %145 = vector.broadcast %144 : vector<1x128xf32> to vector<128x128xf32>
    %c0_i32_45 = arith.constant 0 : i32
    %146 = tpu.dynamic_rotate %145 by %c0_i32_45 dim 1 {stride = 1 : si32, stride_dimension = 0 : si32} : vector<128x128xf32>, i32 -> vector<128x128xf32>
    %147 = arith.mulf %146, %12 : vector<128x128xf32>
    %148 = vector.extract_strided_slice %93 {offsets = [0, 112], sizes = [128, 16], strides = [1, 1]} : vector<128x128xf32> to vector<128x16xf32>
    %cst_46 = arith.constant dense<0.000000e+00> : vector<128x16xf32>
    %149 = tpu.matmul %147, %148, %cst_46 {dimension_numbers = #tpu.dot_dimension_numbers<[1], [0], [0], [1], [0, 0, 1, 1], [], []>} : vector<128x128xf32>, vector<128x16xf32>, vector<128x16xf32> -> vector<128x16xf32>
    %150 = tpu.concatenate %100, %107, %114, %121, %128, %135, %142, %149 in 1 : vector<128x16xf32>, vector<128x16xf32>, vector<128x16xf32>, vector<128x16xf32>, vector<128x16xf32>, vector<128x16xf32>, vector<128x16xf32>, vector<128x16xf32> -> vector<128x128xf32>
    %151 = tpu.concatenate %81, %150 in 0 : vector<128x128xf32>, vector<128x128xf32> -> vector<256x128xf32>
    %cst_47 = arith.constant dense<0.000000e+00> : vector<256x128xf32>
    %152 = tpu.matmul %151, %3, %cst_47 {dimension_numbers = #tpu.dot_dimension_numbers<[1], [0], [0], [1], [0, 0, 1, 1], [], []>} : vector<256x128xf32>, vector<128x128xf32>, vector<256x128xf32> -> vector<256x128xf32>
    %153 = vector.broadcast %4 : vector<1x128xf32> to vector<256x128xf32>
    %154 = arith.addf %152, %153 : vector<256x128xf32>
    %c0_48 = arith.constant 0 : index
    %c0_49 = arith.constant 0 : index
    %155 = vector.load %arg6[%c0_48, %c0_49] : memref<256x128xf32, #tpu.memory_space<vmem>>, vector<256x128xf32>
    tpu.vector_store %arg6[%c0_48, %c0_49], %154 {strides = array<i32>} : memref<256x128xf32, #tpu.memory_space<vmem>>, vector<256x128xf32>,
    return
  }
  func.func @transform_0(%arg0: i32) -> (i32, i32) {
    %c0_i32 = arith.constant 0 : i32
    %c0_i32_0 = arith.constant 0 : i32
    return %arg0, %c0_i32 : i32, i32
  }
  func.func @transform_1(%arg0: i32) -> (i32, i32) {
    %c0_i32 = arith.constant 0 : i32
    %c0_i32_0 = arith.constant 0 : i32
    %c0_i32_1 = arith.constant 0 : i32
    return %c0_i32, %c0_i32_0 : i32, i32
  }
  func.func @transform_2(%arg0: i32) -> (i32, i32) {
    %c0_i32 = arith.constant 0 : i32
    %c0_i32_0 = arith.constant 0 : i32
    %c0_i32_1 = arith.constant 0 : i32
    return %c0_i32, %c0_i32_0 : i32, i32
  }
  func.func @transform_3(%arg0: i32) -> (i32, i32) {
    %c0_i32 = arith.constant 0 : i32
    %c0_i32_0 = arith.constant 0 : i32
    %c0_i32_1 = arith.constant 0 : i32
    return %c0_i32, %c0_i32_0 : i32, i32
  }
  func.func @transform_4(%arg0: i32) -> (i32, i32) {
    %c0_i32 = arith.constant 0 : i32
    %c0_i32_0 = arith.constant 0 : i32
    %c0_i32_1 = arith.constant 0 : i32
    return %c0_i32, %c0_i32_0 : i32, i32
  }
  func.func @transform_5(%arg0: i32) -> (i32, i32) {
    %c0_i32 = arith.constant 0 : i32
    %c0_i32_0 = arith.constant 0 : i32
    return %arg0, %c0_i32 : i32, i32
  }
}

</mosaic_0001>

<llo_original>
// kernel: tpu_custom_call.1
$region0: #{tpu_custom_call.1}
  #allocation0 [shape = 'u32[]', space=smem, size = 0x4, offset = 0x4, fixed_abs, tag = 'smem constant byte address 0x4 - core index']
  #allocation1 [shape = 'u32[144,128]{1,0:T(1,128)}', space=vmem, size = 0x12000, scoped, tag = 'internal scratch']
  %s0 = inlined_call_operand.hbm [shape: f32[512,128], index: 0, kind: input, shape index: {}]
  %s1 = inlined_call_operand.vmem [shape: f32[128,8], index: 1, kind: input, shape index: {}]
  %s2 = inlined_call_operand.vmem [shape: f32[128,128], index: 2, kind: input, shape index: {}]
  %s3 = inlined_call_operand.hbm [shape: f32[128,128], index: 3, kind: input, shape index: {}]
  %s4 = inlined_call_operand.vmem [shape: f32[1,128], index: 4, kind: input, shape index: {}]
  %s5 = inlined_call_operand.hbm [shape: f32[512,128], index: 5, kind: output, shape index: {}]
  %s6 = sld [smem:[#allocation0]]
  $region61: #{tpu_custom_call.1} parent=0
    _
  %s8 = ssub.s32 1, %s6
  %s9 = scalar_select 0, %s8, %s6
  $region1: #{tpu_custom_call.1} parent=0
    #allocation2 [shape = 'u8[262144]{0}', space=vmem, size = 0x40000, scoped, tag = 'input window, operand 0']
    #allocation3 [shape = 's32[2]{0}', space=sflag, size = 0x8, scoped, tag = 'scoped memory for tpu_custom_call.1']
    #allocation4 [shape = 's32[2]{0}', space=sflag, size = 0x8, scoped, tag = 'scoped memory for tpu_custom_call.1']
    #allocation5 [shape = 'u8[65536]{0}', space=vmem, size = 0x10000, scoped, tag = 'input window, operand 3, single buffered']
    #allocation6 [shape = 's32[1]{0}', space=sflag, size = 0x4, scoped, tag = 'scoped memory for tpu_custom_call.1']
    #allocation7 [shape = 'u8[262144]{0}', space=vmem, size = 0x40000, scoped, tag = 'output window, operand 0']
    %10 = vsyncpa [#allocation3], 0
    %s11 = scalar_lea.sflag [#allocation3], 1
    %12 = vsyncpa %s11, 0
    %13 = vsyncpa [#allocation6], 0
    %14 = vsyncpa [#allocation4], 0
    %s15 = scalar_lea.sflag [#allocation4], 1
    %16 = vsyncpa %s15, 0
    loop: start=0, step=1, limit=4
    $region2: #{tpu_custom_call.1} parent=1 // loop_pre_header
      _
    $region3: #{tpu_custom_call.1} parent=1 // loop_header
      %s18 = sphi 0, %s22
      %p19 = scmp.ge.s32.totalorder %s18, 4
      %s28 = sphi 0, %s30
      %s31 = sphi 0, %s28
      %s32 = sphi 0, %s31
      %s48 = sphi 0, %s32
      %s52 = sphi 0, %s52
      %s54 = sphi 0, %s52
      %s55 = sphi 0, %s54
      %s69 = sphi 0, %s55
      %s73 = sphi 0, %s73
      %s75 = sphi 0, %s73
      %s76 = sphi 0, %s75
      %s90 = sphi 0, %s76
      %s94 = sphi 0, %s94
      %s96 = sphi 0, %s94
      %s97 = sphi 0, %s96
      %s111 = sphi 0, %s97
      %s115 = sphi 0, %s115
      %s117 = sphi 0, %s115
      %s118 = sphi 0, %s117
      %s132 = sphi 0, %s118
      %s138 = sphi 0, %s140
      %s141 = sphi 0, %s138
      %s142 = sphi 0, %s141
      %s158 = sphi 0, %s142
    $region4: #{tpu_custom_call.1} parent=1 // loop_header_branch
      %21 = sbr.rel (%p19) target = $region8
    $region5: #{tpu_custom_call.1} parent=1 // loop_body
      %s23 = ssub.s32 %s18, 1
      %s24 = ssub.s32 %s18, 2
      %s25 = sadd.s32 %s18, 1
      %s26 = ssub.s32 %s18, %s25
      %p27 = scmp.eq.s32.totalorder %s26, 0
      %s29 = sadd.s32 %s28, 1
      %s30 = scalar_select %p27, %s28, %s29
      %p33 = pneg %p27
      %p34 = scmp.eq.s32.totalorder %s18, 1
      %p35 = por %p33, %p34
      %p36 = scmp.ne.s32.totalorder %s28, %s31
      %p37 = scmp.eq.s32.totalorder %s18, 0
      %p38 = por %p36, %p37
      %p39 = scmp.ne.s32.totalorder %s28, %s31
      %p40 = scmp.eq.s32.totalorder %s23, 1
      %p41 = por %p39, %p40
      %p42 = scmp.ne.s32.totalorder %s31, %s32
      %p43 = scmp.eq.s32.totalorder %s23, 0
      %p44 = por %p42, %p43
      %p45 = scmp.ne.s32.totalorder %s31, %s32
      %p46 = scmp.eq.s32.totalorder %s24, 1
      %p47 = por %p45, %p46
      %p49 = scmp.ne.s32.totalorder %s32, %s48
      %p50 = scmp.eq.s32.totalorder %s24, 0
      %p51 = por %p49, %p50
      %s53 = sadd.s32 %s52, 1
      %p56 = scmp.eq.s32.totalorder %s18, 1
      %p57 = scmp.ne.s32.totalorder %s52, %s54
      %p58 = scmp.eq.s32.totalorder %s18, 0
      %p59 = por %p57, %p58
      %p60 = scmp.ne.s32.totalorder %s52, %s54
      %p61 = scmp.eq.s32.totalorder %s23, 1
      %p62 = por %p60, %p61
      %p63 = scmp.ne.s32.totalorder %s54, %s55
      %p64 = scmp.eq.s32.totalorder %s23, 0
      %p65 = por %p63, %p64
      %p66 = scmp.ne.s32.totalorder %s54, %s55
      %p67 = scmp.eq.s32.totalorder %s24, 1
      %p68 = por %p66, %p67
      %p70 = scmp.ne.s32.totalorder %s55, %s69
      %p71 = scmp.eq.s32.totalorder %s24, 0
      %p72 = por %p70, %p71
      %s74 = sadd.s32 %s73, 1
      %p77 = scmp.eq.s32.totalorder %s18, 1
      %p78 = scmp.ne.s32.totalorder %s73, %s75
      %p79 = scmp.eq.s32.totalorder %s18, 0
      %p80 = por %p78, %p79
      %p81 = scmp.ne.s32.totalorder %s73, %s75
      %p82 = scmp.eq.s32.totalorder %s23, 1
      %p83 = por %p81, %p82
      %p84 = scmp.ne.s32.totalorder %s75, %s76
      %p85 = scmp.eq.s32.totalorder %s23, 0
      %p86 = por %p84, %p85
      %p87 = scmp.ne.s32.totalorder %s75, %s76
      %p88 = scmp.eq.s32.totalorder %s24, 1
      %p89 = por %p87, %p88
      %p91 = scmp.ne.s32.totalorder %s76, %s90
      %p92 = scmp.eq.s32.totalorder %s24, 0
      %p93 = por %p91, %p92
      %s95 = sadd.s32 %s94, 1
      %p98 = scmp.eq.s32.totalorder %s18, 1
      %p99 = scmp.ne.s32.totalorder %s94, %s96
      %p100 = scmp.eq.s32.totalorder %s18, 0
      %p101 = por %p99, %p100
      %p102 = scmp.ne.s32.totalorder %s94, %s96
      %p103 = scmp.eq.s32.totalorder %s23, 1
      %p104 = por %p102, %p103
      %p105 = scmp.ne.s32.totalorder %s96, %s97
      %p106 = scmp.eq.s32.totalorder %s23, 0
      %p107 = por %p105, %p106
      %p108 = scmp.ne.s32.totalorder %s96, %s97
      %p109 = scmp.eq.s32.totalorder %s24, 1
      %p110 = por %p108, %p109
      %p112 = scmp.ne.s32.totalorder %s97, %s111
      %p113 = scmp.eq.s32.totalorder %s24, 0
      %p114 = por %p112, %p113
      %s116 = sadd.s32 %s115, 1
      %p119 = scmp.eq.s32.totalorder %s18, 1
      %p120 = scmp.ne.s32.totalorder %s115, %s117
      %p121 = scmp.eq.s32.totalorder %s18, 0
      %p122 = por %p120, %p121
      %p123 = scmp.ne.s32.totalorder %s115, %s117
      %p124 = scmp.eq.s32.totalorder %s23, 1
      %p125 = por %p123, %p124
      %p126 = scmp.ne.s32.totalorder %s117, %s118
      %p127 = scmp.eq.s32.totalorder %s23, 0
      %p128 = por %p126, %p127
      %p129 = scmp.ne.s32.totalorder %s117, %s118
      %p130 = scmp.eq.s32.totalorder %s24, 1
      %p131 = por %p129, %p130
      %p133 = scmp.ne.s32.totalorder %s118, %s132
      %p134 = scmp.eq.s32.totalorder %s24, 0
      %p135 = por %p133, %p134
      %s136 = ssub.s32 %s18, %s25
      %p137 = scmp.eq.s32.totalorder %s136, 0
      %s139 = sadd.s32 %s138, 1
      %s140 = scalar_select %p137, %s138, %s139
      %p143 = pneg %p137
      %p144 = scmp.eq.s32.totalorder %s18, 1
      %p145 = por %p143, %p144
      %p146 = scmp.ne.s32.totalorder %s138, %s141
      %p147 = scmp.eq.s32.totalorder %s18, 0
      %p148 = por %p146, %p147
      %p149 = scmp.ne.s32.totalorder %s138, %s141
      %p150 = scmp.eq.s32.totalorder %s23, 1
      %p151 = por %p149, %p150
      %p152 = scmp.ne.s32.totalorder %s141, %s142
      %p153 = scmp.eq.s32.totalorder %s23, 0
      %p154 = por %p152, %p153
      %p155 = scmp.ne.s32.totalorder %s141, %s142
      %p156 = scmp.eq.s32.totalorder %s24, 1
      %p157 = por %p155, %p156
      %p159 = scmp.ne.s32.totalorder %s142, %s158
      %p160 = scmp.eq.s32.totalorder %s24, 0
      %p161 = por %p159, %p160
      %p162 = scmp.le.s32.totalorder 1, %s18
      %p163 = scmp.lt.s32.totalorder %s18, 3
      %p164 = pnand %p162, %p163
      %p165 = pneg %p164
      // Predicated region
      $region9: #{tpu_custom_call.1} parent=5 // pred_check
        _
      $region10: #{tpu_custom_call.1} parent=5 // pred_check_branch
        %167 = sbr.rel (%p164) target = $region12
      $region11: #{tpu_custom_call.1} parent=5 // pred_region
        %s168 = ssub.s32 %s18, 1
        // Predicated region
        $region13: #{tpu_custom_call.1} parent=11 // pred_check
          %p169 = pneg %p65
        $region14: #{tpu_custom_call.1} parent=11 // pred_check_branch
          %171 = sbr.rel (%p169) target = $region16
        $region15: #{tpu_custom_call.1} parent=11 // pred_region
          _
        $region16: #{tpu_custom_call.1} parent=11 // pred_fallthru
          _
        // Predicated region
        $region17: #{tpu_custom_call.1} parent=11 // pred_check
          %p172 = pneg %p86
        $region18: #{tpu_custom_call.1} parent=11 // pred_check_branch
          %174 = sbr.rel (%p172) target = $region20
        $region19: #{tpu_custom_call.1} parent=11 // pred_region
          _
        $region20: #{tpu_custom_call.1} parent=11 // pred_fallthru
          _
        // Predicated region
        $region21: #{tpu_custom_call.1} parent=11 // pred_check
          %p175 = pneg %p107
        $region22: #{tpu_custom_call.1} parent=11 // pred_check_branch
          %177 = sbr.rel (%p175) target = $region24
        $region23: #{tpu_custom_call.1} parent=11 // pred_region
          %s179 = ssub.s32 2048, 2048
          %180 = vsyncadd [#allocation6], %s179
          %s181 = sshll.u32 [#allocation5], 4
          %s182 = int_to_ptr.vmem [resolvable:$true] %s181
          %187 = dma.hbm_to_vmem [thread:$0]  %s3, 2048, %s182, [#allocation6], 128, 128, 8
        $region24: #{tpu_custom_call.1} parent=11 // pred_fallthru
          _
        // Predicated region
        $region25: #{tpu_custom_call.1} parent=11 // pred_check
          %p188 = pneg %p128
        $region26: #{tpu_custom_call.1} parent=11 // pred_check_branch
          %190 = sbr.rel (%p188) target = $region28
        $region27: #{tpu_custom_call.1} parent=11 // pred_region
          _
        $region28: #{tpu_custom_call.1} parent=11 // pred_fallthru
          _
      $region12: #{tpu_custom_call.1} parent=5 // pred_fallthru
        _
      %p191 = scmp.lt.s32.totalorder %s18, 2
      // Predicated region
      $region29: #{tpu_custom_call.1} parent=5 // pred_check
        %p192 = pneg %p191
      $region30: #{tpu_custom_call.1} parent=5 // pred_check_branch
        %194 = sbr.rel (%p192) target = $region32
      $region31: #{tpu_custom_call.1} parent=5 // pred_region
        // Predicated region
        $region33: #{tpu_custom_call.1} parent=31 // pred_check
          %p195 = pneg %p38
        $region34: #{tpu_custom_call.1} parent=31 // pred_check_branch
          %197 = sbr.rel (%p195) target = $region36
        $region35: #{tpu_custom_call.1} parent=31 // pred_region
          %s198 = sand.u32 %s28, 1
          %s199 = scalar_lea.sflag [#allocation3], %s198
          %s200 = sand.u32 %s28, 1
          %s201 = smul.addr %s200, 256
          %s202 = scalar_lea.vmem [#allocation2], %s201
          %s203 = smul.u32 32, %s18
          %s205 = ssub.s32 4096, 4096
          %206 = vsyncadd %s199, %s205
          %s207 = smul.addr %s203, 128
          %s208 = scalar_lea.hbm %s0, %s207
          %s209 = sshll.u32 %s202, 4
          %s210 = int_to_ptr.vmem [resolvable:$true] %s209
          %215 = dma.hbm_to_vmem [thread:$0]  %s208, 4096, %s210, %s199, 128, 128, 8
        $region36: #{tpu_custom_call.1} parent=31 // pred_fallthru
          _
      $region32: #{tpu_custom_call.1} parent=5 // pred_fallthru
        _
      %p216 = scmp.le.s32.totalorder 1, %s18
      %p217 = scmp.lt.s32.totalorder %s18, 3
      %p218 = pnand %p216, %p217
      %p219 = pneg %p218
      // Predicated region
      $region37: #{tpu_custom_call.1} parent=5 // pred_check
        _
      $region38: #{tpu_custom_call.1} parent=5 // pred_check_branch
        %221 = sbr.rel (%p218) target = $region40
      $region39: #{tpu_custom_call.1} parent=5 // pred_region
        %s222 = ssub.s32 %s18, 1
        %s223 = sand.u32 %s31, 1
        %s224 = scalar_lea.sflag [#allocation3], %s223
        %s225 = sand.u32 %s31, 1
        %s226 = smul.addr %s225, 256
        %s227 = scalar_lea.vmem [#allocation2], %s226
        // Predicated region
        $region41: #{tpu_custom_call.1} parent=39 // pred_check
          %p228 = pneg %p44
        $region42: #{tpu_custom_call.1} parent=39 // pred_check_branch
          %230 = sbr.rel (%p228) target = $region44
        $region43: #{tpu_custom_call.1} parent=39 // pred_region
          %231 = dma.done %s224, 4096
        $region44: #{tpu_custom_call.1} parent=39 // pred_fallthru
          _
        // Predicated region
        $region45: #{tpu_custom_call.1} parent=39 // pred_check
          %p232 = pneg %p107
        $region46: #{tpu_custom_call.1} parent=39 // pred_check_branch
          %234 = sbr.rel (%p232) target = $region48
        $region47: #{tpu_custom_call.1} parent=39 // pred_region
          %235 = dma.done [#allocation6], 2048
        $region48: #{tpu_custom_call.1} parent=39 // pred_fallthru
          _
        %s236 = sand.u32 %s31, 1
        %s237 = scalar_lea.sflag [#allocation3], %s236
        %s238 = sand.u32 %s31, 1
        %s239 = smul.addr %s238, 256
        %s240 = scalar_lea.vmem [#allocation2], %s239
        %p241 = pneg %p44
        %p242 = pneg %p41
        %p243 = pneg %p65
        %p244 = pneg %p62
        %p245 = pneg %p86
        %p246 = pneg %p83
        %p247 = pneg %p107
        %p248 = pneg %p104
        %p249 = pneg %p128
        %p250 = pneg %p125
        %p251 = pneg %p154
        %p252 = pneg %p151
        %s253 = sand.u32 %s141, 1
        %s254 = scalar_lea.sflag [#allocation4], %s253
        %s255 = sand.u32 %s141, 1
        %s256 = smul.addr %s255, 256
        %s257 = scalar_lea.vmem [#allocation7], %s256
        %s258 = smul.u32 32, %s23
        %s259 = smul.u32 32, %s23
        %v260 = vld [vmem:[%s227] sm:$0xff]
        %v261 = vld [vmem:[%s227 + $0x8] sm:$0xff]
        %v262 = vld [vmem:[%s227 + $0x10] sm:$0xff]
        %v263 = vld [vmem:[%s227 + $0x18] sm:$0xff]
        %v264 = vld [vmem:[%s227 + $0x20] sm:$0xff]
        %v265 = vld [vmem:[%s227 + $0x28] sm:$0xff]
        %v266 = vld [vmem:[%s227 + $0x30] sm:$0xff]
        %v267 = vld [vmem:[%s227 + $0x38] sm:$0xff]
        %v268 = vld [vmem:[%s227 + $0x40] sm:$0xff]
        %v269 = vld [vmem:[%s227 + $0x48] sm:$0xff]
        %v270 = vld [vmem:[%s227 + $0x50] sm:$0xff]
        %v271 = vld [vmem:[%s227 + $0x58] sm:$0xff]
        %v272 = vld [vmem:[%s227 + $0x60] sm:$0xff]
        %v273 = vld [vmem:[%s227 + $0x68] sm:$0xff]
        %v274 = vld [vmem:[%s227 + $0x70] sm:$0xff]
        %v275 = vld [vmem:[%s227 + $0x78] sm:$0xff]
        %v276 = vld [vmem:[%s227 + $0x80] sm:$0xff]
        %v277 = vld [vmem:[%s227 + $0x88] sm:$0xff]
        %v278 = vld [vmem:[%s227 + $0x90] sm:$0xff]
        %v279 = vld [vmem:[%s227 + $0x98] sm:$0xff]
        %v280 = vld [vmem:[%s227 + $0xa0] sm:$0xff]
        %v281 = vld [vmem:[%s227 + $0xa8] sm:$0xff]
        %v282 = vld [vmem:[%s227 + $0xb0] sm:$0xff]
        %v283 = vld [vmem:[%s227 + $0xb8] sm:$0xff]
        %v284 = vld [vmem:[%s227 + $0xc0] sm:$0xff]
        %v285 = vld [vmem:[%s227 + $0xc8] sm:$0xff]
        %v286 = vld [vmem:[%s227 + $0xd0] sm:$0xff]
        %v287 = vld [vmem:[%s227 + $0xd8] sm:$0xff]
        %v288 = vld [vmem:[%s227 + $0xe0] sm:$0xff]
        %v289 = vld [vmem:[%s227 + $0xe8] sm:$0xff]
        %v290 = vld [vmem:[%s227 + $0xf0] sm:$0xff]
        %v291 = vld [vmem:[%s227 + $0xf8] sm:$0xff]
        %v292 = vld [vmem:[%s1] sm:$0xff]
        %v293 = vld [vmem:[%s1 + $0x8] sm:$0xff]
        %v294 = vld [vmem:[%s1 + $0x10] sm:$0xff]
        %v295 = vld [vmem:[%s1 + $0x18] sm:$0xff]
        %v296 = vld [vmem:[%s1 + $0x20] sm:$0xff]
        %v297 = vld [vmem:[%s1 + $0x28] sm:$0xff]
        %v298 = vld [vmem:[%s1 + $0x30] sm:$0xff]
        %v299 = vld [vmem:[%s1 + $0x38] sm:$0xff]
        %v300 = vld [vmem:[%s1 + $0x40] sm:$0xff]
        %v301 = vld [vmem:[%s1 + $0x48] sm:$0xff]
        %v302 = vld [vmem:[%s1 + $0x50] sm:$0xff]
        %v303 = vld [vmem:[%s1 + $0x58] sm:$0xff]
        %v304 = vld [vmem:[%s1 + $0x60] sm:$0xff]
        %v305 = vld [vmem:[%s1 + $0x68] sm:$0xff]
        %v306 = vld [vmem:[%s1 + $0x70] sm:$0xff]
        %v307 = vld [vmem:[%s1 + $0x78] sm:$0xff]
        %v308 = vld [vmem:[%s2] sm:$0xff]
        %v309 = vld [vmem:[%s2 + $0x8] sm:$0xff]
        %v310 = vld [vmem:[%s2 + $0x10] sm:$0xff]
        %v311 = vld [vmem:[%s2 + $0x18] sm:$0xff]
        %v312 = vld [vmem:[%s2 + $0x20] sm:$0xff]
        %v313 = vld [vmem:[%s2 + $0x28] sm:$0xff]
        %v314 = vld [vmem:[%s2 + $0x30] sm:$0xff]
        %v315 = vld [vmem:[%s2 + $0x38] sm:$0xff]
        %v316 = vld [vmem:[%s2 + $0x40] sm:$0xff]
        %v317 = vld [vmem:[%s2 + $0x48] sm:$0xff]
        %v318 = vld [vmem:[%s2 + $0x50] sm:$0xff]
        %v319 = vld [vmem:[%s2 + $0x58] sm:$0xff]
        %v320 = vld [vmem:[%s2 + $0x60] sm:$0xff]
        %v321 = vld [vmem:[%s2 + $0x68] sm:$0xff]
        %v322 = vld [vmem:[%s2 + $0x70] sm:$0xff]
        %v323 = vld [vmem:[%s2 + $0x78] sm:$0xff]
        %v324 = vld [vmem:[#allocation5] sm:$0xff]
        %v325 = vld [vmem:[#allocation5 + $0x8] sm:$0xff]
        %v326 = vld [vmem:[#allocation5 + $0x10] sm:$0xff]
        %v327 = vld [vmem:[#allocation5 + $0x18] sm:$0xff]
        %v328 = vld [vmem:[#allocation5 + $0x20] sm:$0xff]
        %v329 = vld [vmem:[#allocation5 + $0x28] sm:$0xff]
        %v330 = vld [vmem:[#allocation5 + $0x30] sm:$0xff]
        %v331 = vld [vmem:[#allocation5 + $0x38] sm:$0xff]
        %v332 = vld [vmem:[#allocation5 + $0x40] sm:$0xff]
        %v333 = vld [vmem:[#allocation5 + $0x48] sm:$0xff]
        %v334 = vld [vmem:[#allocation5 + $0x50] sm:$0xff]
        %v335 = vld [vmem:[#allocation5 + $0x58] sm:$0xff]
        %v336 = vld [vmem:[#allocation5 + $0x60] sm:$0xff]
        %v337 = vld [vmem:[#allocation5 + $0x68] sm:$0xff]
        %v338 = vld [vmem:[#allocation5 + $0x70] sm:$0xff]
        %v339 = vld [vmem:[#allocation5 + $0x78] sm:$0xff]
        %v340 = vld [vmem:[%s4] sm:$0x1]
        %341 = vmatprep.subr.mxu0 0.0
        %342 = vmatpush1.msra.mxu0 %v307
        %343 = vmatprep.subr.mxu0 0.0
        %344 = vmatpush1.msra.mxu0 %v306
        %345 = vmatprep.subr.mxu0 0.0
        %346 = vmatpush1.msra.mxu0 %v305
        %347 = vmatprep.subr.mxu0 0.0
        %348 = vmatpush1.msra.mxu0 %v304
        %349 = vmatprep.subr.mxu0 0.0
        %350 = vmatpush1.msra.mxu0 %v303
        %351 = vmatprep.subr.mxu0 0.0
        %352 = vmatpush1.msra.mxu0 %v302
        %353 = vmatprep.subr.mxu0 0.0
        %354 = vmatpush1.msra.mxu0 %v301
        %355 = vmatprep.subr.mxu0 0.0
        %356 = vmatpush1.msra.mxu0 %v300
        %357 = vmatprep.subr.mxu0 0.0
        %358 = vmatpush1.msra.mxu0 %v299
        %359 = vmatprep.subr.mxu0 0.0
        %360 = vmatpush1.msra.mxu0 %v298
        %361 = vmatprep.subr.mxu0 0.0
        %362 = vmatpush1.msra.mxu0 %v297
        %363 = vmatprep.subr.mxu0 0.0
        %364 = vmatpush1.msra.mxu0 %v296
        %365 = vmatprep.subr.mxu0 0.0
        %366 = vmatpush1.msra.mxu0 %v295
        %367 = vmatprep.subr.mxu0 0.0
        %368 = vmatpush1.msra.mxu0 %v294
        %369 = vmatprep.subr.mxu0 0.0
        %370 = vmatpush1.msra.mxu0 %v293
        %371 = vmatprep.subr.mxu0 0.0
        %372 = vmatpush1.msra.mxu0 %v292
        %373 = vmatprep.subr.mxu0 0.0
        %374 = vmatpush2.msra.mxu0 0.0
        %375 = vmatprep.subr.mxu0 0.0
        %376 = vmatpush2.msra.mxu0 0.0
        %377 = vmatprep.subr.mxu0 0.0
        %378 = vmatpush2.msra.mxu0 0.0
        %379 = vmatprep.subr.mxu0 0.0
        %380 = vmatpush2.msra.mxu0 0.0
        %381 = vmatprep.subr.mxu0 0.0
        %382 = vmatpush2.msra.mxu0 0.0
        %383 = vmatprep.subr.mxu0 0.0
        %384 = vmatpush2.msra.mxu0 0.0
        %385 = vmatprep.subr.mxu0 0.0
        %386 = vmatpush2.msra.mxu0 0.0
        %387 = vmatprep.subr.mxu0 0.0
        %388 = vmatpush2.msra.mxu0 0.0
        %389 = vmatprep.subr.mxu0 0.0
        %390 = vmatpush2.msra.mxu0 0.0
        %391 = vmatprep.subr.mxu0 0.0
        %392 = vmatpush2.msra.mxu0 0.0
        %393 = vmatprep.subr.mxu0 0.0
        %394 = vmatpush2.msra.mxu0 0.0
        %395 = vmatprep.subr.mxu0 0.0
        %396 = vmatpush2.msra.mxu0 0.0
        %397 = vmatprep.subr.mxu0 0.0
        %398 = vmatpush2.msra.mxu0 0.0
        %399 = vmatprep.subr.mxu0 0.0
        %400 = vmatpush2.msra.mxu0 0.0
        %401 = vmatprep.subr.mxu0 0.0
        %402 = vmatpush2.msra.mxu0 0.0
        %403 = vmatprep.subr.mxu0 0.0
        %404 = vmatpush2.msra.mxu0 0.0
        %405 = vmatprep.mubr.f32.mxu0 0.0
        %406 = vmatmul.mubr.f32.gmra.mxu0 %v260
        %v407 = vpop.f32.mrf.mxu0
        %v408 = vadd.f32 0.0, %v407
        %v409 = vpop.f32.mrf.mxu0
        %410 = vmatprep.mubr.f32.mxu0 0.0
        %411 = vmatmul.mubr.f32.gmra.mxu0 %v261
        %v412 = vpop.f32.mrf.mxu0
        %v413 = vadd.f32 0.0, %v412
        %v414 = vpop.f32.mrf.mxu0
        %415 = vmatprep.mubr.f32.mxu0 0.0
        %416 = vmatmul.mubr.f32.gmra.mxu0 %v262
        %v417 = vpop.f32.mrf.mxu0
        %v418 = vadd.f32 0.0, %v417
        %v419 = vpop.f32.mrf.mxu0
        %420 = vmatprep.mubr.f32.mxu0 0.0
        %421 = vmatmul.mubr.f32.gmra.mxu0 %v263
        %v422 = vpop.f32.mrf.mxu0
        %v423 = vadd.f32 0.0, %v422
        %v424 = vpop.f32.mrf.mxu0
        %425 = vmatprep.mubr.f32.mxu0 0.0
        %426 = vmatmul.mubr.f32.gmra.mxu0 %v264
        %v427 = vpop.f32.mrf.mxu0
        %v428 = vadd.f32 0.0, %v427
        %v429 = vpop.f32.mrf.mxu0
        %430 = vmatprep.mubr.f32.mxu0 0.0
        %431 = vmatmul.mubr.f32.gmra.mxu0 %v265
        %v432 = vpop.f32.mrf.mxu0
        %v433 = vadd.f32 0.0, %v432
        %v434 = vpop.f32.mrf.mxu0
        %435 = vmatprep.mubr.f32.mxu0 0.0
        %436 = vmatmul.mubr.f32.gmra.mxu0 %v266
        %v437 = vpop.f32.mrf.mxu0
        %v438 = vadd.f32 0.0, %v437
        %v439 = vpop.f32.mrf.mxu0
        %440 = vmatprep.mubr.f32.mxu0 0.0
        %441 = vmatmul.mubr.f32.gmra.mxu0 %v267
        %v442 = vpop.f32.mrf.mxu0
        %v443 = vadd.f32 0.0, %v442
        %v444 = vpop.f32.mrf.mxu0
        %445 = vmatprep.mubr.f32.mxu0 0.0
        %446 = vmatmul.mubr.f32.gmra.mxu0 %v268
        %v447 = vpop.f32.mrf.mxu0
        %v448 = vadd.f32 0.0, %v447
        %v449 = vpop.f32.mrf.mxu0
        %450 = vmatprep.mubr.f32.mxu0 0.0
        %451 = vmatmul.mubr.f32.gmra.mxu0 %v269
        %v452 = vpop.f32.mrf.mxu0
        %v453 = vadd.f32 0.0, %v452
        %v454 = vpop.f32.mrf.mxu0
        %455 = vmatprep.mubr.f32.mxu0 0.0
        %456 = vmatmul.mubr.f32.gmra.mxu0 %v270
        %v457 = vpop.f32.mrf.mxu0
        %v458 = vadd.f32 0.0, %v457
        %v459 = vpop.f32.mrf.mxu0
        %460 = vmatprep.mubr.f32.mxu0 0.0
        %461 = vmatmul.mubr.f32.gmra.mxu0 %v271
        %v462 = vpop.f32.mrf.mxu0
        %v463 = vadd.f32 0.0, %v462
        %v464 = vpop.f32.mrf.mxu0
        %465 = vmatprep.mubr.f32.mxu0 0.0
        %466 = vmatmul.mubr.f32.gmra.mxu0 %v272
        %v467 = vpop.f32.mrf.mxu0
        %v468 = vadd.f32 0.0, %v467
        %v469 = vpop.f32.mrf.mxu0
        %470 = vmatprep.mubr.f32.mxu0 0.0
        %471 = vmatmul.mubr.f32.gmra.mxu0 %v273
        %v472 = vpop.f32.mrf.mxu0
        %v473 = vadd.f32 0.0, %v472
        %v474 = vpop.f32.mrf.mxu0
        %475 = vmatprep.mubr.f32.mxu0 0.0
        %476 = vmatmul.mubr.f32.gmra.mxu0 %v274
        %v477 = vpop.f32.mrf.mxu0
        %v478 = vadd.f32 0.0, %v477
        %v479 = vpop.f32.mrf.mxu0
        %480 = vmatprep.mubr.f32.mxu0 0.0
        %481 = vmatmul.mubr.f32.gmra.mxu0 %v275
        %v482 = vpop.f32.mrf.mxu0
        %v483 = vadd.f32 0.0, %v482
        %v484 = vpop.f32.mrf.mxu0
        %485 = vmatprep.mubr.f32.mxu0 0.0
        %486 = vmatmul.mubr.f32.gmra.mxu0 %v276
        %v487 = vpop.f32.mrf.mxu0
        %v488 = vadd.f32 0.0, %v487
        %v489 = vpop.f32.mrf.mxu0
        %490 = vmatprep.mubr.f32.mxu0 0.0
        %491 = vmatmul.mubr.f32.gmra.mxu0 %v277
        %v492 = vpop.f32.mrf.mxu0
        %v493 = vadd.f32 0.0, %v492
        %v494 = vpop.f32.mrf.mxu0
        %495 = vmatprep.mubr.f32.mxu0 0.0
        %496 = vmatmul.mubr.f32.gmra.mxu0 %v278
        %v497 = vpop.f32.mrf.mxu0
        %v498 = vadd.f32 0.0, %v497
        %v499 = vpop.f32.mrf.mxu0
        %500 = vmatprep.mubr.f32.mxu0 0.0
        %501 = vmatmul.mubr.f32.gmra.mxu0 %v279
        %v502 = vpop.f32.mrf.mxu0
        %v503 = vadd.f32 0.0, %v502
        %v504 = vpop.f32.mrf.mxu0
        %505 = vmatprep.mubr.f32.mxu0 0.0
        %506 = vmatmul.mubr.f32.gmra.mxu0 %v280
        %v507 = vpop.f32.mrf.mxu0
        %v508 = vadd.f32 0.0, %v507
        %v509 = vpop.f32.mrf.mxu0
        %510 = vmatprep.mubr.f32.mxu0 0.0
        %511 = vmatmul.mubr.f32.gmra.mxu0 %v281
        %v512 = vpop.f32.mrf.mxu0
        %v513 = vadd.f32 0.0, %v512
        %v514 = vpop.f32.mrf.mxu0
        %515 = vmatprep.mubr.f32.mxu0 0.0
        %516 = vmatmul.mubr.f32.gmra.mxu0 %v282
        %v517 = vpop.f32.mrf.mxu0
        %v518 = vadd.f32 0.0, %v517
        %v519 = vpop.f32.mrf.mxu0
        %520 = vmatprep.mubr.f32.mxu0 0.0
        %521 = vmatmul.mubr.f32.gmra.mxu0 %v283
        %v522 = vpop.f32.mrf.mxu0
        %v523 = vadd.f32 0.0, %v522
        %v524 = vpop.f32.mrf.mxu0
        %525 = vmatprep.mubr.f32.mxu0 0.0
        %526 = vmatmul.mubr.f32.gmra.mxu0 %v284
        %v527 = vpop.f32.mrf.mxu0
        %v528 = vadd.f32 0.0, %v527
        %v529 = vpop.f32.mrf.mxu0
        %530 = vmatprep.mubr.f32.mxu0 0.0
        %531 = vmatmul.mubr.f32.gmra.mxu0 %v285
        %v532 = vpop.f32.mrf.mxu0
        %v533 = vadd.f32 0.0, %v532
        %v534 = vpop.f32.mrf.mxu0
        %535 = vmatprep.mubr.f32.mxu0 0.0
        %536 = vmatmul.mubr.f32.gmra.mxu0 %v286
        %v537 = vpop.f32.mrf.mxu0
        %v538 = vadd.f32 0.0, %v537
        %v539 = vpop.f32.mrf.mxu0
        %540 = vmatprep.mubr.f32.mxu0 0.0
        %541 = vmatmul.mubr.f32.gmra.mxu0 %v287
        %v542 = vpop.f32.mrf.mxu0
        %v543 = vadd.f32 0.0, %v542
        %v544 = vpop.f32.mrf.mxu0
        %545 = vmatprep.mubr.f32.mxu0 0.0
        %546 = vmatmul.mubr.f32.gmra.mxu0 %v288
        %v547 = vpop.f32.mrf.mxu0
        %v548 = vadd.f32 0.0, %v547
        %v549 = vpop.f32.mrf.mxu0
        %550 = vmatprep.mubr.f32.mxu0 0.0
        %551 = vmatmul.mubr.f32.gmra.mxu0 %v289
        %v552 = vpop.f32.mrf.mxu0
        %v553 = vadd.f32 0.0, %v552
        %v554 = vpop.f32.mrf.mxu0
        %555 = vmatprep.mubr.f32.mxu0 0.0
        %556 = vmatmul.mubr.f32.gmra.mxu0 %v290
        %v557 = vpop.f32.mrf.mxu0
        %v558 = vadd.f32 0.0, %v557
        %v559 = vpop.f32.mrf.mxu0
        %560 = vmatprep.mubr.f32.mxu0 0.0
        %561 = vmatmul.mubr.f32.gmra.mxu0 %v291
        %v562 = vpop.f32.mrf.mxu0
        %v563 = vadd.f32 0.0, %v562
        %v564 = vpop.f32.mrf.mxu0
        %565 = vdwg.mxu0
        %566 = vmatprep.subr.mxu0 0.0
        %567 = vmatpush1.msra.mxu0 %v323
        %568 = vmatprep.subr.mxu0 0.0
        %569 = vmatpush1.msra.mxu0 %v322
        %570 = vmatprep.subr.mxu0 0.0
        %571 = vmatpush1.msra.mxu0 %v321
        %572 = vmatprep.subr.mxu0 0.0
        %573 = vmatpush1.msra.mxu0 %v320
        %574 = vmatprep.subr.mxu0 0.0
        %575 = vmatpush1.msra.mxu0 %v319
        %576 = vmatprep.subr.mxu0 0.0
        %577 = vmatpush1.msra.mxu0 %v318
        %578 = vmatprep.subr.mxu0 0.0
        %579 = vmatpush1.msra.mxu0 %v317
        %580 = vmatprep.subr.mxu0 0.0
        %581 = vmatpush1.msra.mxu0 %v316
        %582 = vmatprep.subr.mxu0 0.0
        %583 = vmatpush1.msra.mxu0 %v315
        %584 = vmatprep.subr.mxu0 0.0
        %585 = vmatpush1.msra.mxu0 %v314
        %586 = vmatprep.subr.mxu0 0.0
        %587 = vmatpush1.msra.mxu0 %v313
        %588 = vmatprep.subr.mxu0 0.0
        %589 = vmatpush1.msra.mxu0 %v312
        %590 = vmatprep.subr.mxu0 0.0
        %591 = vmatpush1.msra.mxu0 %v311
        %592 = vmatprep.subr.mxu0 0.0
        %593 = vmatpush1.msra.mxu0 %v310
        %594 = vmatprep.subr.mxu0 0.0
        %595 = vmatpush1.msra.mxu0 %v309
        %596 = vmatprep.subr.mxu0 0.0
        %597 = vmatpush1.msra.mxu0 %v308
        %598 = vmatprep.subr.mxu0 0.0
        %599 = vmatpush2.msra.mxu0 0.0
        %600 = vmatprep.subr.mxu0 0.0
        %601 = vmatpush2.msra.mxu0 0.0
        %602 = vmatprep.subr.mxu0 0.0
        %603 = vmatpush2.msra.mxu0 0.0
        %604 = vmatprep.subr.mxu0 0.0
        %605 = vmatpush2.msra.mxu0 0.0
        %606 = vmatprep.subr.mxu0 0.0
        %607 = vmatpush2.msra.mxu0 0.0
        %608 = vmatprep.subr.mxu0 0.0
        %609 = vmatpush2.msra.mxu0 0.0
        %610 = vmatprep.subr.mxu0 0.0
        %611 = vmatpush2.msra.mxu0 0.0
        %612 = vmatprep.subr.mxu0 0.0
        %613 = vmatpush2.msra.mxu0 0.0
        %614 = vmatprep.subr.mxu0 0.0
        %615 = vmatpush2.msra.mxu0 0.0
        %616 = vmatprep.subr.mxu0 0.0
        %617 = vmatpush2.msra.mxu0 0.0
        %618 = vmatprep.subr.mxu0 0.0
        %619 = vmatpush2.msra.mxu0 0.0
        %620 = vmatprep.subr.mxu0 0.0
        %621 = vmatpush2.msra.mxu0 0.0
        %622 = vmatprep.subr.mxu0 0.0
        %623 = vmatpush2.msra.mxu0 0.0
        %624 = vmatprep.subr.mxu0 0.0
        %625 = vmatpush2.msra.mxu0 0.0
        %626 = vmatprep.subr.mxu0 0.0
        %627 = vmatpush2.msra.mxu0 0.0
        %628 = vmatprep.subr.mxu0 0.0
        %629 = vmatpush2.msra.mxu0 0.0
        %630 = vmatprep.mubr.f32.mxu0 0.0
        %631 = vmatmul.mubr.f32.gmra.mxu0 %v260
        %v632 = vpop.f32.mrf.mxu0
        %v633 = vadd.f32 0.0, %v632
        %v634 = vpop.f32.mrf.mxu0
        %635 = vmatprep.mubr.f32.mxu0 0.0
        %636 = vmatmul.mubr.f32.gmra.mxu0 %v261
        %v637 = vpop.f32.mrf.mxu0
        %v638 = vadd.f32 0.0, %v637
        %v639 = vpop.f32.mrf.mxu0
        %640 = vmatprep.mubr.f32.mxu0 0.0
        %641 = vmatmul.mubr.f32.gmra.mxu0 %v262
        %v642 = vpop.f32.mrf.mxu0
        %v643 = vadd.f32 0.0, %v642
        %v644 = vpop.f32.mrf.mxu0
        %645 = vmatprep.mubr.f32.mxu0 0.0
        %646 = vmatmul.mubr.f32.gmra.mxu0 %v263
        %v647 = vpop.f32.mrf.mxu0
        %v648 = vadd.f32 0.0, %v647
        %v649 = vpop.f32.mrf.mxu0
        %650 = vmatprep.mubr.f32.mxu0 0.0
        %651 = vmatmul.mubr.f32.gmra.mxu0 %v264
        %v652 = vpop.f32.mrf.mxu0
        %v653 = vadd.f32 0.0, %v652
        %v654 = vpop.f32.mrf.mxu0
        %655 = vmatprep.mubr.f32.mxu0 0.0
        %656 = vmatmul.mubr.f32.gmra.mxu0 %v265
        %v657 = vpop.f32.mrf.mxu0
        %v658 = vadd.f32 0.0, %v657
        %v659 = vpop.f32.mrf.mxu0
        %660 = vmatprep.mubr.f32.mxu0 0.0
        %661 = vmatmul.mubr.f32.gmra.mxu0 %v266
        %v662 = vpop.f32.mrf.mxu0
        %v663 = vadd.f32 0.0, %v662
        %v664 = vpop.f32.mrf.mxu0
        %665 = vmatprep.mubr.f32.mxu0 0.0
        %666 = vmatmul.mubr.f32.gmra.mxu0 %v267
        %v667 = vpop.f32.mrf.mxu0
        %v668 = vadd.f32 0.0, %v667
        %v669 = vpop.f32.mrf.mxu0
        %670 = vmatprep.mubr.f32.mxu0 0.0
        %671 = vmatmul.mubr.f32.gmra.mxu0 %v268
        %v672 = vpop.f32.mrf.mxu0
        %v673 = vadd.f32 0.0, %v672
        %v674 = vpop.f32.mrf.mxu0
        %675 = vmatprep.mubr.f32.mxu0 0.0
        %676 = vmatmul.mubr.f32.gmra.mxu0 %v269
        %v677 = vpop.f32.mrf.mxu0
        %v678 = vadd.f32 0.0, %v677
        %v679 = vpop.f32.mrf.mxu0
        %680 = vmatprep.mubr.f32.mxu0 0.0
        %681 = vmatmul.mubr.f32.gmra.mxu0 %v270
        %v682 = vpop.f32.mrf.mxu0
        %v683 = vadd.f32 0.0, %v682
        %v684 = vpop.f32.mrf.mxu0
        %685 = vmatprep.mubr.f32.mxu0 0.0
        %686 = vmatmul.mubr.f32.gmra.mxu0 %v271
        %v687 = vpop.f32.mrf.mxu0
        %v688 = vadd.f32 0.0, %v687
        %v689 = vpop.f32.mrf.mxu0
        %690 = vmatprep.mubr.f32.mxu0 0.0
        %691 = vmatmul.mubr.f32.gmra.mxu0 %v272
        %v692 = vpop.f32.mrf.mxu0
        %v693 = vadd.f32 0.0, %v692
        %v694 = vpop.f32.mrf.mxu0
        %695 = vmatprep.mubr.f32.mxu0 0.0
        %696 = vmatmul.mubr.f32.gmra.mxu0 %v273
        %v697 = vpop.f32.mrf.mxu0
        %v698 = vadd.f32 0.0, %v697
        %v699 = vpop.f32.mrf.mxu0
        %700 = vmatprep.mubr.f32.mxu0 0.0
        %701 = vmatmul.mubr.f32.gmra.mxu0 %v274
        %v702 = vpop.f32.mrf.mxu0
        %v703 = vadd.f32 0.0, %v702
        %v704 = vpop.f32.mrf.mxu0
        %705 = vmatprep.mubr.f32.mxu0 0.0
        %706 = vmatmul.mubr.f32.gmra.mxu0 %v275
        %v707 = vpop.f32.mrf.mxu0
        %v708 = vadd.f32 0.0, %v707
        %v709 = vpop.f32.mrf.mxu0
        %710 = vmatprep.mubr.f32.mxu0 0.0
        %711 = vmatmul.mubr.f32.gmra.mxu0 %v276
        %v712 = vpop.f32.mrf.mxu0
        %v713 = vadd.f32 0.0, %v712
        %v714 = vpop.f32.mrf.mxu0
        %715 = vmatprep.mubr.f32.mxu0 0.0
        %716 = vmatmul.mubr.f32.gmra.mxu0 %v277
        %v717 = vpop.f32.mrf.mxu0
        %v718 = vadd.f32 0.0, %v717
        %v719 = vpop.f32.mrf.mxu0
        %720 = vmatprep.mubr.f32.mxu0 0.0
        %721 = vmatmul.mubr.f32.gmra.mxu0 %v278
        %v722 = vpop.f32.mrf.mxu0
        %v723 = vadd.f32 0.0, %v722
        %v724 = vpop.f32.mrf.mxu0
        %725 = vmatprep.mubr.f32.mxu0 0.0
        %726 = vmatmul.mubr.f32.gmra.mxu0 %v279
        %v727 = vpop.f32.mrf.mxu0
        %v728 = vadd.f32 0.0, %v727
        %v729 = vpop.f32.mrf.mxu0
        %730 = vmatprep.mubr.f32.mxu0 0.0
        %731 = vmatmul.mubr.f32.gmra.mxu0 %v280
        %v732 = vpop.f32.mrf.mxu0
        %v733 = vadd.f32 0.0, %v732
        %v734 = vpop.f32.mrf.mxu0
        %735 = vmatprep.mubr.f32.mxu0 0.0
        %736 = vmatmul.mubr.f32.gmra.mxu0 %v281
        %v737 = vpop.f32.mrf.mxu0
        %v738 = vadd.f32 0.0, %v737
        %v739 = vpop.f32.mrf.mxu0
        %740 = vmatprep.mubr.f32.mxu0 0.0
        %741 = vmatmul.mubr.f32.gmra.mxu0 %v282
        %v742 = vpop.f32.mrf.mxu0
        %v743 = vadd.f32 0.0, %v742
        %v744 = vpop.f32.mrf.mxu0
        %745 = vmatprep.mubr.f32.mxu0 0.0
        %746 = vmatmul.mubr.f32.gmra.mxu0 %v283
        %v747 = vpop.f32.mrf.mxu0
        %v748 = vadd.f32 0.0, %v747
        %v749 = vpop.f32.mrf.mxu0
        %750 = vmatprep.mubr.f32.mxu0 0.0
        %751 = vmatmul.mubr.f32.gmra.mxu0 %v284
        %v752 = vpop.f32.mrf.mxu0
        %v753 = vadd.f32 0.0, %v752
        %v754 = vpop.f32.mrf.mxu0
        %755 = vmatprep.mubr.f32.mxu0 0.0
        %756 = vmatmul.mubr.f32.gmra.mxu0 %v285
        %v757 = vpop.f32.mrf.mxu0
        %v758 = vadd.f32 0.0, %v757
        %v759 = vpop.f32.mrf.mxu0
        %760 = vmatprep.mubr.f32.mxu0 0.0
        %761 = vmatmul.mubr.f32.gmra.mxu0 %v286
        %v762 = vpop.f32.mrf.mxu0
        %v763 = vadd.f32 0.0, %v762
        %v764 = vpop.f32.mrf.mxu0
        %765 = vmatprep.mubr.f32.mxu0 0.0
        %766 = vmatmul.mubr.f32.gmra.mxu0 %v287
        %v767 = vpop.f32.mrf.mxu0
        %v768 = vadd.f32 0.0, %v767
        %v769 = vpop.f32.mrf.mxu0
        %770 = vmatprep.mubr.f32.mxu0 0.0
        %771 = vmatmul.mubr.f32.gmra.mxu0 %v288
        %v772 = vpop.f32.mrf.mxu0
        %v773 = vadd.f32 0.0, %v772
        %v774 = vpop.f32.mrf.mxu0
        %775 = vmatprep.mubr.f32.mxu0 0.0
        %776 = vmatmul.mubr.f32.gmra.mxu0 %v289
        %v777 = vpop.f32.mrf.mxu0
        %v778 = vadd.f32 0.0, %v777
        %v779 = vpop.f32.mrf.mxu0
        %780 = vmatprep.mubr.f32.mxu0 0.0
        %781 = vmatmul.mubr.f32.gmra.mxu0 %v290
        %v782 = vpop.f32.mrf.mxu0
        %v783 = vadd.f32 0.0, %v782
        %v784 = vpop.f32.mrf.mxu0
        %785 = vmatprep.mubr.f32.mxu0 0.0
        %786 = vmatmul.mubr.f32.gmra.mxu0 %v291
        %v787 = vpop.f32.mrf.mxu0
        %v788 = vadd.f32 0.0, %v787
        %v789 = vpop.f32.mrf.mxu0
        %790 = vdwg.mxu0
        %v791 = vlaneseq
        %v792 = vshrl.u32 %v791, 7
        %v793 = vadd.s32 %v792, 8
        %v794 = vadd.s32 %v792, 16
        %v795 = vadd.s32 %v792, 24
        %v796 = vadd.s32 %v792, 32
        %v797 = vadd.s32 %v792, 40
        %v798 = vadd.s32 %v792, 48
        %v799 = vadd.s32 %v792, 56
        %v800 = vadd.s32 %v792, 64
        %v801 = vadd.s32 %v792, 72
        %v802 = vadd.s32 %v792, 80
        %v803 = vadd.s32 %v792, 88
        %v804 = vadd.s32 %v792, 96
        %v805 = vadd.s32 %v792, 104
        %v806 = vadd.s32 %v792, 112
        %v807 = vadd.s32 %v792, 120
        %v808 = vlaneseq
        %v809 = vand.u32 %v808, 127
        %vm810 = vcmp.le.s32.totalorder %v809, %v792
        %vm811 = vcmp.le.s32.totalorder %v809, %v793
        %vm812 = vcmp.le.s32.totalorder %v809, %v794
        %vm813 = vcmp.le.s32.totalorder %v809, %v795
        %vm814 = vcmp.le.s32.totalorder %v809, %v796
        %vm815 = vcmp.le.s32.totalorder %v809, %v797
        %vm816 = vcmp.le.s32.totalorder %v809, %v798
        %vm817 = vcmp.le.s32.totalorder %v809, %v799
        %vm818 = vcmp.le.s32.totalorder %v809, %v800
        %vm819 = vcmp.le.s32.totalorder %v809, %v801
        %vm820 = vcmp.le.s32.totalorder %v809, %v802
        %vm821 = vcmp.le.s32.totalorder %v809, %v803
        %vm822 = vcmp.le.s32.totalorder %v809, %v804
        %vm823 = vcmp.le.s32.totalorder %v809, %v805
        %vm824 = vcmp.le.s32.totalorder %v809, %v806
        %vm825 = vcmp.le.s32.totalorder %v809, %v807
        %v826 = vsel %vm810, 0.0078125, 0.0
        %v827 = vsel %vm811, 0.0078125, 0.0
        %v828 = vsel %vm812, 0.0078125, 0.0
        %v829 = vsel %vm813, 0.0078125, 0.0
        %v830 = vsel %vm814, 0.0078125, 0.0
        %v831 = vsel %vm815, 0.0078125, 0.0
        %v832 = vsel %vm816, 0.0078125, 0.0
        %v833 = vsel %vm817, 0.0078125, 0.0
        %v834 = vsel %vm818, 0.0078125, 0.0
        %v835 = vsel %vm819, 0.0078125, 0.0
        %v836 = vsel %vm820, 0.0078125, 0.0
        %v837 = vsel %vm821, 0.0078125, 0.0
        %v838 = vsel %vm822, 0.0078125, 0.0
        %v839 = vsel %vm823, 0.0078125, 0.0
        %v840 = vsel %vm824, 0.0078125, 0.0
        %v841 = vsel %vm825, 0.0078125, 0.0
        %vm842 = vcmask 64512
        %v843 = vsel %vm842, %v408, -inf
        %v844 = vsel %vm842, %v413, -inf
        %v845 = vsel %vm842, %v418, -inf
        %v846 = vsel %vm842, %v423, -inf
        %v847 = vsel %vm842, %v428, -inf
        %v848 = vmax.f32 %v843, %v847
        %v849 = vsel %vm842, %v433, -inf
        %v850 = vmax.f32 %v844, %v849
        %v851 = vsel %vm842, %v438, -inf
        %v852 = vmax.f32 %v845, %v851
        %v853 = vsel %vm842, %v443, -inf
        %v854 = vmax.f32 %v846, %v853
        %v855 = vsel %vm842, %v448, -inf
        %v856 = vmax.f32 %v848, %v855
        %v857 = vsel %vm842, %v453, -inf
        %v858 = vmax.f32 %v850, %v857
        %v859 = vsel %vm842, %v458, -inf
        %v860 = vmax.f32 %v852, %v859
        %v861 = vsel %vm842, %v463, -inf
        %v862 = vmax.f32 %v854, %v861
        %v863 = vsel %vm842, %v468, -inf
        %v864 = vmax.f32 %v856, %v863
        %v865 = vsel %vm842, %v473, -inf
        %v866 = vmax.f32 %v858, %v865
        %v867 = vsel %vm842, %v478, -inf
        %v868 = vmax.f32 %v860, %v867
        %v869 = vsel %vm842, %v483, -inf
        %v870 = vmax.f32 %v862, %v869
        %v871 = vmax.f32 %v864, %v866
        %v872 = vmax.f32 %v868, %v870
        %v873 = vmax.f32 %v871, %v872
        %v874 = vrot.slane %v873, 4
        %v875 = vmax.f32 %v873, %v874
        %v876 = vrot.slane %v875, 2
        %v877 = vmax.f32 %v875, %v876
        %v878 = vrot.slane %v877, 1
        %v879 = vmax.f32 %v877, %v878
        %v880 = vsub.f32 %v408, %v879
        %v881 = vsub.f32 %v413, %v879
        %v882 = vsub.f32 %v418, %v879
        %v883 = vsub.f32 %v423, %v879
        %v884 = vsub.f32 %v428, %v879
        %v885 = vsub.f32 %v433, %v879
        %v886 = vsub.f32 %v438, %v879
        %v887 = vsub.f32 %v443, %v879
        %v888 = vsub.f32 %v448, %v879
        %v889 = vsub.f32 %v453, %v879
        %v890 = vsub.f32 %v458, %v879
        %v891 = vsub.f32 %v463, %v879
        %v892 = vsub.f32 %v468, %v879
        %v893 = vsub.f32 %v473, %v879
        %v894 = vsub.f32 %v478, %v879
        %v895 = vsub.f32 %v483, %v879
        %v896 = vmul.f32 %v880, 1.442695
        %v897 = vpow.pop %v896
        %v898 = vmul.f32 %v881, 1.442695
        %v899 = vpow.pop %v898
        %v900 = vmul.f32 %v882, 1.442695
        %v901 = vpow.pop %v900
        %v902 = vmul.f32 %v883, 1.442695
        %v903 = vpow.pop %v902
        %v904 = vmul.f32 %v884, 1.442695
        %v905 = vpow.pop %v904
        %v906 = vmul.f32 %v885, 1.442695
        %v907 = vpow.pop %v906
        %v908 = vmul.f32 %v886, 1.442695
        %v909 = vpow.pop %v908
        %v910 = vmul.f32 %v887, 1.442695
        %v911 = vpow.pop %v910
        %v912 = vmul.f32 %v888, 1.442695
        %v913 = vpow.pop %v912
        %v914 = vmul.f32 %v889, 1.442695
        %v915 = vpow.pop %v914
        %v916 = vmul.f32 %v890, 1.442695
        %v917 = vpow.pop %v916
        %v918 = vmul.f32 %v891, 1.442695
        %v919 = vpow.pop %v918
        %v920 = vmul.f32 %v892, 1.442695
        %v921 = vpow.pop %v920
        %v922 = vmul.f32 %v893, 1.442695
        %v923 = vpow.pop %v922
        %v924 = vmul.f32 %v894, 1.442695
        %v925 = vpow.pop %v924
        %v926 = vmul.f32 %v895, 1.442695
        %v927 = vpow.pop %v926
        %v928 = vsel %vm842, %v897, 0.0
        %v929 = vsel %vm842, %v899, 0.0
        %v930 = vadd.f32 %v928, %v929
        %v931 = vsel %vm842, %v901, 0.0
        %v932 = vadd.f32 %v930, %v931
        %v933 = vsel %vm842, %v903, 0.0
        %v934 = vadd.f32 %v932, %v933
        %v935 = vsel %vm842, %v905, 0.0
        %v936 = vadd.f32 %v934, %v935
        %v937 = vsel %vm842, %v907, 0.0
        %v938 = vadd.f32 %v936, %v937
        %v939 = vsel %vm842, %v909, 0.0
        %v940 = vadd.f32 %v938, %v939
        %v941 = vsel %vm842, %v911, 0.0
        %v942 = vadd.f32 %v940, %v941
        %v943 = vsel %vm842, %v913, 0.0
        %v944 = vadd.f32 %v942, %v943
        %v945 = vsel %vm842, %v915, 0.0
        %v946 = vadd.f32 %v944, %v945
        %v947 = vsel %vm842, %v917, 0.0
        %v948 = vadd.f32 %v946, %v947
        %v949 = vsel %vm842, %v919, 0.0
        %v950 = vadd.f32 %v948, %v949
        %v951 = vsel %vm842, %v921, 0.0
        %v952 = vadd.f32 %v950, %v951
        %v953 = vsel %vm842, %v923, 0.0
        %v954 = vadd.f32 %v952, %v953
        %v955 = vsel %vm842, %v925, 0.0
        %v956 = vadd.f32 %v954, %v955
        %v957 = vsel %vm842, %v927, 0.0
        %v958 = vadd.f32 %v956, %v957
        %v959 = vrot.slane %v958, 4
        %v960 = vadd.f32 %v958, %v959
        %v961 = vrot.slane %v960, 2
        %v962 = vadd.f32 %v960, %v961
        %v963 = vrot.slane %v962, 1
        %v964 = vadd.f32 %v962, %v963
        %v965 = vrcp.pop %v964
        %v966 = vmul.f32 %v897, %v965
        %v967 = vmul.f32 %v899, %v965
        %v968 = vmul.f32 %v901, %v965
        %v969 = vmul.f32 %v903, %v965
        %v970 = vmul.f32 %v905, %v965
        %v971 = vmul.f32 %v907, %v965
        %v972 = vmul.f32 %v909, %v965
        %v973 = vmul.f32 %v911, %v965
        %v974 = vmul.f32 %v913, %v965
        %v975 = vmul.f32 %v915, %v965
        %v976 = vmul.f32 %v917, %v965
        %v977 = vmul.f32 %v919, %v965
        %v978 = vmul.f32 %v921, %v965
        %v979 = vmul.f32 %v923, %v965
        %v980 = vmul.f32 %v925, %v965
        %v981 = vmul.f32 %v927, %v965
        %982 = vxpose.xlu0.b32.start [1/16] %v966, 128
        %983 = vxpose.xlu0.b32.cont [2/16] %v967, 128
        %984 = vxpose.xlu0.b32.cont [3/16] %v968, 128
        %985 = vxpose.xlu0.b32.cont [4/16] %v969, 128
        %986 = vxpose.xlu0.b32.cont [5/16] %v970, 128
        %987 = vxpose.xlu0.b32.cont [6/16] %v971, 128
        %988 = vxpose.xlu0.b32.cont [7/16] %v972, 128
        %989 = vxpose.xlu0.b32.cont [8/16] %v973, 128
        %990 = vxpose.xlu0.b32.cont [9/16] %v974, 128
        %991 = vxpose.xlu0.b32.cont [10/16] %v975, 128
        %992 = vxpose.xlu0.b32.cont [11/16] %v976, 128
        %993 = vxpose.xlu0.b32.cont [12/16] %v977, 128
        %994 = vxpose.xlu0.b32.cont [13/16] %v978, 128
        %995 = vxpose.xlu0.b32.cont [14/16] %v979, 128
        %996 = vxpose.xlu0.b32.cont [15/16] %v980, 128
        %997 = vxpose.xlu0.b32.end [16/16] %v981, 128
        %v998 = vpop.trf.xlu0
        %v999 = vpop.trf.xlu0
        %v1000 = vpop.trf.xlu0
        %v1001 = vpop.trf.xlu0
        %v1002 = vpop.trf.xlu0
        %v1003 = vpop.trf.xlu0
        %v1004 = vpop.trf.xlu0
        %v1005 = vpop.trf.xlu0
        %v1006 = vpop.trf.xlu0
        %v1007 = vpop.trf.xlu0
        %v1008 = vpop.trf.xlu0
        %v1009 = vpop.trf.xlu0
        %v1010 = vpop.trf.xlu0
        %v1011 = vpop.trf.xlu0
        %v1012 = vpop.trf.xlu0
        %v1013 = vpop.trf.xlu0
        %v1014 = vlaneseq
        %v1015 = vshrl.u32 %v1014, 7
        %v1016 = vsub.s32 0, %v1015
        %v1017 = vrot.slane %v998, %v1016
        %1019 = vrot.lane.b32.xlu0 %v1017, 256
        %v1020 = vpop.permute.xlu0 %1019
        %s1022 = sor.u32 256, 8
        %1023 = vrot.lane.b32.xlu0 %v1017, %s1022
        %v1024 = vpop.permute.xlu0 %1023
        %s1026 = sor.u32 256, 16
        %1027 = vrot.lane.b32.xlu0 %v1017, %s1026
        %v1028 = vpop.permute.xlu0 %1027
        %s1030 = sor.u32 256, 24
        %1031 = vrot.lane.b32.xlu0 %v1017, %s1030
        %v1032 = vpop.permute.xlu0 %1031
        %s1034 = sor.u32 256, 32
        %1035 = vrot.lane.b32.xlu0 %v1017, %s1034
        %v1036 = vpop.permute.xlu0 %1035
        %s1038 = sor.u32 256, 40
        %1039 = vrot.lane.b32.xlu0 %v1017, %s1038
        %v1040 = vpop.permute.xlu0 %1039
        %s1042 = sor.u32 256, 48
        %1043 = vrot.lane.b32.xlu0 %v1017, %s1042
        %v1044 = vpop.permute.xlu0 %1043
        %s1046 = sor.u32 256, 56
        %1047 = vrot.lane.b32.xlu0 %v1017, %s1046
        %v1048 = vpop.permute.xlu0 %1047
        %s1050 = sor.u32 256, 64
        %1051 = vrot.lane.b32.xlu0 %v1017, %s1050
        %v1052 = vpop.permute.xlu0 %1051
        %s1054 = sor.u32 256, 72
        %1055 = vrot.lane.b32.xlu0 %v1017, %s1054
        %v1056 = vpop.permute.xlu0 %1055
        %s1058 = sor.u32 256, 80
        %1059 = vrot.lane.b32.xlu0 %v1017, %s1058
        %v1060 = vpop.permute.xlu0 %1059
        %s1062 = sor.u32 256, 88
        %1063 = vrot.lane.b32.xlu0 %v1017, %s1062
        %v1064 = vpop.permute.xlu0 %1063
        %s1066 = sor.u32 256, 96
        %1067 = vrot.lane.b32.xlu0 %v1017, %s1066
        %v1068 = vpop.permute.xlu0 %1067
        %s1070 = sor.u32 256, 104
        %1071 = vrot.lane.b32.xlu0 %v1017, %s1070
        %v1072 = vpop.permute.xlu0 %1071
        %s1074 = sor.u32 256, 112
        %1075 = vrot.lane.b32.xlu0 %v1017, %s1074
        %v1076 = vpop.permute.xlu0 %1075
        %s1078 = sor.u32 256, 120
        %1079 = vrot.lane.b32.xlu0 %v1017, %s1078
        %v1080 = vpop.permute.xlu0 %1079
        %v1081 = vmul.f32 %v1020, %v826
        %v1082 = vmul.f32 %v1024, %v827
        %v1083 = vmul.f32 %v1028, %v828
        %v1084 = vmul.f32 %v1032, %v829
        %v1085 = vmul.f32 %v1036, %v830
        %v1086 = vmul.f32 %v1040, %v831
        %v1087 = vmul.f32 %v1044, %v832
        %v1088 = vmul.f32 %v1048, %v833
        %v1089 = vmul.f32 %v1052, %v834
        %v1090 = vmul.f32 %v1056, %v835
        %v1091 = vmul.f32 %v1060, %v836
        %v1092 = vmul.f32 %v1064, %v837
        %v1093 = vmul.f32 %v1068, %v838
        %v1094 = vmul.f32 %v1072, %v839
        %v1095 = vmul.f32 %v1076, %v840
        %v1096 = vmul.f32 %v1080, %v841
        %1097 = vmatprep.subr.mxu0 0.0
        %1098 = vmatpush1.msra.mxu0 %v708
        %1099 = vmatprep.subr.mxu0 0.0
        %1100 = vmatpush1.msra.mxu0 %v703
        %1101 = vmatprep.subr.mxu0 0.0
        %1102 = vmatpush1.msra.mxu0 %v698
        %1103 = vmatprep.subr.mxu0 0.0
        %1104 = vmatpush1.msra.mxu0 %v693
        %1105 = vmatprep.subr.mxu0 0.0
        %1106 = vmatpush1.msra.mxu0 %v688
        %1107 = vmatprep.subr.mxu0 0.0
        %1108 = vmatpush1.msra.mxu0 %v683
        %1109 = vmatprep.subr.mxu0 0.0
        %1110 = vmatpush1.msra.mxu0 %v678
        %1111 = vmatprep.subr.mxu0 0.0
        %1112 = vmatpush1.msra.mxu0 %v673
        %1113 = vmatprep.subr.mxu0 0.0
        %1114 = vmatpush1.msra.mxu0 %v668
        %1115 = vmatprep.subr.mxu0 0.0
        %1116 = vmatpush1.msra.mxu0 %v663
        %1117 = vmatprep.subr.mxu0 0.0
        %1118 = vmatpush1.msra.mxu0 %v658
        %1119 = vmatprep.subr.mxu0 0.0
        %1120 = vmatpush1.msra.mxu0 %v653
        %1121 = vmatprep.subr.mxu0 0.0
        %1122 = vmatpush1.msra.mxu0 %v648
        %1123 = vmatprep.subr.mxu0 0.0
        %1124 = vmatpush1.msra.mxu0 %v643
        %1125 = vmatprep.subr.mxu0 0.0
        %1126 = vmatpush1.msra.mxu0 %v638
        %1127 = vmatprep.subr.mxu0 0.0
        %1128 = vmatpush1.msra.mxu0 %v633
        %1129 = vmatprep.subr.mxu0 0.0
        %1130 = vmatpush2.msra.mxu0 0.0
        %1131 = vmatprep.subr.mxu0 0.0
        %1132 = vmatpush2.msra.mxu0 0.0
        %1133 = vmatprep.subr.mxu0 0.0
        %1134 = vmatpush2.msra.mxu0 0.0
        %1135 = vmatprep.subr.mxu0 0.0
        %1136 = vmatpush2.msra.mxu0 0.0
        %1137 = vmatprep.subr.mxu0 0.0
        %1138 = vmatpush2.msra.mxu0 0.0
        %1139 = vmatprep.subr.mxu0 0.0
        %1140 = vmatpush2.msra.mxu0 0.0
        %1141 = vmatprep.subr.mxu0 0.0
        %1142 = vmatpush2.msra.mxu0 0.0
        %1143 = vmatprep.subr.mxu0 0.0
        %1144 = vmatpush2.msra.mxu0 0.0
        %1145 = vmatprep.subr.mxu0 0.0
        %1146 = vmatpush2.msra.mxu0 0.0
        %1147 = vmatprep.subr.mxu0 0.0
        %1148 = vmatpush2.msra.mxu0 0.0
        %1149 = vmatprep.subr.mxu0 0.0
        %1150 = vmatpush2.msra.mxu0 0.0
        %1151 = vmatprep.subr.mxu0 0.0
        %1152 = vmatpush2.msra.mxu0 0.0
        %1153 = vmatprep.subr.mxu0 0.0
        %1154 = vmatpush2.msra.mxu0 0.0
        %1155 = vmatprep.subr.mxu0 0.0
        %1156 = vmatpush2.msra.mxu0 0.0
        %1157 = vmatprep.subr.mxu0 0.0
        %1158 = vmatpush2.msra.mxu0 0.0
        %1159 = vmatprep.subr.mxu0 0.0
        %1160 = vmatpush2.msra.mxu0 0.0
        %1161 = vmatprep.mubr.f32.mxu0 0.0
        %1162 = vmatmul.mubr.f32.gmra.mxu0 %v1081
        %v1163 = vpop.f32.mrf.mxu0
        %v1164 = vadd.f32 0.0, %v1163
        %v1165 = vpop.f32.mrf.mxu0
        %1166 = vmatprep.mubr.f32.mxu0 0.0
        %1167 = vmatmul.mubr.f32.gmra.mxu0 %v1082
        %v1168 = vpop.f32.mrf.mxu0
        %v1169 = vadd.f32 0.0, %v1168
        %v1170 = vpop.f32.mrf.mxu0
        %1171 = vmatprep.mubr.f32.mxu0 0.0
        %1172 = vmatmul.mubr.f32.gmra.mxu0 %v1083
        %v1173 = vpop.f32.mrf.mxu0
        %v1174 = vadd.f32 0.0, %v1173
        %v1175 = vpop.f32.mrf.mxu0
        %1176 = vmatprep.mubr.f32.mxu0 0.0
        %1177 = vmatmul.mubr.f32.gmra.mxu0 %v1084
        %v1178 = vpop.f32.mrf.mxu0
        %v1179 = vadd.f32 0.0, %v1178
        %v1180 = vpop.f32.mrf.mxu0
        %1181 = vmatprep.mubr.f32.mxu0 0.0
        %1182 = vmatmul.mubr.f32.gmra.mxu0 %v1085
        %v1183 = vpop.f32.mrf.mxu0
        %v1184 = vadd.f32 0.0, %v1183
        %v1185 = vpop.f32.mrf.mxu0
        %1186 = vmatprep.mubr.f32.mxu0 0.0
        %1187 = vmatmul.mubr.f32.gmra.mxu0 %v1086
        %v1188 = vpop.f32.mrf.mxu0
        %v1189 = vadd.f32 0.0, %v1188
        %v1190 = vpop.f32.mrf.mxu0
        %1191 = vmatprep.mubr.f32.mxu0 0.0
        %1192 = vmatmul.mubr.f32.gmra.mxu0 %v1087
        %v1193 = vpop.f32.mrf.mxu0
        %v1194 = vadd.f32 0.0, %v1193
        %v1195 = vpop.f32.mrf.mxu0
        %1196 = vmatprep.mubr.f32.mxu0 0.0
        %1197 = vmatmul.mubr.f32.gmra.mxu0 %v1088
        %v1198 = vpop.f32.mrf.mxu0
        %v1199 = vadd.f32 0.0, %v1198
        %v1200 = vpop.f32.mrf.mxu0
        %1201 = vmatprep.mubr.f32.mxu0 0.0
        %1202 = vmatmul.mubr.f32.gmra.mxu0 %v1089
        %v1203 = vpop.f32.mrf.mxu0
        %v1204 = vadd.f32 0.0, %v1203
        %v1205 = vpop.f32.mrf.mxu0
        %1206 = vmatprep.mubr.f32.mxu0 0.0
        %1207 = vmatmul.mubr.f32.gmra.mxu0 %v1090
        %v1208 = vpop.f32.mrf.mxu0
        %v1209 = vadd.f32 0.0, %v1208
        %v1210 = vpop.f32.mrf.mxu0
        %1211 = vmatprep.mubr.f32.mxu0 0.0
        %1212 = vmatmul.mubr.f32.gmra.mxu0 %v1091
        %v1213 = vpop.f32.mrf.mxu0
        %v1214 = vadd.f32 0.0, %v1213
        %v1215 = vpop.f32.mrf.mxu0
        %1216 = vmatprep.mubr.f32.mxu0 0.0
        %1217 = vmatmul.mubr.f32.gmra.mxu0 %v1092
        %v1218 = vpop.f32.mrf.mxu0
        %v1219 = vadd.f32 0.0, %v1218
        %v1220 = vpop.f32.mrf.mxu0
        %1221 = vmatprep.mubr.f32.mxu0 0.0
        %1222 = vmatmul.mubr.f32.gmra.mxu0 %v1093
        %v1223 = vpop.f32.mrf.mxu0
        %v1224 = vadd.f32 0.0, %v1223
        %v1225 = vpop.f32.mrf.mxu0
        %1226 = vmatprep.mubr.f32.mxu0 0.0
        %1227 = vmatmul.mubr.f32.gmra.mxu0 %v1094
        %v1228 = vpop.f32.mrf.mxu0
        %v1229 = vadd.f32 0.0, %v1228
        %v1230 = vpop.f32.mrf.mxu0
        %1231 = vmatprep.mubr.f32.mxu0 0.0
        %1232 = vmatmul.mubr.f32.gmra.mxu0 %v1095
        %v1233 = vpop.f32.mrf.mxu0
        %v1234 = vadd.f32 0.0, %v1233
        %v1235 = vpop.f32.mrf.mxu0
        %1236 = vmatprep.mubr.f32.mxu0 0.0
        %1237 = vmatmul.mubr.f32.gmra.mxu0 %v1096
        %v1238 = vpop.f32.mrf.mxu0
        %v1239 = vadd.f32 0.0, %v1238
        %v1240 = vpop.f32.mrf.mxu0
        %1241 = vdwg.mxu0
        %v1242 = vlaneseq
        %v1243 = vshrl.u32 %v1242, 7
        %v1244 = vsub.s32 1, %v1243
        %v1245 = vrot.slane %v998, %v1244
        %1247 = vrot.lane.b32.xlu0 %v1245, 256
        %v1248 = vpop.permute.xlu0 %1247
        %s1250 = sor.u32 256, 8
        %1251 = vrot.lane.b32.xlu0 %v1245, %s1250
        %v1252 = vpop.permute.xlu0 %1251
        %s1254 = sor.u32 256, 16
        %1255 = vrot.lane.b32.xlu0 %v1245, %s1254
        %v1256 = vpop.permute.xlu0 %1255
        %s1258 = sor.u32 256, 24
        %1259 = vrot.lane.b32.xlu0 %v1245, %s1258
        %v1260 = vpop.permute.xlu0 %1259
        %s1262 = sor.u32 256, 32
        %1263 = vrot.lane.b32.xlu0 %v1245, %s1262
        %v1264 = vpop.permute.xlu0 %1263
        %s1266 = sor.u32 256, 40
        %1267 = vrot.lane.b32.xlu0 %v1245, %s1266
        %v1268 = vpop.permute.xlu0 %1267
        %s1270 = sor.u32 256, 48
        %1271 = vrot.lane.b32.xlu0 %v1245, %s1270
        %v1272 = vpop.permute.xlu0 %1271
        %s1274 = sor.u32 256, 56
        %1275 = vrot.lane.b32.xlu0 %v1245, %s1274
        %v1276 = vpop.permute.xlu0 %1275
        %s1278 = sor.u32 256, 64
        %1279 = vrot.lane.b32.xlu0 %v1245, %s1278
        %v1280 = vpop.permute.xlu0 %1279
        %s1282 = sor.u32 256, 72
        %1283 = vrot.lane.b32.xlu0 %v1245, %s1282
        %v1284 = vpop.permute.xlu0 %1283
        %s1286 = sor.u32 256, 80
        %1287 = vrot.lane.b32.xlu0 %v1245, %s1286
        %v1288 = vpop.permute.xlu0 %1287
        %s1290 = sor.u32 256, 88
        %1291 = vrot.lane.b32.xlu0 %v1245, %s1290
        %v1292 = vpop.permute.xlu0 %1291
        %s1294 = sor.u32 256, 96
        %1295 = vrot.lane.b32.xlu0 %v1245, %s1294
        %v1296 = vpop.permute.xlu0 %1295
        %s1298 = sor.u32 256, 104
        %1299 = vrot.lane.b32.xlu0 %v1245, %s1298
        %v1300 = vpop.permute.xlu0 %1299
        %s1302 = sor.u32 256, 112
        %1303 = vrot.lane.b32.xlu0 %v1245, %s1302
        %v1304 = vpop.permute.xlu0 %1303
        %s1306 = sor.u32 256, 120
        %1307 = vrot.lane.b32.xlu0 %v1245, %s1306
        %v1308 = vpop.permute.xlu0 %1307
        %v1309 = vmul.f32 %v1248, %v826
        %v1310 = vmul.f32 %v1252, %v827
        %v1311 = vmul.f32 %v1256, %v828
        %v1312 = vmul.f32 %v1260, %v829
        %v1313 = vmul.f32 %v1264, %v830
        %v1314 = vmul.f32 %v1268, %v831
        %v1315 = vmul.f32 %v1272, %v832
        %v1316 = vmul.f32 %v1276, %v833
        %v1317 = vmul.f32 %v1280, %v834
        %v1318 = vmul.f32 %v1284, %v835
        %v1319 = vmul.f32 %v1288, %v836
        %v1320 = vmul.f32 %v1292, %v837
        %v1321 = vmul.f32 %v1296, %v838
        %v1322 = vmul.f32 %v1300, %v839
        %v1323 = vmul.f32 %v1304, %v840
        %v1324 = vmul.f32 %v1308, %v841
        %1341 = vrot.lane.b32.xlu0 %v633, 112
        %v1342 = vpop.permute.xlu0 %1341
        %1343 = vrot.lane.b32.xlu0 %v638, 112
        %v1344 = vpop.permute.xlu0 %1343
        %1345 = vrot.lane.b32.xlu0 %v643, 112
        %v1346 = vpop.permute.xlu0 %1345
        %1347 = vrot.lane.b32.xlu0 %v648, 112
        %v1348 = vpop.permute.xlu0 %1347
        %1349 = vrot.lane.b32.xlu0 %v653, 112
        %v1350 = vpop.permute.xlu0 %1349
        %1351 = vrot.lane.b32.xlu0 %v658, 112
        %v1352 = vpop.permute.xlu0 %1351
        %1353 = vrot.lane.b32.xlu0 %v663, 112
        %v1354 = vpop.permute.xlu0 %1353
        %1355 = vrot.lane.b32.xlu0 %v668, 112
        %v1356 = vpop.permute.xlu0 %1355
        %1357 = vrot.lane.b32.xlu0 %v673, 112
        %v1358 = vpop.permute.xlu0 %1357
        %1359 = vrot.lane.b32.xlu0 %v678, 112
        %v1360 = vpop.permute.xlu0 %1359
        %1361 = vrot.lane.b32.xlu0 %v683, 112
        %v1362 = vpop.permute.xlu0 %1361
        %1363 = vrot.lane.b32.xlu0 %v688, 112
        %v1364 = vpop.permute.xlu0 %1363
        %1365 = vrot.lane.b32.xlu0 %v693, 112
        %v1366 = vpop.permute.xlu0 %1365
        %1367 = vrot.lane.b32.xlu0 %v698, 112
        %v1368 = vpop.permute.xlu0 %1367
        %1369 = vrot.lane.b32.xlu0 %v703, 112
        %v1370 = vpop.permute.xlu0 %1369
        %1371 = vrot.lane.b32.xlu0 %v708, 112
        %v1372 = vpop.permute.xlu0 %1371
        %1389 = vmatprep.subr.mxu0 0.0
        %1390 = vmatpush1.msra.mxu0 %v1372
        %1391 = vmatprep.subr.mxu0 0.0
        %1392 = vmatpush1.msra.mxu0 %v1370
        %1393 = vmatprep.subr.mxu0 0.0
        %1394 = vmatpush1.msra.mxu0 %v1368
        %1395 = vmatprep.subr.mxu0 0.0
        %1396 = vmatpush1.msra.mxu0 %v1366
        %1397 = vmatprep.subr.mxu0 0.0
        %1398 = vmatpush1.msra.mxu0 %v1364
        %1399 = vmatprep.subr.mxu0 0.0
        %1400 = vmatpush1.msra.mxu0 %v1362
        %1401 = vmatprep.subr.mxu0 0.0
        %1402 = vmatpush1.msra.mxu0 %v1360
        %1403 = vmatprep.subr.mxu0 0.0
        %1404 = vmatpush1.msra.mxu0 %v1358
        %1405 = vmatprep.subr.mxu0 0.0
        %1406 = vmatpush1.msra.mxu0 %v1356
        %1407 = vmatprep.subr.mxu0 0.0
        %1408 = vmatpush1.msra.mxu0 %v1354
        %1409 = vmatprep.subr.mxu0 0.0
        %1410 = vmatpush1.msra.mxu0 %v1352
        %1411 = vmatprep.subr.mxu0 0.0
        %1412 = vmatpush1.msra.mxu0 %v1350
        %1413 = vmatprep.subr.mxu0 0.0
        %1414 = vmatpush1.msra.mxu0 %v1348
        %1415 = vmatprep.subr.mxu0 0.0
        %1416 = vmatpush1.msra.mxu0 %v1346
        %1417 = vmatprep.subr.mxu0 0.0
        %1418 = vmatpush1.msra.mxu0 %v1344
        %1419 = vmatprep.subr.mxu0 0.0
        %1420 = vmatpush1.msra.mxu0 %v1342
        %1421 = vmatprep.subr.mxu0 0.0
        %1422 = vmatpush2.msra.mxu0 0.0
        %1423 = vmatprep.subr.mxu0 0.0
        %1424 = vmatpush2.msra.mxu0 0.0
        %1425 = vmatprep.subr.mxu0 0.0
        %1426 = vmatpush2.msra.mxu0 0.0
        %1427 = vmatprep.subr.mxu0 0.0
        %1428 = vmatpush2.msra.mxu0 0.0
        %1429 = vmatprep.subr.mxu0 0.0
        %1430 = vmatpush2.msra.mxu0 0.0
        %1431 = vmatprep.subr.mxu0 0.0
        %1432 = vmatpush2.msra.mxu0 0.0
        %1433 = vmatprep.subr.mxu0 0.0
        %1434 = vmatpush2.msra.mxu0 0.0
        %1435 = vmatprep.subr.mxu0 0.0
        %1436 = vmatpush2.msra.mxu0 0.0
        %1437 = vmatprep.subr.mxu0 0.0
        %1438 = vmatpush2.msra.mxu0 0.0
        %1439 = vmatprep.subr.mxu0 0.0
        %1440 = vmatpush2.msra.mxu0 0.0
        %1441 = vmatprep.subr.mxu0 0.0
        %1442 = vmatpush2.msra.mxu0 0.0
        %1443 = vmatprep.subr.mxu0 0.0
        %1444 = vmatpush2.msra.mxu0 0.0
        %1445 = vmatprep.subr.mxu0 0.0
        %1446 = vmatpush2.msra.mxu0 0.0
        %1447 = vmatprep.subr.mxu0 0.0
        %1448 = vmatpush2.msra.mxu0 0.0
        %1449 = vmatprep.subr.mxu0 0.0
        %1450 = vmatpush2.msra.mxu0 0.0
        %1451 = vmatprep.subr.mxu0 0.0
        %1452 = vmatpush2.msra.mxu0 0.0
        %1453 = vmatprep.mubr.f32.mxu0 0.0
        %1454 = vmatmul.mubr.f32.gmra.mxu0 %v1309
        %v1455 = vpop.f32.mrf.mxu0
        %v1456 = vadd.f32 0.0, %v1455
        %v1457 = vpop.f32.mrf.mxu0
        %1458 = vmatprep.mubr.f32.mxu0 0.0
        %1459 = vmatmul.mubr.f32.gmra.mxu0 %v1310
        %v1460 = vpop.f32.mrf.mxu0
        %v1461 = vadd.f32 0.0, %v1460
        %v1462 = vpop.f32.mrf.mxu0
        %1463 = vmatprep.mubr.f32.mxu0 0.0
        %1464 = vmatmul.mubr.f32.gmra.mxu0 %v1311
        %v1465 = vpop.f32.mrf.mxu0
        %v1466 = vadd.f32 0.0, %v1465
        %v1467 = vpop.f32.mrf.mxu0
        %1468 = vmatprep.mubr.f32.mxu0 0.0
        %1469 = vmatmul.mubr.f32.gmra.mxu0 %v1312
        %v1470 = vpop.f32.mrf.mxu0
        %v1471 = vadd.f32 0.0, %v1470
        %v1472 = vpop.f32.mrf.mxu0
        %1473 = vmatprep.mubr.f32.mxu0 0.0
        %1474 = vmatmul.mubr.f32.gmra.mxu0 %v1313
        %v1475 = vpop.f32.mrf.mxu0
        %v1476 = vadd.f32 0.0, %v1475
        %v1477 = vpop.f32.mrf.mxu0
        %1478 = vmatprep.mubr.f32.mxu0 0.0
        %1479 = vmatmul.mubr.f32.gmra.mxu0 %v1314
        %v1480 = vpop.f32.mrf.mxu0
        %v1481 = vadd.f32 0.0, %v1480
        %v1482 = vpop.f32.mrf.mxu0
        %1483 = vmatprep.mubr.f32.mxu0 0.0
        %1484 = vmatmul.mubr.f32.gmra.mxu0 %v1315
        %v1485 = vpop.f32.mrf.mxu0
        %v1486 = vadd.f32 0.0, %v1485
        %v1487 = vpop.f32.mrf.mxu0
        %1488 = vmatprep.mubr.f32.mxu0 0.0
        %1489 = vmatmul.mubr.f32.gmra.mxu0 %v1316
        %v1490 = vpop.f32.mrf.mxu0
        %v1491 = vadd.f32 0.0, %v1490
        %v1492 = vpop.f32.mrf.mxu0
        %1493 = vmatprep.mubr.f32.mxu0 0.0
        %1494 = vmatmul.mubr.f32.gmra.mxu0 %v1317
        %v1495 = vpop.f32.mrf.mxu0
        %v1496 = vadd.f32 0.0, %v1495
        %v1497 = vpop.f32.mrf.mxu0
        %1498 = vmatprep.mubr.f32.mxu0 0.0
        %1499 = vmatmul.mubr.f32.gmra.mxu0 %v1318
        %v1500 = vpop.f32.mrf.mxu0
        %v1501 = vadd.f32 0.0, %v1500
        %v1502 = vpop.f32.mrf.mxu0
        %1503 = vmatprep.mubr.f32.mxu0 0.0
        %1504 = vmatmul.mubr.f32.gmra.mxu0 %v1319
        %v1505 = vpop.f32.mrf.mxu0
        %v1506 = vadd.f32 0.0, %v1505
        %v1507 = vpop.f32.mrf.mxu0
        %1508 = vmatprep.mubr.f32.mxu0 0.0
        %1509 = vmatmul.mubr.f32.gmra.mxu0 %v1320
        %v1510 = vpop.f32.mrf.mxu0
        %v1511 = vadd.f32 0.0, %v1510
        %v1512 = vpop.f32.mrf.mxu0
        %1513 = vmatprep.mubr.f32.mxu0 0.0
        %1514 = vmatmul.mubr.f32.gmra.mxu0 %v1321
        %v1515 = vpop.f32.mrf.mxu0
        %v1516 = vadd.f32 0.0, %v1515
        %v1517 = vpop.f32.mrf.mxu0
        %1518 = vmatprep.mubr.f32.mxu0 0.0
        %1519 = vmatmul.mubr.f32.gmra.mxu0 %v1322
        %v1520 = vpop.f32.mrf.mxu0
        %v1521 = vadd.f32 0.0, %v1520
        %v1522 = vpop.f32.mrf.mxu0
        %1523 = vmatprep.mubr.f32.mxu0 0.0
        %1524 = vmatmul.mubr.f32.gmra.mxu0 %v1323
        %v1525 = vpop.f32.mrf.mxu0
        %v1526 = vadd.f32 0.0, %v1525
        %v1527 = vpop.f32.mrf.mxu0
        %1528 = vmatprep.mubr.f32.mxu0 0.0
        %1529 = vmatmul.mubr.f32.gmra.mxu0 %v1324
        %v1530 = vpop.f32.mrf.mxu0
        %v1531 = vadd.f32 0.0, %v1530
        %v1532 = vpop.f32.mrf.mxu0
        %1533 = vdwg.mxu0
        %v1534 = vlaneseq
        %v1535 = vshrl.u32 %v1534, 7
        %v1536 = vsub.s32 2, %v1535
        %v1537 = vrot.slane %v998, %v1536
        %1539 = vrot.lane.b32.xlu0 %v1537, 256
        %v1540 = vpop.permute.xlu0 %1539
        %s1542 = sor.u32 256, 8
        %1543 = vrot.lane.b32.xlu0 %v1537, %s1542
        %v1544 = vpop.permute.xlu0 %1543
        %s1546 = sor.u32 256, 16
        %1547 = vrot.lane.b32.xlu0 %v1537, %s1546
        %v1548 = vpop.permute.xlu0 %1547
        %s1550 = sor.u32 256, 24
        %1551 = vrot.lane.b32.xlu0 %v1537, %s1550
        %v1552 = vpop.permute.xlu0 %1551
        %s1554 = sor.u32 256, 32
        %1555 = vrot.lane.b32.xlu0 %v1537, %s1554
        %v1556 = vpop.permute.xlu0 %1555
        %s1558 = sor.u32 256, 40
        %1559 = vrot.lane.b32.xlu0 %v1537, %s1558
        %v1560 = vpop.permute.xlu0 %1559
        %s1562 = sor.u32 256, 48
        %1563 = vrot.lane.b32.xlu0 %v1537, %s1562
        %v1564 = vpop.permute.xlu0 %1563
        %s1566 = sor.u32 256, 56
        %1567 = vrot.lane.b32.xlu0 %v1537, %s1566
        %v1568 = vpop.permute.xlu0 %1567
        %s1570 = sor.u32 256, 64
        %1571 = vrot.lane.b32.xlu0 %v1537, %s1570
        %v1572 = vpop.permute.xlu0 %1571
        %s1574 = sor.u32 256, 72
        %1575 = vrot.lane.b32.xlu0 %v1537, %s1574
        %v1576 = vpop.permute.xlu0 %1575
        %s1578 = sor.u32 256, 80
        %1579 = vrot.lane.b32.xlu0 %v1537, %s1578
        %v1580 = vpop.permute.xlu0 %1579
        %s1582 = sor.u32 256, 88
        %1583 = vrot.lane.b32.xlu0 %v1537, %s1582
        %v1584 = vpop.permute.xlu0 %1583
        %s1586 = sor.u32 256, 96
        %1587 = vrot.lane.b32.xlu0 %v1537, %s1586
        %v1588 = vpop.permute.xlu0 %1587
        %s1590 = sor.u32 256, 104
        %1591 = vrot.lane.b32.xlu0 %v1537, %s1590
        %v1592 = vpop.permute.xlu0 %1591
        %s1594 = sor.u32 256, 112
        %1595 = vrot.lane.b32.xlu0 %v1537, %s1594
        %v1596 = vpop.permute.xlu0 %1595
        %s1598 = sor.u32 256, 120
        %1599 = vrot.lane.b32.xlu0 %v1537, %s1598
        %v1600 = vpop.permute.xlu0 %1599
        %v1601 = vmul.f32 %v1540, %v826
        %v1602 = vmul.f32 %v1544, %v827
        %v1603 = vmul.f32 %v1548, %v828
        %v1604 = vmul.f32 %v1552, %v829
        %v1605 = vmul.f32 %v1556, %v830
        %v1606 = vmul.f32 %v1560, %v831
        %v1607 = vmul.f32 %v1564, %v832
        %v1608 = vmul.f32 %v1568, %v833
        %v1609 = vmul.f32 %v1572, %v834
        %v1610 = vmul.f32 %v1576, %v835
        %v1611 = vmul.f32 %v1580, %v836
        %v1612 = vmul.f32 %v1584, %v837
        %v1613 = vmul.f32 %v1588, %v838
        %v1614 = vmul.f32 %v1592, %v839
        %v1615 = vmul.f32 %v1596, %v840
        %v1616 = vmul.f32 %v1600, %v841
        %1617 = vrot.lane.b32.xlu0 %v633, 96
        %v1618 = vpop.permute.xlu0 %1617
        %1619 = vrot.lane.b32.xlu0 %v638, 96
        %v1620 = vpop.permute.xlu0 %1619
        %1621 = vrot.lane.b32.xlu0 %v643, 96
        %v1622 = vpop.permute.xlu0 %1621
        %1623 = vrot.lane.b32.xlu0 %v648, 96
        %v1624 = vpop.permute.xlu0 %1623
        %1625 = vrot.lane.b32.xlu0 %v653, 96
        %v1626 = vpop.permute.xlu0 %1625
        %1627 = vrot.lane.b32.xlu0 %v658, 96
        %v1628 = vpop.permute.xlu0 %1627
        %1629 = vrot.lane.b32.xlu0 %v663, 96
        %v1630 = vpop.permute.xlu0 %1629
        %1631 = vrot.lane.b32.xlu0 %v668, 96
        %v1632 = vpop.permute.xlu0 %1631
        %1633 = vrot.lane.b32.xlu0 %v673, 96
        %v1634 = vpop.permute.xlu0 %1633
        %1635 = vrot.lane.b32.xlu0 %v678, 96
        %v1636 = vpop.permute.xlu0 %1635
        %1637 = vrot.lane.b32.xlu0 %v683, 96
        %v1638 = vpop.permute.xlu0 %1637
        %1639 = vrot.lane.b32.xlu0 %v688, 96
        %v1640 = vpop.permute.xlu0 %1639
        %1641 = vrot.lane.b32.xlu0 %v693, 96
        %v1642 = vpop.permute.xlu0 %1641
        %1643 = vrot.lane.b32.xlu0 %v698, 96
        %v1644 = vpop.permute.xlu0 %1643
        %1645 = vrot.lane.b32.xlu0 %v703, 96
        %v1646 = vpop.permute.xlu0 %1645
        %1647 = vrot.lane.b32.xlu0 %v708, 96
        %v1648 = vpop.permute.xlu0 %1647
        %1665 = vmatprep.subr.mxu0 0.0
        %1666 = vmatpush1.msra.mxu0 %v1648
        %1667 = vmatprep.subr.mxu0 0.0
        %1668 = vmatpush1.msra.mxu0 %v1646
        %1669 = vmatprep.subr.mxu0 0.0
        %1670 = vmatpush1.msra.mxu0 %v1644
        %1671 = vmatprep.subr.mxu0 0.0
        %1672 = vmatpush1.msra.mxu0 %v1642
        %1673 = vmatprep.subr.mxu0 0.0
        %1674 = vmatpush1.msra.mxu0 %v1640
        %1675 = vmatprep.subr.mxu0 0.0
        %1676 = vmatpush1.msra.mxu0 %v1638
        %1677 = vmatprep.subr.mxu0 0.0
        %1678 = vmatpush1.msra.mxu0 %v1636
        %1679 = vmatprep.subr.mxu0 0.0
        %1680 = vmatpush1.msra.mxu0 %v1634
        %1681 = vmatprep.subr.mxu0 0.0
        %1682 = vmatpush1.msra.mxu0 %v1632
        %1683 = vmatprep.subr.mxu0 0.0
        %1684 = vmatpush1.msra.mxu0 %v1630
        %1685 = vmatprep.subr.mxu0 0.0
        %1686 = vmatpush1.msra.mxu0 %v1628
        %1687 = vmatprep.subr.mxu0 0.0
        %1688 = vmatpush1.msra.mxu0 %v1626
        %1689 = vmatprep.subr.mxu0 0.0
        %1690 = vmatpush1.msra.mxu0 %v1624
        %1691 = vmatprep.subr.mxu0 0.0
        %1692 = vmatpush1.msra.mxu0 %v1622
        %1693 = vmatprep.subr.mxu0 0.0
        %1694 = vmatpush1.msra.mxu0 %v1620
        %1695 = vmatprep.subr.mxu0 0.0
        %1696 = vmatpush1.msra.mxu0 %v1618
        %1697 = vmatprep.subr.mxu0 0.0
        %1698 = vmatpush2.msra.mxu0 0.0
        %1699 = vmatprep.subr.mxu0 0.0
        %1700 = vmatpush2.msra.mxu0 0.0
        %1701 = vmatprep.subr.mxu0 0.0
        %1702 = vmatpush2.msra.mxu0 0.0
        %1703 = vmatprep.subr.mxu0 0.0
        %1704 = vmatpush2.msra.mxu0 0.0
        %1705 = vmatprep.subr.mxu0 0.0
        %1706 = vmatpush2.msra.mxu0 0.0
        %1707 = vmatprep.subr.mxu0 0.0
        %1708 = vmatpush2.msra.mxu0 0.0
        %1709 = vmatprep.subr.mxu0 0.0
        %1710 = vmatpush2.msra.mxu0 0.0
        %1711 = vmatprep.subr.mxu0 0.0
        %1712 = vmatpush2.msra.mxu0 0.0
        %1713 = vmatprep.subr.mxu0 0.0
        %1714 = vmatpush2.msra.mxu0 0.0
        %1715 = vmatprep.subr.mxu0 0.0
        %1716 = vmatpush2.msra.mxu0 0.0
        %1717 = vmatprep.subr.mxu0 0.0
        %1718 = vmatpush2.msra.mxu0 0.0
        %1719 = vmatprep.subr.mxu0 0.0
        %1720 = vmatpush2.msra.mxu0 0.0
        %1721 = vmatprep.subr.mxu0 0.0
        %1722 = vmatpush2.msra.mxu0 0.0
        %1723 = vmatprep.subr.mxu0 0.0
        %1724 = vmatpush2.msra.mxu0 0.0
        %1725 = vmatprep.subr.mxu0 0.0
        %1726 = vmatpush2.msra.mxu0 0.0
        %1727 = vmatprep.subr.mxu0 0.0
        %1728 = vmatpush2.msra.mxu0 0.0
        %1729 = vmatprep.mubr.f32.mxu0 0.0
        %1730 = vmatmul.mubr.f32.gmra.mxu0 %v1601
        %v1731 = vpop.f32.mrf.mxu0
        %v1732 = vadd.f32 0.0, %v1731
        %v1733 = vpop.f32.mrf.mxu0
        %1734 = vmatprep.mubr.f32.mxu0 0.0
        %1735 = vmatmul.mubr.f32.gmra.mxu0 %v1602
        %v1736 = vpop.f32.mrf.mxu0
        %v1737 = vadd.f32 0.0, %v1736
        %v1738 = vpop.f32.mrf.mxu0
        %1739 = vmatprep.mubr.f32.mxu0 0.0
        %1740 = vmatmul.mubr.f32.gmra.mxu0 %v1603
        %v1741 = vpop.f32.mrf.mxu0
        %v1742 = vadd.f32 0.0, %v1741
        %v1743 = vpop.f32.mrf.mxu0
        %1744 = vmatprep.mubr.f32.mxu0 0.0
        %1745 = vmatmul.mubr.f32.gmra.mxu0 %v1604
        %v1746 = vpop.f32.mrf.mxu0
        %v1747 = vadd.f32 0.0, %v1746
        %v1748 = vpop.f32.mrf.mxu0
        %1749 = vmatprep.mubr.f32.mxu0 0.0
        %1750 = vmatmul.mubr.f32.gmra.mxu0 %v1605
        %v1751 = vpop.f32.mrf.mxu0
        %v1752 = vadd.f32 0.0, %v1751
        %v1753 = vpop.f32.mrf.mxu0
        %1754 = vmatprep.mubr.f32.mxu0 0.0
        %1755 = vmatmul.mubr.f32.gmra.mxu0 %v1606
        %v1756 = vpop.f32.mrf.mxu0
        %v1757 = vadd.f32 0.0, %v1756
        %v1758 = vpop.f32.mrf.mxu0
        %1759 = vmatprep.mubr.f32.mxu0 0.0
        %1760 = vmatmul.mubr.f32.gmra.mxu0 %v1607
        %v1761 = vpop.f32.mrf.mxu0
        %v1762 = vadd.f32 0.0, %v1761
        %v1763 = vpop.f32.mrf.mxu0
        %1764 = vmatprep.mubr.f32.mxu0 0.0
        %1765 = vmatmul.mubr.f32.gmra.mxu0 %v1608
        %v1766 = vpop.f32.mrf.mxu0
        %v1767 = vadd.f32 0.0, %v1766
        %v1768 = vpop.f32.mrf.mxu0
        %1769 = vmatprep.mubr.f32.mxu0 0.0
        %1770 = vmatmul.mubr.f32.gmra.mxu0 %v1609
        %v1771 = vpop.f32.mrf.mxu0
        %v1772 = vadd.f32 0.0, %v1771
        %v1773 = vpop.f32.mrf.mxu0
        %1774 = vmatprep.mubr.f32.mxu0 0.0
        %1775 = vmatmul.mubr.f32.gmra.mxu0 %v1610
        %v1776 = vpop.f32.mrf.mxu0
        %v1777 = vadd.f32 0.0, %v1776
        %v1778 = vpop.f32.mrf.mxu0
        %1779 = vmatprep.mubr.f32.mxu0 0.0
        %1780 = vmatmul.mubr.f32.gmra.mxu0 %v1611
        %v1781 = vpop.f32.mrf.mxu0
        %v1782 = vadd.f32 0.0, %v1781
        %v1783 = vpop.f32.mrf.mxu0
        %1784 = vmatprep.mubr.f32.mxu0 0.0
        %1785 = vmatmul.mubr.f32.gmra.mxu0 %v1612
        %v1786 = vpop.f32.mrf.mxu0
        %v1787 = vadd.f32 0.0, %v1786
        %v1788 = vpop.f32.mrf.mxu0
        %1789 = vmatprep.mubr.f32.mxu0 0.0
        %1790 = vmatmul.mubr.f32.gmra.mxu0 %v1613
        %v1791 = vpop.f32.mrf.mxu0
        %v1792 = vadd.f32 0.0, %v1791
        %v1793 = vpop.f32.mrf.mxu0
        %1794 = vmatprep.mubr.f32.mxu0 0.0
        %1795 = vmatmul.mubr.f32.gmra.mxu0 %v1614
        %v1796 = vpop.f32.mrf.mxu0
        %v1797 = vadd.f32 0.0, %v1796
        %v1798 = vpop.f32.mrf.mxu0
        %1799 = vmatprep.mubr.f32.mxu0 0.0
        %1800 = vmatmul.mubr.f32.gmra.mxu0 %v1615
        %v1801 = vpop.f32.mrf.mxu0
        %v1802 = vadd.f32 0.0, %v1801
        %v1803 = vpop.f32.mrf.mxu0
        %1804 = vmatprep.mubr.f32.mxu0 0.0
        %1805 = vmatmul.mubr.f32.gmra.mxu0 %v1616
        %v1806 = vpop.f32.mrf.mxu0
        %v1807 = vadd.f32 0.0, %v1806
        %v1808 = vpop.f32.mrf.mxu0
        %1809 = vdwg.mxu0
        %v1810 = vlaneseq
        %v1811 = vshrl.u32 %v1810, 7
        %v1812 = vsub.s32 3, %v1811
        %v1813 = vrot.slane %v998, %v1812
        %1815 = vrot.lane.b32.xlu0 %v1813, 256
        %v1816 = vpop.permute.xlu0 %1815
        %s1818 = sor.u32 256, 8
        %1819 = vrot.lane.b32.xlu0 %v1813, %s1818
        %v1820 = vpop.permute.xlu0 %1819
        %s1822 = sor.u32 256, 16
        %1823 = vrot.lane.b32.xlu0 %v1813, %s1822
        %v1824 = vpop.permute.xlu0 %1823
        %s1826 = sor.u32 256, 24
        %1827 = vrot.lane.b32.xlu0 %v1813, %s1826
        %v1828 = vpop.permute.xlu0 %1827
        %s1830 = sor.u32 256, 32
        %1831 = vrot.lane.b32.xlu0 %v1813, %s1830
        %v1832 = vpop.permute.xlu0 %1831
        %s1834 = sor.u32 256, 40
        %1835 = vrot.lane.b32.xlu0 %v1813, %s1834
        %v1836 = vpop.permute.xlu0 %1835
        %s1838 = sor.u32 256, 48
        %1839 = vrot.lane.b32.xlu0 %v1813, %s1838
        %v1840 = vpop.permute.xlu0 %1839
        %s1842 = sor.u32 256, 56
        %1843 = vrot.lane.b32.xlu0 %v1813, %s1842
        %v1844 = vpop.permute.xlu0 %1843
        %s1846 = sor.u32 256, 64
        %1847 = vrot.lane.b32.xlu0 %v1813, %s1846
        %v1848 = vpop.permute.xlu0 %1847
        %s1850 = sor.u32 256, 72
        %1851 = vrot.lane.b32.xlu0 %v1813, %s1850
        %v1852 = vpop.permute.xlu0 %1851
        %s1854 = sor.u32 256, 80
        %1855 = vrot.lane.b32.xlu0 %v1813, %s1854
        %v1856 = vpop.permute.xlu0 %1855
        %s1858 = sor.u32 256, 88
        %1859 = vrot.lane.b32.xlu0 %v1813, %s1858
        %v1860 = vpop.permute.xlu0 %1859
        %s1862 = sor.u32 256, 96
        %1863 = vrot.lane.b32.xlu0 %v1813, %s1862
        %v1864 = vpop.permute.xlu0 %1863
        %s1866 = sor.u32 256, 104
        %1867 = vrot.lane.b32.xlu0 %v1813, %s1866
        %v1868 = vpop.permute.xlu0 %1867
        %s1870 = sor.u32 256, 112
        %1871 = vrot.lane.b32.xlu0 %v1813, %s1870
        %v1872 = vpop.permute.xlu0 %1871
        %s1874 = sor.u32 256, 120
        %1875 = vrot.lane.b32.xlu0 %v1813, %s1874
        %v1876 = vpop.permute.xlu0 %1875
        %v1877 = vmul.f32 %v1816, %v826
        %v1878 = vmul.f32 %v1820, %v827
        %v1879 = vmul.f32 %v1824, %v828
        %v1880 = vmul.f32 %v1828, %v829
        %v1881 = vmul.f32 %v1832, %v830
        %v1882 = vmul.f32 %v1836, %v831
        %v1883 = vmul.f32 %v1840, %v832
        %v1884 = vmul.f32 %v1844, %v833
        %v1885 = vmul.f32 %v1848, %v834
        %v1886 = vmul.f32 %v1852, %v835
        %v1887 = vmul.f32 %v1856, %v836
        %v1888 = vmul.f32 %v1860, %v837
        %v1889 = vmul.f32 %v1864, %v838
        %v1890 = vmul.f32 %v1868, %v839
        %v1891 = vmul.f32 %v1872, %v840
        %v1892 = vmul.f32 %v1876, %v841
        %1893 = vrot.lane.b32.xlu0 %v633, 80
        %v1894 = vpop.permute.xlu0 %1893
        %1895 = vrot.lane.b32.xlu0 %v638, 80
        %v1896 = vpop.permute.xlu0 %1895
        %1897 = vrot.lane.b32.xlu0 %v643, 80
        %v1898 = vpop.permute.xlu0 %1897
        %1899 = vrot.lane.b32.xlu0 %v648, 80
        %v1900 = vpop.permute.xlu0 %1899
        %1901 = vrot.lane.b32.xlu0 %v653, 80
        %v1902 = vpop.permute.xlu0 %1901
        %1903 = vrot.lane.b32.xlu0 %v658, 80
        %v1904 = vpop.permute.xlu0 %1903
        %1905 = vrot.lane.b32.xlu0 %v663, 80
        %v1906 = vpop.permute.xlu0 %1905
        %1907 = vrot.lane.b32.xlu0 %v668, 80
        %v1908 = vpop.permute.xlu0 %1907
        %1909 = vrot.lane.b32.xlu0 %v673, 80
        %v1910 = vpop.permute.xlu0 %1909
        %1911 = vrot.lane.b32.xlu0 %v678, 80
        %v1912 = vpop.permute.xlu0 %1911
        %1913 = vrot.lane.b32.xlu0 %v683, 80
        %v1914 = vpop.permute.xlu0 %1913
        %1915 = vrot.lane.b32.xlu0 %v688, 80
        %v1916 = vpop.permute.xlu0 %1915
        %1917 = vrot.lane.b32.xlu0 %v693, 80
        %v1918 = vpop.permute.xlu0 %1917
        %1919 = vrot.lane.b32.xlu0 %v698, 80
        %v1920 = vpop.permute.xlu0 %1919
        %1921 = vrot.lane.b32.xlu0 %v703, 80
        %v1922 = vpop.permute.xlu0 %1921
        %1923 = vrot.lane.b32.xlu0 %v708, 80
        %v1924 = vpop.permute.xlu0 %1923
        %1941 = vmatprep.subr.mxu0 0.0
        %1942 = vmatpush1.msra.mxu0 %v1924
        %1943 = vmatprep.subr.mxu0 0.0
        %1944 = vmatpush1.msra.mxu0 %v1922
        %1945 = vmatprep.subr.mxu0 0.0
        %1946 = vmatpush1.msra.mxu0 %v1920
        %1947 = vmatprep.subr.mxu0 0.0
        %1948 = vmatpush1.msra.mxu0 %v1918
        %1949 = vmatprep.subr.mxu0 0.0
        %1950 = vmatpush1.msra.mxu0 %v1916
        %1951 = vmatprep.subr.mxu0 0.0
        %1952 = vmatpush1.msra.mxu0 %v1914
        %1953 = vmatprep.subr.mxu0 0.0
        %1954 = vmatpush1.msra.mxu0 %v1912
        %1955 = vmatprep.subr.mxu0 0.0
        %1956 = vmatpush1.msra.mxu0 %v1910
        %1957 = vmatprep.subr.mxu0 0.0
        %1958 = vmatpush1.msra.mxu0 %v1908
        %1959 = vmatprep.subr.mxu0 0.0
        %1960 = vmatpush1.msra.mxu0 %v1906
        %1961 = vmatprep.subr.mxu0 0.0
        %1962 = vmatpush1.msra.mxu0 %v1904
        %1963 = vmatprep.subr.mxu0 0.0
        %1964 = vmatpush1.msra.mxu0 %v1902
        %1965 = vmatprep.subr.mxu0 0.0
        %1966 = vmatpush1.msra.mxu0 %v1900
        %1967 = vmatprep.subr.mxu0 0.0
        %1968 = vmatpush1.msra.mxu0 %v1898
        %1969 = vmatprep.subr.mxu0 0.0
        %1970 = vmatpush1.msra.mxu0 %v1896
        %1971 = vmatprep.subr.mxu0 0.0
        %1972 = vmatpush1.msra.mxu0 %v1894
        %1973 = vmatprep.subr.mxu0 0.0
        %1974 = vmatpush2.msra.mxu0 0.0
        %1975 = vmatprep.subr.mxu0 0.0
        %1976 = vmatpush2.msra.mxu0 0.0
        %1977 = vmatprep.subr.mxu0 0.0
        %1978 = vmatpush2.msra.mxu0 0.0
        %1979 = vmatprep.subr.mxu0 0.0
        %1980 = vmatpush2.msra.mxu0 0.0
        %1981 = vmatprep.subr.mxu0 0.0
        %1982 = vmatpush2.msra.mxu0 0.0
        %1983 = vmatprep.subr.mxu0 0.0
        %1984 = vmatpush2.msra.mxu0 0.0
        %1985 = vmatprep.subr.mxu0 0.0
        %1986 = vmatpush2.msra.mxu0 0.0
        %1987 = vmatprep.subr.mxu0 0.0
        %1988 = vmatpush2.msra.mxu0 0.0
        %1989 = vmatprep.subr.mxu0 0.0
        %1990 = vmatpush2.msra.mxu0 0.0
        %1991 = vmatprep.subr.mxu0 0.0
        %1992 = vmatpush2.msra.mxu0 0.0
        %1993 = vmatprep.subr.mxu0 0.0
        %1994 = vmatpush2.msra.mxu0 0.0
        %1995 = vmatprep.subr.mxu0 0.0
        %1996 = vmatpush2.msra.mxu0 0.0
        %1997 = vmatprep.subr.mxu0 0.0
        %1998 = vmatpush2.msra.mxu0 0.0
        %1999 = vmatprep.subr.mxu0 0.0
        %2000 = vmatpush2.msra.mxu0 0.0
        %2001 = vmatprep.subr.mxu0 0.0
        %2002 = vmatpush2.msra.mxu0 0.0
        %2003 = vmatprep.subr.mxu0 0.0
        %2004 = vmatpush2.msra.mxu0 0.0
        %2005 = vmatprep.mubr.f32.mxu0 0.0
        %2006 = vmatmul.mubr.f32.gmra.mxu0 %v1877
        %v2007 = vpop.f32.mrf.mxu0
        %v2008 = vadd.f32 0.0, %v2007
        %v2009 = vpop.f32.mrf.mxu0
        %2010 = vmatprep.mubr.f32.mxu0 0.0
        %2011 = vmatmul.mubr.f32.gmra.mxu0 %v1878
        %v2012 = vpop.f32.mrf.mxu0
        %v2013 = vadd.f32 0.0, %v2012
        %v2014 = vpop.f32.mrf.mxu0
        %2015 = vmatprep.mubr.f32.mxu0 0.0
        %2016 = vmatmul.mubr.f32.gmra.mxu0 %v1879
        %v2017 = vpop.f32.mrf.mxu0
        %v2018 = vadd.f32 0.0, %v2017
        %v2019 = vpop.f32.mrf.mxu0
        %2020 = vmatprep.mubr.f32.mxu0 0.0
        %2021 = vmatmul.mubr.f32.gmra.mxu0 %v1880
        %v2022 = vpop.f32.mrf.mxu0
        %v2023 = vadd.f32 0.0, %v2022
        %v2024 = vpop.f32.mrf.mxu0
        %2025 = vmatprep.mubr.f32.mxu0 0.0
        %2026 = vmatmul.mubr.f32.gmra.mxu0 %v1881
        %v2027 = vpop.f32.mrf.mxu0
        %v2028 = vadd.f32 0.0, %v2027
        %v2029 = vpop.f32.mrf.mxu0
        %2030 = vmatprep.mubr.f32.mxu0 0.0
        %2031 = vmatmul.mubr.f32.gmra.mxu0 %v1882
        %v2032 = vpop.f32.mrf.mxu0
        %v2033 = vadd.f32 0.0, %v2032
        %v2034 = vpop.f32.mrf.mxu0
        %2035 = vmatprep.mubr.f32.mxu0 0.0
        %2036 = vmatmul.mubr.f32.gmra.mxu0 %v1883
        %v2037 = vpop.f32.mrf.mxu0
        %v2038 = vadd.f32 0.0, %v2037
        %v2039 = vpop.f32.mrf.mxu0
        %2040 = vmatprep.mubr.f32.mxu0 0.0
        %2041 = vmatmul.mubr.f32.gmra.mxu0 %v1884
        %v2042 = vpop.f32.mrf.mxu0
        %v2043 = vadd.f32 0.0, %v2042
        %v2044 = vpop.f32.mrf.mxu0
        %2045 = vmatprep.mubr.f32.mxu0 0.0
        %2046 = vmatmul.mubr.f32.gmra.mxu0 %v1885
        %v2047 = vpop.f32.mrf.mxu0
        %v2048 = vadd.f32 0.0, %v2047
        %v2049 = vpop.f32.mrf.mxu0
        %2050 = vmatprep.mubr.f32.mxu0 0.0
        %2051 = vmatmul.mubr.f32.gmra.mxu0 %v1886
        %v2052 = vpop.f32.mrf.mxu0
        %v2053 = vadd.f32 0.0, %v2052
        %v2054 = vpop.f32.mrf.mxu0
        %2055 = vmatprep.mubr.f32.mxu0 0.0
        %2056 = vmatmul.mubr.f32.gmra.mxu0 %v1887
        %v2057 = vpop.f32.mrf.mxu0
        %v2058 = vadd.f32 0.0, %v2057
        %v2059 = vpop.f32.mrf.mxu0
        %2060 = vmatprep.mubr.f32.mxu0 0.0
        %2061 = vmatmul.mubr.f32.gmra.mxu0 %v1888
        %v2062 = vpop.f32.mrf.mxu0
        %v2063 = vadd.f32 0.0, %v2062
        %v2064 = vpop.f32.mrf.mxu0
        %2065 = vmatprep.mubr.f32.mxu0 0.0
        %2066 = vmatmul.mubr.f32.gmra.mxu0 %v1889
        %v2067 = vpop.f32.mrf.mxu0
        %v2068 = vadd.f32 0.0, %v2067
        %v2069 = vpop.f32.mrf.mxu0
        %2070 = vmatprep.mubr.f32.mxu0 0.0
        %2071 = vmatmul.mubr.f32.gmra.mxu0 %v1890
        %v2072 = vpop.f32.mrf.mxu0
        %v2073 = vadd.f32 0.0, %v2072
        %v2074 = vpop.f32.mrf.mxu0
        %2075 = vmatprep.mubr.f32.mxu0 0.0
        %2076 = vmatmul.mubr.f32.gmra.mxu0 %v1891
        %v2077 = vpop.f32.mrf.mxu0
        %v2078 = vadd.f32 0.0, %v2077
        %v2079 = vpop.f32.mrf.mxu0
        %2080 = vmatprep.mubr.f32.mxu0 0.0
        %2081 = vmatmul.mubr.f32.gmra.mxu0 %v1892
        %v2082 = vpop.f32.mrf.mxu0
        %v2083 = vadd.f32 0.0, %v2082
        %v2084 = vpop.f32.mrf.mxu0
        %2085 = vdwg.mxu0
        %v2086 = vlaneseq
        %v2087 = vshrl.u32 %v2086, 7
        %v2088 = vsub.s32 4, %v2087
        %v2089 = vrot.slane %v998, %v2088
        %2091 = vrot.lane.b32.xlu0 %v2089, 256
        %v2092 = vpop.permute.xlu0 %2091
        %s2094 = sor.u32 256, 8
        %2095 = vrot.lane.b32.xlu0 %v2089, %s2094
        %v2096 = vpop.permute.xlu0 %2095
        %s2098 = sor.u32 256, 16
        %2099 = vrot.lane.b32.xlu0 %v2089, %s2098
        %v2100 = vpop.permute.xlu0 %2099
        %s2102 = sor.u32 256, 24
        %2103 = vrot.lane.b32.xlu0 %v2089, %s2102
        %v2104 = vpop.permute.xlu0 %2103
        %s2106 = sor.u32 256, 32
        %2107 = vrot.lane.b32.xlu0 %v2089, %s2106
        %v2108 = vpop.permute.xlu0 %2107
        %s2110 = sor.u32 256, 40
        %2111 = vrot.lane.b32.xlu0 %v2089, %s2110
        %v2112 = vpop.permute.xlu0 %2111
        %s2114 = sor.u32 256, 48
        %2115 = vrot.lane.b32.xlu0 %v2089, %s2114
        %v2116 = vpop.permute.xlu0 %2115
        %s2118 = sor.u32 256, 56
        %2119 = vrot.lane.b32.xlu0 %v2089, %s2118
        %v2120 = vpop.permute.xlu0 %2119
        %s2122 = sor.u32 256, 64
        %2123 = vrot.lane.b32.xlu0 %v2089, %s2122
        %v2124 = vpop.permute.xlu0 %2123
        %s2126 = sor.u32 256, 72
        %2127 = vrot.lane.b32.xlu0 %v2089, %s2126
        %v2128 = vpop.permute.xlu0 %2127
        %s2130 = sor.u32 256, 80
        %2131 = vrot.lane.b32.xlu0 %v2089, %s2130
        %v2132 = vpop.permute.xlu0 %2131
        %s2134 = sor.u32 256, 88
        %2135 = vrot.lane.b32.xlu0 %v2089, %s2134
        %v2136 = vpop.permute.xlu0 %2135
        %s2138 = sor.u32 256, 96
        %2139 = vrot.lane.b32.xlu0 %v2089, %s2138
        %v2140 = vpop.permute.xlu0 %2139
        %s2142 = sor.u32 256, 104
        %2143 = vrot.lane.b32.xlu0 %v2089, %s2142
        %v2144 = vpop.permute.xlu0 %2143
        %s2146 = sor.u32 256, 112
        %2147 = vrot.lane.b32.xlu0 %v2089, %s2146
        %v2148 = vpop.permute.xlu0 %2147
        %s2150 = sor.u32 256, 120
        %2151 = vrot.lane.b32.xlu0 %v2089, %s2150
        %v2152 = vpop.permute.xlu0 %2151
        %v2153 = vmul.f32 %v2092, %v826
        %v2154 = vmul.f32 %v2096, %v827
        %v2155 = vmul.f32 %v2100, %v828
        %v2156 = vmul.f32 %v2104, %v829
        %v2157 = vmul.f32 %v2108, %v830
        %v2158 = vmul.f32 %v2112, %v831
        %v2159 = vmul.f32 %v2116, %v832
        %v2160 = vmul.f32 %v2120, %v833
        %v2161 = vmul.f32 %v2124, %v834
        %v2162 = vmul.f32 %v2128, %v835
        %v2163 = vmul.f32 %v2132, %v836
        %v2164 = vmul.f32 %v2136, %v837
        %v2165 = vmul.f32 %v2140, %v838
        %v2166 = vmul.f32 %v2144, %v839
        %v2167 = vmul.f32 %v2148, %v840
        %v2168 = vmul.f32 %v2152, %v841
        %2169 = vrot.lane.b32.xlu0 %v633, 64
        %v2170 = vpop.permute.xlu0 %2169
        %2171 = vrot.lane.b32.xlu0 %v638, 64
        %v2172 = vpop.permute.xlu0 %2171
        %2173 = vrot.lane.b32.xlu0 %v643, 64
        %v2174 = vpop.permute.xlu0 %2173
        %2175 = vrot.lane.b32.xlu0 %v648, 64
        %v2176 = vpop.permute.xlu0 %2175
        %2177 = vrot.lane.b32.xlu0 %v653, 64
        %v2178 = vpop.permute.xlu0 %2177
        %2179 = vrot.lane.b32.xlu0 %v658, 64
        %v2180 = vpop.permute.xlu0 %2179
        %2181 = vrot.lane.b32.xlu0 %v663, 64
        %v2182 = vpop.permute.xlu0 %2181
        %2183 = vrot.lane.b32.xlu0 %v668, 64
        %v2184 = vpop.permute.xlu0 %2183
        %2185 = vrot.lane.b32.xlu0 %v673, 64
        %v2186 = vpop.permute.xlu0 %2185
        %2187 = vrot.lane.b32.xlu0 %v678, 64
        %v2188 = vpop.permute.xlu0 %2187
        %2189 = vrot.lane.b32.xlu0 %v683, 64
        %v2190 = vpop.permute.xlu0 %2189
        %2191 = vrot.lane.b32.xlu0 %v688, 64
        %v2192 = vpop.permute.xlu0 %2191
        %2193 = vrot.lane.b32.xlu0 %v693, 64
        %v2194 = vpop.permute.xlu0 %2193
        %2195 = vrot.lane.b32.xlu0 %v698, 64
        %v2196 = vpop.permute.xlu0 %2195
        %2197 = vrot.lane.b32.xlu0 %v703, 64
        %v2198 = vpop.permute.xlu0 %2197
        %2199 = vrot.lane.b32.xlu0 %v708, 64
        %v2200 = vpop.permute.xlu0 %2199
        %2217 = vmatprep.subr.mxu0 0.0
        %2218 = vmatpush1.msra.mxu0 %v2200
        %2219 = vmatprep.subr.mxu0 0.0
        %2220 = vmatpush1.msra.mxu0 %v2198
        %2221 = vmatprep.subr.mxu0 0.0
        %2222 = vmatpush1.msra.mxu0 %v2196
        %2223 = vmatprep.subr.mxu0 0.0
        %2224 = vmatpush1.msra.mxu0 %v2194
        %2225 = vmatprep.subr.mxu0 0.0
        %2226 = vmatpush1.msra.mxu0 %v2192
        %2227 = vmatprep.subr.mxu0 0.0
        %2228 = vmatpush1.msra.mxu0 %v2190
        %2229 = vmatprep.subr.mxu0 0.0
        %2230 = vmatpush1.msra.mxu0 %v2188
        %2231 = vmatprep.subr.mxu0 0.0
        %2232 = vmatpush1.msra.mxu0 %v2186
        %2233 = vmatprep.subr.mxu0 0.0
        %2234 = vmatpush1.msra.mxu0 %v2184
        %2235 = vmatprep.subr.mxu0 0.0
        %2236 = vmatpush1.msra.mxu0 %v2182
        %2237 = vmatprep.subr.mxu0 0.0
        %2238 = vmatpush1.msra.mxu0 %v2180
        %2239 = vmatprep.subr.mxu0 0.0
        %2240 = vmatpush1.msra.mxu0 %v2178
        %2241 = vmatprep.subr.mxu0 0.0
        %2242 = vmatpush1.msra.mxu0 %v2176
        %2243 = vmatprep.subr.mxu0 0.0
        %2244 = vmatpush1.msra.mxu0 %v2174
        %2245 = vmatprep.subr.mxu0 0.0
        %2246 = vmatpush1.msra.mxu0 %v2172
        %2247 = vmatprep.subr.mxu0 0.0
        %2248 = vmatpush1.msra.mxu0 %v2170
        %2249 = vmatprep.subr.mxu0 0.0
        %2250 = vmatpush2.msra.mxu0 0.0
        %2251 = vmatprep.subr.mxu0 0.0
        %2252 = vmatpush2.msra.mxu0 0.0
        %2253 = vmatprep.subr.mxu0 0.0
        %2254 = vmatpush2.msra.mxu0 0.0
        %2255 = vmatprep.subr.mxu0 0.0
        %2256 = vmatpush2.msra.mxu0 0.0
        %2257 = vmatprep.subr.mxu0 0.0
        %2258 = vmatpush2.msra.mxu0 0.0
        %2259 = vmatprep.subr.mxu0 0.0
        %2260 = vmatpush2.msra.mxu0 0.0
        %2261 = vmatprep.subr.mxu0 0.0
        %2262 = vmatpush2.msra.mxu0 0.0
        %2263 = vmatprep.subr.mxu0 0.0
        %2264 = vmatpush2.msra.mxu0 0.0
        %2265 = vmatprep.subr.mxu0 0.0
        %2266 = vmatpush2.msra.mxu0 0.0
        %2267 = vmatprep.subr.mxu0 0.0
        %2268 = vmatpush2.msra.mxu0 0.0
        %2269 = vmatprep.subr.mxu0 0.0
        %2270 = vmatpush2.msra.mxu0 0.0
        %2271 = vmatprep.subr.mxu0 0.0
        %2272 = vmatpush2.msra.mxu0 0.0
        %2273 = vmatprep.subr.mxu0 0.0
        %2274 = vmatpush2.msra.mxu0 0.0
        %2275 = vmatprep.subr.mxu0 0.0
        %2276 = vmatpush2.msra.mxu0 0.0
        %2277 = vmatprep.subr.mxu0 0.0
        %2278 = vmatpush2.msra.mxu0 0.0
        %2279 = vmatprep.subr.mxu0 0.0
        %2280 = vmatpush2.msra.mxu0 0.0
        %2281 = vmatprep.mubr.f32.mxu0 0.0
        %2282 = vmatmul.mubr.f32.gmra.mxu0 %v2153
        %v2283 = vpop.f32.mrf.mxu0
        %v2284 = vadd.f32 0.0, %v2283
        %v2285 = vpop.f32.mrf.mxu0
        %2286 = vmatprep.mubr.f32.mxu0 0.0
        %2287 = vmatmul.mubr.f32.gmra.mxu0 %v2154
        %v2288 = vpop.f32.mrf.mxu0
        %v2289 = vadd.f32 0.0, %v2288
        %v2290 = vpop.f32.mrf.mxu0
        %2291 = vmatprep.mubr.f32.mxu0 0.0
        %2292 = vmatmul.mubr.f32.gmra.mxu0 %v2155
        %v2293 = vpop.f32.mrf.mxu0
        %v2294 = vadd.f32 0.0, %v2293
        %v2295 = vpop.f32.mrf.mxu0
        %2296 = vmatprep.mubr.f32.mxu0 0.0
        %2297 = vmatmul.mubr.f32.gmra.mxu0 %v2156
        %v2298 = vpop.f32.mrf.mxu0
        %v2299 = vadd.f32 0.0, %v2298
        %v2300 = vpop.f32.mrf.mxu0
        %2301 = vmatprep.mubr.f32.mxu0 0.0
        %2302 = vmatmul.mubr.f32.gmra.mxu0 %v2157
        %v2303 = vpop.f32.mrf.mxu0
        %v2304 = vadd.f32 0.0, %v2303
        %v2305 = vpop.f32.mrf.mxu0
        %2306 = vmatprep.mubr.f32.mxu0 0.0
        %2307 = vmatmul.mubr.f32.gmra.mxu0 %v2158
        %v2308 = vpop.f32.mrf.mxu0
        %v2309 = vadd.f32 0.0, %v2308
        %v2310 = vpop.f32.mrf.mxu0
        %2311 = vmatprep.mubr.f32.mxu0 0.0
        %2312 = vmatmul.mubr.f32.gmra.mxu0 %v2159
        %v2313 = vpop.f32.mrf.mxu0
        %v2314 = vadd.f32 0.0, %v2313
        %v2315 = vpop.f32.mrf.mxu0
        %2316 = vmatprep.mubr.f32.mxu0 0.0
        %2317 = vmatmul.mubr.f32.gmra.mxu0 %v2160
        %v2318 = vpop.f32.mrf.mxu0
        %v2319 = vadd.f32 0.0, %v2318
        %v2320 = vpop.f32.mrf.mxu0
        %2321 = vmatprep.mubr.f32.mxu0 0.0
        %2322 = vmatmul.mubr.f32.gmra.mxu0 %v2161
        %v2323 = vpop.f32.mrf.mxu0
        %v2324 = vadd.f32 0.0, %v2323
        %v2325 = vpop.f32.mrf.mxu0
        %2326 = vmatprep.mubr.f32.mxu0 0.0
        %2327 = vmatmul.mubr.f32.gmra.mxu0 %v2162
        %v2328 = vpop.f32.mrf.mxu0
        %v2329 = vadd.f32 0.0, %v2328
        %v2330 = vpop.f32.mrf.mxu0
        %2331 = vmatprep.mubr.f32.mxu0 0.0
        %2332 = vmatmul.mubr.f32.gmra.mxu0 %v2163
        %v2333 = vpop.f32.mrf.mxu0
        %v2334 = vadd.f32 0.0, %v2333
        %v2335 = vpop.f32.mrf.mxu0
        %2336 = vmatprep.mubr.f32.mxu0 0.0
        %2337 = vmatmul.mubr.f32.gmra.mxu0 %v2164
        %v2338 = vpop.f32.mrf.mxu0
        %v2339 = vadd.f32 0.0, %v2338
        %v2340 = vpop.f32.mrf.mxu0
        %2341 = vmatprep.mubr.f32.mxu0 0.0
        %2342 = vmatmul.mubr.f32.gmra.mxu0 %v2165
        %v2343 = vpop.f32.mrf.mxu0
        %v2344 = vadd.f32 0.0, %v2343
        %v2345 = vpop.f32.mrf.mxu0
        %2346 = vmatprep.mubr.f32.mxu0 0.0
        %2347 = vmatmul.mubr.f32.gmra.mxu0 %v2166
        %v2348 = vpop.f32.mrf.mxu0
        %v2349 = vadd.f32 0.0, %v2348
        %v2350 = vpop.f32.mrf.mxu0
        %2351 = vmatprep.mubr.f32.mxu0 0.0
        %2352 = vmatmul.mubr.f32.gmra.mxu0 %v2167
        %v2353 = vpop.f32.mrf.mxu0
        %v2354 = vadd.f32 0.0, %v2353
        %v2355 = vpop.f32.mrf.mxu0
        %2356 = vmatprep.mubr.f32.mxu0 0.0
        %2357 = vmatmul.mubr.f32.gmra.mxu0 %v2168
        %v2358 = vpop.f32.mrf.mxu0
        %v2359 = vadd.f32 0.0, %v2358
        %v2360 = vpop.f32.mrf.mxu0
        %2361 = vdwg.mxu0
        %v2362 = vlaneseq
        %v2363 = vshrl.u32 %v2362, 7
        %v2364 = vsub.s32 5, %v2363
        %v2365 = vrot.slane %v998, %v2364
        %2367 = vrot.lane.b32.xlu0 %v2365, 256
        %v2368 = vpop.permute.xlu0 %2367
        %s2370 = sor.u32 256, 8
        %2371 = vrot.lane.b32.xlu0 %v2365, %s2370
        %v2372 = vpop.permute.xlu0 %2371
        %s2374 = sor.u32 256, 16
        %2375 = vrot.lane.b32.xlu0 %v2365, %s2374
        %v2376 = vpop.permute.xlu0 %2375
        %s2378 = sor.u32 256, 24
        %2379 = vrot.lane.b32.xlu0 %v2365, %s2378
        %v2380 = vpop.permute.xlu0 %2379
        %s2382 = sor.u32 256, 32
        %2383 = vrot.lane.b32.xlu0 %v2365, %s2382
        %v2384 = vpop.permute.xlu0 %2383
        %s2386 = sor.u32 256, 40
        %2387 = vrot.lane.b32.xlu0 %v2365, %s2386
        %v2388 = vpop.permute.xlu0 %2387
        %s2390 = sor.u32 256, 48
        %2391 = vrot.lane.b32.xlu0 %v2365, %s2390
        %v2392 = vpop.permute.xlu0 %2391
        %s2394 = sor.u32 256, 56
        %2395 = vrot.lane.b32.xlu0 %v2365, %s2394
        %v2396 = vpop.permute.xlu0 %2395
        %s2398 = sor.u32 256, 64
        %2399 = vrot.lane.b32.xlu0 %v2365, %s2398
        %v2400 = vpop.permute.xlu0 %2399
        %s2402 = sor.u32 256, 72
        %2403 = vrot.lane.b32.xlu0 %v2365, %s2402
        %v2404 = vpop.permute.xlu0 %2403
        %s2406 = sor.u32 256, 80
        %2407 = vrot.lane.b32.xlu0 %v2365, %s2406
        %v2408 = vpop.permute.xlu0 %2407
        %s2410 = sor.u32 256, 88
        %2411 = vrot.lane.b32.xlu0 %v2365, %s2410
        %v2412 = vpop.permute.xlu0 %2411
        %s2414 = sor.u32 256, 96
        %2415 = vrot.lane.b32.xlu0 %v2365, %s2414
        %v2416 = vpop.permute.xlu0 %2415
        %s2418 = sor.u32 256, 104
        %2419 = vrot.lane.b32.xlu0 %v2365, %s2418
        %v2420 = vpop.permute.xlu0 %2419
        %s2422 = sor.u32 256, 112
        %2423 = vrot.lane.b32.xlu0 %v2365, %s2422
        %v2424 = vpop.permute.xlu0 %2423
        %s2426 = sor.u32 256, 120
        %2427 = vrot.lane.b32.xlu0 %v2365, %s2426
        %v2428 = vpop.permute.xlu0 %2427
        %v2429 = vmul.f32 %v2368, %v826
        %v2430 = vmul.f32 %v2372, %v827
        %v2431 = vmul.f32 %v2376, %v828
        %v2432 = vmul.f32 %v2380, %v829
        %v2433 = vmul.f32 %v2384, %v830
        %v2434 = vmul.f32 %v2388, %v831
        %v2435 = vmul.f32 %v2392, %v832
        %v2436 = vmul.f32 %v2396, %v833
        %v2437 = vmul.f32 %v2400, %v834
        %v2438 = vmul.f32 %v2404, %v835
        %v2439 = vmul.f32 %v2408, %v836
        %v2440 = vmul.f32 %v2412, %v837
        %v2441 = vmul.f32 %v2416, %v838
        %v2442 = vmul.f32 %v2420, %v839
        %v2443 = vmul.f32 %v2424, %v840
        %v2444 = vmul.f32 %v2428, %v841
        %2445 = vrot.lane.b32.xlu0 %v633, 48
        %v2446 = vpop.permute.xlu0 %2445
        %2447 = vrot.lane.b32.xlu0 %v638, 48
        %v2448 = vpop.permute.xlu0 %2447
        %2449 = vrot.lane.b32.xlu0 %v643, 48
        %v2450 = vpop.permute.xlu0 %2449
        %2451 = vrot.lane.b32.xlu0 %v648, 48
        %v2452 = vpop.permute.xlu0 %2451
        %2453 = vrot.lane.b32.xlu0 %v653, 48
        %v2454 = vpop.permute.xlu0 %2453
        %2455 = vrot.lane.b32.xlu0 %v658, 48
        %v2456 = vpop.permute.xlu0 %2455
        %2457 = vrot.lane.b32.xlu0 %v663, 48
        %v2458 = vpop.permute.xlu0 %2457
        %2459 = vrot.lane.b32.xlu0 %v668, 48
        %v2460 = vpop.permute.xlu0 %2459
        %2461 = vrot.lane.b32.xlu0 %v673, 48
        %v2462 = vpop.permute.xlu0 %2461
        %2463 = vrot.lane.b32.xlu0 %v678, 48
        %v2464 = vpop.permute.xlu0 %2463
        %2465 = vrot.lane.b32.xlu0 %v683, 48
        %v2466 = vpop.permute.xlu0 %2465
        %2467 = vrot.lane.b32.xlu0 %v688, 48
        %v2468 = vpop.permute.xlu0 %2467
        %2469 = vrot.lane.b32.xlu0 %v693, 48
        %v2470 = vpop.permute.xlu0 %2469
        %2471 = vrot.lane.b32.xlu0 %v698, 48
        %v2472 = vpop.permute.xlu0 %2471
        %2473 = vrot.lane.b32.xlu0 %v703, 48
        %v2474 = vpop.permute.xlu0 %2473
        %2475 = vrot.lane.b32.xlu0 %v708, 48
        %v2476 = vpop.permute.xlu0 %2475
        %2493 = vmatprep.subr.mxu0 0.0
        %2494 = vmatpush1.msra.mxu0 %v2476
        %2495 = vmatprep.subr.mxu0 0.0
        %2496 = vmatpush1.msra.mxu0 %v2474
        %2497 = vmatprep.subr.mxu0 0.0
        %2498 = vmatpush1.msra.mxu0 %v2472
        %2499 = vmatprep.subr.mxu0 0.0
        %2500 = vmatpush1.msra.mxu0 %v2470
        %2501 = vmatprep.subr.mxu0 0.0
        %2502 = vmatpush1.msra.mxu0 %v2468
        %2503 = vmatprep.subr.mxu0 0.0
        %2504 = vmatpush1.msra.mxu0 %v2466
        %2505 = vmatprep.subr.mxu0 0.0
        %2506 = vmatpush1.msra.mxu0 %v2464
        %2507 = vmatprep.subr.mxu0 0.0
        %2508 = vmatpush1.msra.mxu0 %v2462
        %2509 = vmatprep.subr.mxu0 0.0
        %2510 = vmatpush1.msra.mxu0 %v2460
        %2511 = vmatprep.subr.mxu0 0.0
        %2512 = vmatpush1.msra.mxu0 %v2458
        %2513 = vmatprep.subr.mxu0 0.0
        %2514 = vmatpush1.msra.mxu0 %v2456
        %2515 = vmatprep.subr.mxu0 0.0
        %2516 = vmatpush1.msra.mxu0 %v2454
        %2517 = vmatprep.subr.mxu0 0.0
        %2518 = vmatpush1.msra.mxu0 %v2452
        %2519 = vmatprep.subr.mxu0 0.0
        %2520 = vmatpush1.msra.mxu0 %v2450
        %2521 = vmatprep.subr.mxu0 0.0
        %2522 = vmatpush1.msra.mxu0 %v2448
        %2523 = vmatprep.subr.mxu0 0.0
        %2524 = vmatpush1.msra.mxu0 %v2446
        %2525 = vmatprep.subr.mxu0 0.0
        %2526 = vmatpush2.msra.mxu0 0.0
        %2527 = vmatprep.subr.mxu0 0.0
        %2528 = vmatpush2.msra.mxu0 0.0
        %2529 = vmatprep.subr.mxu0 0.0
        %2530 = vmatpush2.msra.mxu0 0.0
        %2531 = vmatprep.subr.mxu0 0.0
        %2532 = vmatpush2.msra.mxu0 0.0
        %2533 = vmatprep.subr.mxu0 0.0
        %2534 = vmatpush2.msra.mxu0 0.0
        %2535 = vmatprep.subr.mxu0 0.0
        %2536 = vmatpush2.msra.mxu0 0.0
        %2537 = vmatprep.subr.mxu0 0.0
        %2538 = vmatpush2.msra.mxu0 0.0
        %2539 = vmatprep.subr.mxu0 0.0
        %2540 = vmatpush2.msra.mxu0 0.0
        %2541 = vmatprep.subr.mxu0 0.0
        %2542 = vmatpush2.msra.mxu0 0.0
        %2543 = vmatprep.subr.mxu0 0.0
        %2544 = vmatpush2.msra.mxu0 0.0
        %2545 = vmatprep.subr.mxu0 0.0
        %2546 = vmatpush2.msra.mxu0 0.0
        %2547 = vmatprep.subr.mxu0 0.0
        %2548 = vmatpush2.msra.mxu0 0.0
        %2549 = vmatprep.subr.mxu0 0.0
        %2550 = vmatpush2.msra.mxu0 0.0
        %2551 = vmatprep.subr.mxu0 0.0
        %2552 = vmatpush2.msra.mxu0 0.0
        %2553 = vmatprep.subr.mxu0 0.0
        %2554 = vmatpush2.msra.mxu0 0.0
        %2555 = vmatprep.subr.mxu0 0.0
        %2556 = vmatpush2.msra.mxu0 0.0
        %2557 = vmatprep.mubr.f32.mxu0 0.0
        %2558 = vmatmul.mubr.f32.gmra.mxu0 %v2429
        %v2559 = vpop.f32.mrf.mxu0
        %v2560 = vadd.f32 0.0, %v2559
        %v2561 = vpop.f32.mrf.mxu0
        %2562 = vmatprep.mubr.f32.mxu0 0.0
        %2563 = vmatmul.mubr.f32.gmra.mxu0 %v2430
        %v2564 = vpop.f32.mrf.mxu0
        %v2565 = vadd.f32 0.0, %v2564
        %v2566 = vpop.f32.mrf.mxu0
        %2567 = vmatprep.mubr.f32.mxu0 0.0
        %2568 = vmatmul.mubr.f32.gmra.mxu0 %v2431
        %v2569 = vpop.f32.mrf.mxu0
        %v2570 = vadd.f32 0.0, %v2569
        %v2571 = vpop.f32.mrf.mxu0
        %2572 = vmatprep.mubr.f32.mxu0 0.0
        %2573 = vmatmul.mubr.f32.gmra.mxu0 %v2432
        %v2574 = vpop.f32.mrf.mxu0
        %v2575 = vadd.f32 0.0, %v2574
        %v2576 = vpop.f32.mrf.mxu0
        %2577 = vmatprep.mubr.f32.mxu0 0.0
        %2578 = vmatmul.mubr.f32.gmra.mxu0 %v2433
        %v2579 = vpop.f32.mrf.mxu0
        %v2580 = vadd.f32 0.0, %v2579
        %v2581 = vpop.f32.mrf.mxu0
        %2582 = vmatprep.mubr.f32.mxu0 0.0
        %2583 = vmatmul.mubr.f32.gmra.mxu0 %v2434
        %v2584 = vpop.f32.mrf.mxu0
        %v2585 = vadd.f32 0.0, %v2584
        %v2586 = vpop.f32.mrf.mxu0
        %2587 = vmatprep.mubr.f32.mxu0 0.0
        %2588 = vmatmul.mubr.f32.gmra.mxu0 %v2435
        %v2589 = vpop.f32.mrf.mxu0
        %v2590 = vadd.f32 0.0, %v2589
        %v2591 = vpop.f32.mrf.mxu0
        %2592 = vmatprep.mubr.f32.mxu0 0.0
        %2593 = vmatmul.mubr.f32.gmra.mxu0 %v2436
        %v2594 = vpop.f32.mrf.mxu0
        %v2595 = vadd.f32 0.0, %v2594
        %v2596 = vpop.f32.mrf.mxu0
        %2597 = vmatprep.mubr.f32.mxu0 0.0
        %2598 = vmatmul.mubr.f32.gmra.mxu0 %v2437
        %v2599 = vpop.f32.mrf.mxu0
        %v2600 = vadd.f32 0.0, %v2599
        %v2601 = vpop.f32.mrf.mxu0
        %2602 = vmatprep.mubr.f32.mxu0 0.0
        %2603 = vmatmul.mubr.f32.gmra.mxu0 %v2438
        %v2604 = vpop.f32.mrf.mxu0
        %v2605 = vadd.f32 0.0, %v2604
        %v2606 = vpop.f32.mrf.mxu0
        %2607 = vmatprep.mubr.f32.mxu0 0.0
        %2608 = vmatmul.mubr.f32.gmra.mxu0 %v2439
        %v2609 = vpop.f32.mrf.mxu0
        %v2610 = vadd.f32 0.0, %v2609
        %v2611 = vpop.f32.mrf.mxu0
        %2612 = vmatprep.mubr.f32.mxu0 0.0
        %2613 = vmatmul.mubr.f32.gmra.mxu0 %v2440
        %v2614 = vpop.f32.mrf.mxu0
        %v2615 = vadd.f32 0.0, %v2614
        %v2616 = vpop.f32.mrf.mxu0
        %2617 = vmatprep.mubr.f32.mxu0 0.0
        %2618 = vmatmul.mubr.f32.gmra.mxu0 %v2441
        %v2619 = vpop.f32.mrf.mxu0
        %v2620 = vadd.f32 0.0, %v2619
        %v2621 = vpop.f32.mrf.mxu0
        %2622 = vmatprep.mubr.f32.mxu0 0.0
        %2623 = vmatmul.mubr.f32.gmra.mxu0 %v2442
        %v2624 = vpop.f32.mrf.mxu0
        %v2625 = vadd.f32 0.0, %v2624
        %v2626 = vpop.f32.mrf.mxu0
        %2627 = vmatprep.mubr.f32.mxu0 0.0
        %2628 = vmatmul.mubr.f32.gmra.mxu0 %v2443
        %v2629 = vpop.f32.mrf.mxu0
        %v2630 = vadd.f32 0.0, %v2629
        %v2631 = vpop.f32.mrf.mxu0
        %2632 = vmatprep.mubr.f32.mxu0 0.0
        %2633 = vmatmul.mubr.f32.gmra.mxu0 %v2444
        %v2634 = vpop.f32.mrf.mxu0
        %v2635 = vadd.f32 0.0, %v2634
        %v2636 = vpop.f32.mrf.mxu0
        %2637 = vdwg.mxu0
        %v2638 = vlaneseq
        %v2639 = vshrl.u32 %v2638, 7
        %v2640 = vsub.s32 6, %v2639
        %v2641 = vrot.slane %v998, %v2640
        %2643 = vrot.lane.b32.xlu0 %v2641, 256
        %v2644 = vpop.permute.xlu0 %2643
        %s2646 = sor.u32 256, 8
        %2647 = vrot.lane.b32.xlu0 %v2641, %s2646
        %v2648 = vpop.permute.xlu0 %2647
        %s2650 = sor.u32 256, 16
        %2651 = vrot.lane.b32.xlu0 %v2641, %s2650
        %v2652 = vpop.permute.xlu0 %2651
        %s2654 = sor.u32 256, 24
        %2655 = vrot.lane.b32.xlu0 %v2641, %s2654
        %v2656 = vpop.permute.xlu0 %2655
        %s2658 = sor.u32 256, 32
        %2659 = vrot.lane.b32.xlu0 %v2641, %s2658
        %v2660 = vpop.permute.xlu0 %2659
        %s2662 = sor.u32 256, 40
        %2663 = vrot.lane.b32.xlu0 %v2641, %s2662
        %v2664 = vpop.permute.xlu0 %2663
        %s2666 = sor.u32 256, 48
        %2667 = vrot.lane.b32.xlu0 %v2641, %s2666
        %v2668 = vpop.permute.xlu0 %2667
        %s2670 = sor.u32 256, 56
        %2671 = vrot.lane.b32.xlu0 %v2641, %s2670
        %v2672 = vpop.permute.xlu0 %2671
        %s2674 = sor.u32 256, 64
        %2675 = vrot.lane.b32.xlu0 %v2641, %s2674
        %v2676 = vpop.permute.xlu0 %2675
        %s2678 = sor.u32 256, 72
        %2679 = vrot.lane.b32.xlu0 %v2641, %s2678
        %v2680 = vpop.permute.xlu0 %2679
        %s2682 = sor.u32 256, 80
        %2683 = vrot.lane.b32.xlu0 %v2641, %s2682
        %v2684 = vpop.permute.xlu0 %2683
        %s2686 = sor.u32 256, 88
        %2687 = vrot.lane.b32.xlu0 %v2641, %s2686
        %v2688 = vpop.permute.xlu0 %2687
        %s2690 = sor.u32 256, 96
        %2691 = vrot.lane.b32.xlu0 %v2641, %s2690
        %v2692 = vpop.permute.xlu0 %2691
        %s2694 = sor.u32 256, 104
        %2695 = vrot.lane.b32.xlu0 %v2641, %s2694
        %v2696 = vpop.permute.xlu0 %2695
        %s2698 = sor.u32 256, 112
        %2699 = vrot.lane.b32.xlu0 %v2641, %s2698
        %v2700 = vpop.permute.xlu0 %2699
        %s2702 = sor.u32 256, 120
        %2703 = vrot.lane.b32.xlu0 %v2641, %s2702
        %v2704 = vpop.permute.xlu0 %2703
        %v2705 = vmul.f32 %v2644, %v826
        %v2706 = vmul.f32 %v2648, %v827
        %v2707 = vmul.f32 %v2652, %v828
        %v2708 = vmul.f32 %v2656, %v829
        %v2709 = vmul.f32 %v2660, %v830
        %v2710 = vmul.f32 %v2664, %v831
        %v2711 = vmul.f32 %v2668, %v832
        %v2712 = vmul.f32 %v2672, %v833
        %v2713 = vmul.f32 %v2676, %v834
        %v2714 = vmul.f32 %v2680, %v835
        %v2715 = vmul.f32 %v2684, %v836
        %v2716 = vmul.f32 %v2688, %v837
        %v2717 = vmul.f32 %v2692, %v838
        %v2718 = vmul.f32 %v2696, %v839
        %v2719 = vmul.f32 %v2700, %v840
        %v2720 = vmul.f32 %v2704, %v841
        %2721 = vrot.lane.b32.xlu0 %v633, 32
        %v2722 = vpop.permute.xlu0 %2721
        %2723 = vrot.lane.b32.xlu0 %v638, 32
        %v2724 = vpop.permute.xlu0 %2723
        %2725 = vrot.lane.b32.xlu0 %v643, 32
        %v2726 = vpop.permute.xlu0 %2725
        %2727 = vrot.lane.b32.xlu0 %v648, 32
        %v2728 = vpop.permute.xlu0 %2727
        %2729 = vrot.lane.b32.xlu0 %v653, 32
        %v2730 = vpop.permute.xlu0 %2729
        %2731 = vrot.lane.b32.xlu0 %v658, 32
        %v2732 = vpop.permute.xlu0 %2731
        %2733 = vrot.lane.b32.xlu0 %v663, 32
        %v2734 = vpop.permute.xlu0 %2733
        %2735 = vrot.lane.b32.xlu0 %v668, 32
        %v2736 = vpop.permute.xlu0 %2735
        %2737 = vrot.lane.b32.xlu0 %v673, 32
        %v2738 = vpop.permute.xlu0 %2737
        %2739 = vrot.lane.b32.xlu0 %v678, 32
        %v2740 = vpop.permute.xlu0 %2739
        %2741 = vrot.lane.b32.xlu0 %v683, 32
        %v2742 = vpop.permute.xlu0 %2741
        %2743 = vrot.lane.b32.xlu0 %v688, 32
        %v2744 = vpop.permute.xlu0 %2743
        %2745 = vrot.lane.b32.xlu0 %v693, 32
        %v2746 = vpop.permute.xlu0 %2745
        %2747 = vrot.lane.b32.xlu0 %v698, 32
        %v2748 = vpop.permute.xlu0 %2747
        %2749 = vrot.lane.b32.xlu0 %v703, 32
        %v2750 = vpop.permute.xlu0 %2749
        %2751 = vrot.lane.b32.xlu0 %v708, 32
        %v2752 = vpop.permute.xlu0 %2751
        %2769 = vmatprep.subr.mxu0 0.0
        %2770 = vmatpush1.msra.mxu0 %v2752
        %2771 = vmatprep.subr.mxu0 0.0
        %2772 = vmatpush1.msra.mxu0 %v2750
        %2773 = vmatprep.subr.mxu0 0.0
        %2774 = vmatpush1.msra.mxu0 %v2748
        %2775 = vmatprep.subr.mxu0 0.0
        %2776 = vmatpush1.msra.mxu0 %v2746
        %2777 = vmatprep.subr.mxu0 0.0
        %2778 = vmatpush1.msra.mxu0 %v2744
        %2779 = vmatprep.subr.mxu0 0.0
        %2780 = vmatpush1.msra.mxu0 %v2742
        %2781 = vmatprep.subr.mxu0 0.0
        %2782 = vmatpush1.msra.mxu0 %v2740
        %2783 = vmatprep.subr.mxu0 0.0
        %2784 = vmatpush1.msra.mxu0 %v2738
        %2785 = vmatprep.subr.mxu0 0.0
        %2786 = vmatpush1.msra.mxu0 %v2736
        %2787 = vmatprep.subr.mxu0 0.0
        %2788 = vmatpush1.msra.mxu0 %v2734
        %2789 = vmatprep.subr.mxu0 0.0
        %2790 = vmatpush1.msra.mxu0 %v2732
        %2791 = vmatprep.subr.mxu0 0.0
        %2792 = vmatpush1.msra.mxu0 %v2730
        %2793 = vmatprep.subr.mxu0 0.0
        %2794 = vmatpush1.msra.mxu0 %v2728
        %2795 = vmatprep.subr.mxu0 0.0
        %2796 = vmatpush1.msra.mxu0 %v2726
        %2797 = vmatprep.subr.mxu0 0.0
        %2798 = vmatpush1.msra.mxu0 %v2724
        %2799 = vmatprep.subr.mxu0 0.0
        %2800 = vmatpush1.msra.mxu0 %v2722
        %2801 = vmatprep.subr.mxu0 0.0
        %2802 = vmatpush2.msra.mxu0 0.0
        %2803 = vmatprep.subr.mxu0 0.0
        %2804 = vmatpush2.msra.mxu0 0.0
        %2805 = vmatprep.subr.mxu0 0.0
        %2806 = vmatpush2.msra.mxu0 0.0
        %2807 = vmatprep.subr.mxu0 0.0
        %2808 = vmatpush2.msra.mxu0 0.0
        %2809 = vmatprep.subr.mxu0 0.0
        %2810 = vmatpush2.msra.mxu0 0.0
        %2811 = vmatprep.subr.mxu0 0.0
        %2812 = vmatpush2.msra.mxu0 0.0
        %2813 = vmatprep.subr.mxu0 0.0
        %2814 = vmatpush2.msra.mxu0 0.0
        %2815 = vmatprep.subr.mxu0 0.0
        %2816 = vmatpush2.msra.mxu0 0.0
        %2817 = vmatprep.subr.mxu0 0.0
        %2818 = vmatpush2.msra.mxu0 0.0
        %2819 = vmatprep.subr.mxu0 0.0
        %2820 = vmatpush2.msra.mxu0 0.0
        %2821 = vmatprep.subr.mxu0 0.0
        %2822 = vmatpush2.msra.mxu0 0.0
        %2823 = vmatprep.subr.mxu0 0.0
        %2824 = vmatpush2.msra.mxu0 0.0
        %2825 = vmatprep.subr.mxu0 0.0
        %2826 = vmatpush2.msra.mxu0 0.0
        %2827 = vmatprep.subr.mxu0 0.0
        %2828 = vmatpush2.msra.mxu0 0.0
        %2829 = vmatprep.subr.mxu0 0.0
        %2830 = vmatpush2.msra.mxu0 0.0
        %2831 = vmatprep.subr.mxu0 0.0
        %2832 = vmatpush2.msra.mxu0 0.0
        %2833 = vmatprep.mubr.f32.mxu0 0.0
        %2834 = vmatmul.mubr.f32.gmra.mxu0 %v2705
        %v2835 = vpop.f32.mrf.mxu0
        %v2836 = vadd.f32 0.0, %v2835
        %v2837 = vpop.f32.mrf.mxu0
        %2838 = vmatprep.mubr.f32.mxu0 0.0
        %2839 = vmatmul.mubr.f32.gmra.mxu0 %v2706
        %v2840 = vpop.f32.mrf.mxu0
        %v2841 = vadd.f32 0.0, %v2840
        %v2842 = vpop.f32.mrf.mxu0
        %2843 = vmatprep.mubr.f32.mxu0 0.0
        %2844 = vmatmul.mubr.f32.gmra.mxu0 %v2707
        %v2845 = vpop.f32.mrf.mxu0
        %v2846 = vadd.f32 0.0, %v2845
        %v2847 = vpop.f32.mrf.mxu0
        %2848 = vmatprep.mubr.f32.mxu0 0.0
        %2849 = vmatmul.mubr.f32.gmra.mxu0 %v2708
        %v2850 = vpop.f32.mrf.mxu0
        %v2851 = vadd.f32 0.0, %v2850
        %v2852 = vpop.f32.mrf.mxu0
        %2853 = vmatprep.mubr.f32.mxu0 0.0
        %2854 = vmatmul.mubr.f32.gmra.mxu0 %v2709
        %v2855 = vpop.f32.mrf.mxu0
        %v2856 = vadd.f32 0.0, %v2855
        %v2857 = vpop.f32.mrf.mxu0
        %2858 = vmatprep.mubr.f32.mxu0 0.0
        %2859 = vmatmul.mubr.f32.gmra.mxu0 %v2710
        %v2860 = vpop.f32.mrf.mxu0
        %v2861 = vadd.f32 0.0, %v2860
        %v2862 = vpop.f32.mrf.mxu0
        %2863 = vmatprep.mubr.f32.mxu0 0.0
        %2864 = vmatmul.mubr.f32.gmra.mxu0 %v2711
        %v2865 = vpop.f32.mrf.mxu0
        %v2866 = vadd.f32 0.0, %v2865
        %v2867 = vpop.f32.mrf.mxu0
        %2868 = vmatprep.mubr.f32.mxu0 0.0
        %2869 = vmatmul.mubr.f32.gmra.mxu0 %v2712
        %v2870 = vpop.f32.mrf.mxu0
        %v2871 = vadd.f32 0.0, %v2870
        %v2872 = vpop.f32.mrf.mxu0
        %2873 = vmatprep.mubr.f32.mxu0 0.0
        %2874 = vmatmul.mubr.f32.gmra.mxu0 %v2713
        %v2875 = vpop.f32.mrf.mxu0
        %v2876 = vadd.f32 0.0, %v2875
        %v2877 = vpop.f32.mrf.mxu0
        %2878 = vmatprep.mubr.f32.mxu0 0.0
        %2879 = vmatmul.mubr.f32.gmra.mxu0 %v2714
        %v2880 = vpop.f32.mrf.mxu0
        %v2881 = vadd.f32 0.0, %v2880
        %v2882 = vpop.f32.mrf.mxu0
        %2883 = vmatprep.mubr.f32.mxu0 0.0
        %2884 = vmatmul.mubr.f32.gmra.mxu0 %v2715
        %v2885 = vpop.f32.mrf.mxu0
        %v2886 = vadd.f32 0.0, %v2885
        %v2887 = vpop.f32.mrf.mxu0
        %2888 = vmatprep.mubr.f32.mxu0 0.0
        %2889 = vmatmul.mubr.f32.gmra.mxu0 %v2716
        %v2890 = vpop.f32.mrf.mxu0
        %v2891 = vadd.f32 0.0, %v2890
        %v2892 = vpop.f32.mrf.mxu0
        %2893 = vmatprep.mubr.f32.mxu0 0.0
        %2894 = vmatmul.mubr.f32.gmra.mxu0 %v2717
        %v2895 = vpop.f32.mrf.mxu0
        %v2896 = vadd.f32 0.0, %v2895
        %v2897 = vpop.f32.mrf.mxu0
        %2898 = vmatprep.mubr.f32.mxu0 0.0
        %2899 = vmatmul.mubr.f32.gmra.mxu0 %v2718
        %v2900 = vpop.f32.mrf.mxu0
        %v2901 = vadd.f32 0.0, %v2900
        %v2902 = vpop.f32.mrf.mxu0
        %2903 = vmatprep.mubr.f32.mxu0 0.0
        %2904 = vmatmul.mubr.f32.gmra.mxu0 %v2719
        %v2905 = vpop.f32.mrf.mxu0
        %v2906 = vadd.f32 0.0, %v2905
        %v2907 = vpop.f32.mrf.mxu0
        %2908 = vmatprep.mubr.f32.mxu0 0.0
        %2909 = vmatmul.mubr.f32.gmra.mxu0 %v2720
        %v2910 = vpop.f32.mrf.mxu0
        %v2911 = vadd.f32 0.0, %v2910
        %v2912 = vpop.f32.mrf.mxu0
        %2913 = vdwg.mxu0
        %v2914 = vlaneseq
        %v2915 = vshrl.u32 %v2914, 7
        %v2916 = vsub.s32 7, %v2915
        %v2917 = vrot.slane %v998, %v2916
        %2919 = vrot.lane.b32.xlu0 %v2917, 256
        %v2920 = vpop.permute.xlu0 %2919
        %s2922 = sor.u32 256, 8
        %2923 = vrot.lane.b32.xlu0 %v2917, %s2922
        %v2924 = vpop.permute.xlu0 %2923
        %s2926 = sor.u32 256, 16
        %2927 = vrot.lane.b32.xlu0 %v2917, %s2926
        %v2928 = vpop.permute.xlu0 %2927
        %s2930 = sor.u32 256, 24
        %2931 = vrot.lane.b32.xlu0 %v2917, %s2930
        %v2932 = vpop.permute.xlu0 %2931
        %s2934 = sor.u32 256, 32
        %2935 = vrot.lane.b32.xlu0 %v2917, %s2934
        %v2936 = vpop.permute.xlu0 %2935
        %s2938 = sor.u32 256, 40
        %2939 = vrot.lane.b32.xlu0 %v2917, %s2938
        %v2940 = vpop.permute.xlu0 %2939
        %s2942 = sor.u32 256, 48
        %2943 = vrot.lane.b32.xlu0 %v2917, %s2942
        %v2944 = vpop.permute.xlu0 %2943
        %s2946 = sor.u32 256, 56
        %2947 = vrot.lane.b32.xlu0 %v2917, %s2946
        %v2948 = vpop.permute.xlu0 %2947
        %s2950 = sor.u32 256, 64
        %2951 = vrot.lane.b32.xlu0 %v2917, %s2950
        %v2952 = vpop.permute.xlu0 %2951
        %s2954 = sor.u32 256, 72
        %2955 = vrot.lane.b32.xlu0 %v2917, %s2954
        %v2956 = vpop.permute.xlu0 %2955
        %s2958 = sor.u32 256, 80
        %2959 = vrot.lane.b32.xlu0 %v2917, %s2958
        %v2960 = vpop.permute.xlu0 %2959
        %s2962 = sor.u32 256, 88
        %2963 = vrot.lane.b32.xlu0 %v2917, %s2962
        %v2964 = vpop.permute.xlu0 %2963
        %s2966 = sor.u32 256, 96
        %2967 = vrot.lane.b32.xlu0 %v2917, %s2966
        %v2968 = vpop.permute.xlu0 %2967
        %s2970 = sor.u32 256, 104
        %2971 = vrot.lane.b32.xlu0 %v2917, %s2970
        %v2972 = vpop.permute.xlu0 %2971
        %s2974 = sor.u32 256, 112
        %2975 = vrot.lane.b32.xlu0 %v2917, %s2974
        %v2976 = vpop.permute.xlu0 %2975
        %s2978 = sor.u32 256, 120
        %2979 = vrot.lane.b32.xlu0 %v2917, %s2978
        %v2980 = vpop.permute.xlu0 %2979
        %v2981 = vmul.f32 %v2920, %v826
        %v2982 = vmul.f32 %v2924, %v827
        %v2983 = vmul.f32 %v2928, %v828
        %v2984 = vmul.f32 %v2932, %v829
        %v2985 = vmul.f32 %v2936, %v830
        %v2986 = vmul.f32 %v2940, %v831
        %v2987 = vmul.f32 %v2944, %v832
        %v2988 = vmul.f32 %v2948, %v833
        %v2989 = vmul.f32 %v2952, %v834
        %v2990 = vmul.f32 %v2956, %v835
        %v2991 = vmul.f32 %v2960, %v836
        %v2992 = vmul.f32 %v2964, %v837
        %v2993 = vmul.f32 %v2968, %v838
        %v2994 = vmul.f32 %v2972, %v839
        %v2995 = vmul.f32 %v2976, %v840
        %v2996 = vmul.f32 %v2980, %v841
        %2997 = vrot.lane.b32.xlu0 %v633, 16
        %v2998 = vpop.permute.xlu0 %2997
        %2999 = vrot.lane.b32.xlu0 %v638, 16
        %v3000 = vpop.permute.xlu0 %2999
        %3001 = vrot.lane.b32.xlu0 %v643, 16
        %v3002 = vpop.permute.xlu0 %3001
        %3003 = vrot.lane.b32.xlu0 %v648, 16
        %v3004 = vpop.permute.xlu0 %3003
        %3005 = vrot.lane.b32.xlu0 %v653, 16
        %v3006 = vpop.permute.xlu0 %3005
        %3007 = vrot.lane.b32.xlu0 %v658, 16
        %v3008 = vpop.permute.xlu0 %3007
        %3009 = vrot.lane.b32.xlu0 %v663, 16
        %v3010 = vpop.permute.xlu0 %3009
        %3011 = vrot.lane.b32.xlu0 %v668, 16
        %v3012 = vpop.permute.xlu0 %3011
        %3013 = vrot.lane.b32.xlu0 %v673, 16
        %v3014 = vpop.permute.xlu0 %3013
        %3015 = vrot.lane.b32.xlu0 %v678, 16
        %v3016 = vpop.permute.xlu0 %3015
        %3017 = vrot.lane.b32.xlu0 %v683, 16
        %v3018 = vpop.permute.xlu0 %3017
        %3019 = vrot.lane.b32.xlu0 %v688, 16
        %v3020 = vpop.permute.xlu0 %3019
        %3021 = vrot.lane.b32.xlu0 %v693, 16
        %v3022 = vpop.permute.xlu0 %3021
        %3023 = vrot.lane.b32.xlu0 %v698, 16
        %v3024 = vpop.permute.xlu0 %3023
        %3025 = vrot.lane.b32.xlu0 %v703, 16
        %v3026 = vpop.permute.xlu0 %3025
        %3027 = vrot.lane.b32.xlu0 %v708, 16
        %v3028 = vpop.permute.xlu0 %3027
        %3045 = vmatprep.subr.mxu0 0.0
        %3046 = vmatpush1.msra.mxu0 %v3028
        %3047 = vmatprep.subr.mxu0 0.0
        %3048 = vmatpush1.msra.mxu0 %v3026
        %3049 = vmatprep.subr.mxu0 0.0
        %3050 = vmatpush1.msra.mxu0 %v3024
        %3051 = vmatprep.subr.mxu0 0.0
        %3052 = vmatpush1.msra.mxu0 %v3022
        %3053 = vmatprep.subr.mxu0 0.0
        %3054 = vmatpush1.msra.mxu0 %v3020
        %3055 = vmatprep.subr.mxu0 0.0
        %3056 = vmatpush1.msra.mxu0 %v3018
        %3057 = vmatprep.subr.mxu0 0.0
        %3058 = vmatpush1.msra.mxu0 %v3016
        %3059 = vmatprep.subr.mxu0 0.0
        %3060 = vmatpush1.msra.mxu0 %v3014
        %3061 = vmatprep.subr.mxu0 0.0
        %3062 = vmatpush1.msra.mxu0 %v3012
        %3063 = vmatprep.subr.mxu0 0.0
        %3064 = vmatpush1.msra.mxu0 %v3010
        %3065 = vmatprep.subr.mxu0 0.0
        %3066 = vmatpush1.msra.mxu0 %v3008
        %3067 = vmatprep.subr.mxu0 0.0
        %3068 = vmatpush1.msra.mxu0 %v3006
        %3069 = vmatprep.subr.mxu0 0.0
        %3070 = vmatpush1.msra.mxu0 %v3004
        %3071 = vmatprep.subr.mxu0 0.0
        %3072 = vmatpush1.msra.mxu0 %v3002
        %3073 = vmatprep.subr.mxu0 0.0
        %3074 = vmatpush1.msra.mxu0 %v3000
        %3075 = vmatprep.subr.mxu0 0.0
        %3076 = vmatpush1.msra.mxu0 %v2998
        %3077 = vmatprep.subr.mxu0 0.0
        %3078 = vmatpush2.msra.mxu0 0.0
        %3079 = vmatprep.subr.mxu0 0.0
        %3080 = vmatpush2.msra.mxu0 0.0
        %3081 = vmatprep.subr.mxu0 0.0
        %3082 = vmatpush2.msra.mxu0 0.0
        %3083 = vmatprep.subr.mxu0 0.0
        %3084 = vmatpush2.msra.mxu0 0.0
        %3085 = vmatprep.subr.mxu0 0.0
        %3086 = vmatpush2.msra.mxu0 0.0
        %3087 = vmatprep.subr.mxu0 0.0
        %3088 = vmatpush2.msra.mxu0 0.0
        %3089 = vmatprep.subr.mxu0 0.0
        %3090 = vmatpush2.msra.mxu0 0.0
        %3091 = vmatprep.subr.mxu0 0.0
        %3092 = vmatpush2.msra.mxu0 0.0
        %3093 = vmatprep.subr.mxu0 0.0
        %3094 = vmatpush2.msra.mxu0 0.0
        %3095 = vmatprep.subr.mxu0 0.0
        %3096 = vmatpush2.msra.mxu0 0.0
        %3097 = vmatprep.subr.mxu0 0.0
        %3098 = vmatpush2.msra.mxu0 0.0
        %3099 = vmatprep.subr.mxu0 0.0
        %3100 = vmatpush2.msra.mxu0 0.0
        %3101 = vmatprep.subr.mxu0 0.0
        %3102 = vmatpush2.msra.mxu0 0.0
        %3103 = vmatprep.subr.mxu0 0.0
        %3104 = vmatpush2.msra.mxu0 0.0
        %3105 = vmatprep.subr.mxu0 0.0
        %3106 = vmatpush2.msra.mxu0 0.0
        %3107 = vmatprep.subr.mxu0 0.0
        %3108 = vmatpush2.msra.mxu0 0.0
        %3109 = vmatprep.mubr.f32.mxu0 0.0
        %3110 = vmatmul.mubr.f32.gmra.mxu0 %v2981
        %v3111 = vpop.f32.mrf.mxu0
        %v3112 = vadd.f32 0.0, %v3111
        %v3113 = vpop.f32.mrf.mxu0
        %3114 = vmatprep.mubr.f32.mxu0 0.0
        %3115 = vmatmul.mubr.f32.gmra.mxu0 %v2982
        %v3116 = vpop.f32.mrf.mxu0
        %v3117 = vadd.f32 0.0, %v3116
        %v3118 = vpop.f32.mrf.mxu0
        %3119 = vmatprep.mubr.f32.mxu0 0.0
        %3120 = vmatmul.mubr.f32.gmra.mxu0 %v2983
        %v3121 = vpop.f32.mrf.mxu0
        %v3122 = vadd.f32 0.0, %v3121
        %v3123 = vpop.f32.mrf.mxu0
        %3124 = vmatprep.mubr.f32.mxu0 0.0
        %3125 = vmatmul.mubr.f32.gmra.mxu0 %v2984
        %v3126 = vpop.f32.mrf.mxu0
        %v3127 = vadd.f32 0.0, %v3126
        %v3128 = vpop.f32.mrf.mxu0
        %3129 = vmatprep.mubr.f32.mxu0 0.0
        %3130 = vmatmul.mubr.f32.gmra.mxu0 %v2985
        %v3131 = vpop.f32.mrf.mxu0
        %v3132 = vadd.f32 0.0, %v3131
        %v3133 = vpop.f32.mrf.mxu0
        %3134 = vmatprep.mubr.f32.mxu0 0.0
        %3135 = vmatmul.mubr.f32.gmra.mxu0 %v2986
        %v3136 = vpop.f32.mrf.mxu0
        %v3137 = vadd.f32 0.0, %v3136
        %v3138 = vpop.f32.mrf.mxu0
        %3139 = vmatprep.mubr.f32.mxu0 0.0
        %3140 = vmatmul.mubr.f32.gmra.mxu0 %v2987
        %v3141 = vpop.f32.mrf.mxu0
        %v3142 = vadd.f32 0.0, %v3141
        %v3143 = vpop.f32.mrf.mxu0
        %3144 = vmatprep.mubr.f32.mxu0 0.0
        %3145 = vmatmul.mubr.f32.gmra.mxu0 %v2988
        %v3146 = vpop.f32.mrf.mxu0
        %v3147 = vadd.f32 0.0, %v3146
        %v3148 = vpop.f32.mrf.mxu0
        %3149 = vmatprep.mubr.f32.mxu0 0.0
        %3150 = vmatmul.mubr.f32.gmra.mxu0 %v2989
        %v3151 = vpop.f32.mrf.mxu0
        %v3152 = vadd.f32 0.0, %v3151
        %v3153 = vpop.f32.mrf.mxu0
        %3154 = vmatprep.mubr.f32.mxu0 0.0
        %3155 = vmatmul.mubr.f32.gmra.mxu0 %v2990
        %v3156 = vpop.f32.mrf.mxu0
        %v3157 = vadd.f32 0.0, %v3156
        %v3158 = vpop.f32.mrf.mxu0
        %3159 = vmatprep.mubr.f32.mxu0 0.0
        %3160 = vmatmul.mubr.f32.gmra.mxu0 %v2991
        %v3161 = vpop.f32.mrf.mxu0
        %v3162 = vadd.f32 0.0, %v3161
        %v3163 = vpop.f32.mrf.mxu0
        %3164 = vmatprep.mubr.f32.mxu0 0.0
        %3165 = vmatmul.mubr.f32.gmra.mxu0 %v2992
        %v3166 = vpop.f32.mrf.mxu0
        %v3167 = vadd.f32 0.0, %v3166
        %v3168 = vpop.f32.mrf.mxu0
        %3169 = vmatprep.mubr.f32.mxu0 0.0
        %3170 = vmatmul.mubr.f32.gmra.mxu0 %v2993
        %v3171 = vpop.f32.mrf.mxu0
        %v3172 = vadd.f32 0.0, %v3171
        %v3173 = vpop.f32.mrf.mxu0
        %3174 = vmatprep.mubr.f32.mxu0 0.0
        %3175 = vmatmul.mubr.f32.gmra.mxu0 %v2994
        %v3176 = vpop.f32.mrf.mxu0
        %v3177 = vadd.f32 0.0, %v3176
        %v3178 = vpop.f32.mrf.mxu0
        %3179 = vmatprep.mubr.f32.mxu0 0.0
        %3180 = vmatmul.mubr.f32.gmra.mxu0 %v2995
        %v3181 = vpop.f32.mrf.mxu0
        %v3182 = vadd.f32 0.0, %v3181
        %v3183 = vpop.f32.mrf.mxu0
        %3184 = vmatprep.mubr.f32.mxu0 0.0
        %3185 = vmatmul.mubr.f32.gmra.mxu0 %v2996
        %v3186 = vpop.f32.mrf.mxu0
        %v3187 = vadd.f32 0.0, %v3186
        %v3188 = vpop.f32.mrf.mxu0
        %3189 = vdwg.mxu0
        %3206 = vrot.lane.b32.xlu0 %v1456, 16
        %v3207 = vpop.permute.xlu0 %3206
        %3208 = vrot.lane.b32.xlu0 %v1461, 16
        %v3209 = vpop.permute.xlu0 %3208
        %3210 = vrot.lane.b32.xlu0 %v1466, 16
        %v3211 = vpop.permute.xlu0 %3210
        %3212 = vrot.lane.b32.xlu0 %v1471, 16
        %v3213 = vpop.permute.xlu0 %3212
        %3214 = vrot.lane.b32.xlu0 %v1476, 16
        %v3215 = vpop.permute.xlu0 %3214
        %3216 = vrot.lane.b32.xlu0 %v1481, 16
        %v3217 = vpop.permute.xlu0 %3216
        %3218 = vrot.lane.b32.xlu0 %v1486, 16
        %v3219 = vpop.permute.xlu0 %3218
        %3220 = vrot.lane.b32.xlu0 %v1491, 16
        %v3221 = vpop.permute.xlu0 %3220
        %3222 = vrot.lane.b32.xlu0 %v1496, 16
        %v3223 = vpop.permute.xlu0 %3222
        %3224 = vrot.lane.b32.xlu0 %v1501, 16
        %v3225 = vpop.permute.xlu0 %3224
        %3226 = vrot.lane.b32.xlu0 %v1506, 16
        %v3227 = vpop.permute.xlu0 %3226
        %3228 = vrot.lane.b32.xlu0 %v1511, 16
        %v3229 = vpop.permute.xlu0 %3228
        %3230 = vrot.lane.b32.xlu0 %v1516, 16
        %v3231 = vpop.permute.xlu0 %3230
        %3232 = vrot.lane.b32.xlu0 %v1521, 16
        %v3233 = vpop.permute.xlu0 %3232
        %3234 = vrot.lane.b32.xlu0 %v1526, 16
        %v3235 = vpop.permute.xlu0 %3234
        %3236 = vrot.lane.b32.xlu0 %v1531, 16
        %v3237 = vpop.permute.xlu0 %3236
        %3270 = vrot.lane.b32.xlu0 %v1732, 32
        %v3271 = vpop.permute.xlu0 %3270
        %3272 = vrot.lane.b32.xlu0 %v1737, 32
        %v3273 = vpop.permute.xlu0 %3272
        %3274 = vrot.lane.b32.xlu0 %v1742, 32
        %v3275 = vpop.permute.xlu0 %3274
        %3276 = vrot.lane.b32.xlu0 %v1747, 32
        %v3277 = vpop.permute.xlu0 %3276
        %3278 = vrot.lane.b32.xlu0 %v1752, 32
        %v3279 = vpop.permute.xlu0 %3278
        %3280 = vrot.lane.b32.xlu0 %v1757, 32
        %v3281 = vpop.permute.xlu0 %3280
        %3282 = vrot.lane.b32.xlu0 %v1762, 32
        %v3283 = vpop.permute.xlu0 %3282
        %3284 = vrot.lane.b32.xlu0 %v1767, 32
        %v3285 = vpop.permute.xlu0 %3284
        %3286 = vrot.lane.b32.xlu0 %v1772, 32
        %v3287 = vpop.permute.xlu0 %3286
        %3288 = vrot.lane.b32.xlu0 %v1777, 32
        %v3289 = vpop.permute.xlu0 %3288
        %3290 = vrot.lane.b32.xlu0 %v1782, 32
        %v3291 = vpop.permute.xlu0 %3290
        %3292 = vrot.lane.b32.xlu0 %v1787, 32
        %v3293 = vpop.permute.xlu0 %3292
        %3294 = vrot.lane.b32.xlu0 %v1792, 32
        %v3295 = vpop.permute.xlu0 %3294
        %3296 = vrot.lane.b32.xlu0 %v1797, 32
        %v3297 = vpop.permute.xlu0 %3296
        %3298 = vrot.lane.b32.xlu0 %v1802, 32
        %v3299 = vpop.permute.xlu0 %3298
        %3300 = vrot.lane.b32.xlu0 %v1807, 32
        %v3301 = vpop.permute.xlu0 %3300
        %3334 = vrot.lane.b32.xlu0 %v2008, 48
        %v3335 = vpop.permute.xlu0 %3334
        %3336 = vrot.lane.b32.xlu0 %v2013, 48
        %v3337 = vpop.permute.xlu0 %3336
        %3338 = vrot.lane.b32.xlu0 %v2018, 48
        %v3339 = vpop.permute.xlu0 %3338
        %3340 = vrot.lane.b32.xlu0 %v2023, 48
        %v3341 = vpop.permute.xlu0 %3340
        %3342 = vrot.lane.b32.xlu0 %v2028, 48
        %v3343 = vpop.permute.xlu0 %3342
        %3344 = vrot.lane.b32.xlu0 %v2033, 48
        %v3345 = vpop.permute.xlu0 %3344
        %3346 = vrot.lane.b32.xlu0 %v2038, 48
        %v3347 = vpop.permute.xlu0 %3346
        %3348 = vrot.lane.b32.xlu0 %v2043, 48
        %v3349 = vpop.permute.xlu0 %3348
        %3350 = vrot.lane.b32.xlu0 %v2048, 48
        %v3351 = vpop.permute.xlu0 %3350
        %3352 = vrot.lane.b32.xlu0 %v2053, 48
        %v3353 = vpop.permute.xlu0 %3352
        %3354 = vrot.lane.b32.xlu0 %v2058, 48
        %v3355 = vpop.permute.xlu0 %3354
        %3356 = vrot.lane.b32.xlu0 %v2063, 48
        %v3357 = vpop.permute.xlu0 %3356
        %3358 = vrot.lane.b32.xlu0 %v2068, 48
        %v3359 = vpop.permute.xlu0 %3358
        %3360 = vrot.lane.b32.xlu0 %v2073, 48
        %v3361 = vpop.permute.xlu0 %3360
        %3362 = vrot.lane.b32.xlu0 %v2078, 48
        %v3363 = vpop.permute.xlu0 %3362
        %3364 = vrot.lane.b32.xlu0 %v2083, 48
        %v3365 = vpop.permute.xlu0 %3364
        %3398 = vrot.lane.b32.xlu0 %v2284, 64
        %v3399 = vpop.permute.xlu0 %3398
        %3400 = vrot.lane.b32.xlu0 %v2289, 64
        %v3401 = vpop.permute.xlu0 %3400
        %3402 = vrot.lane.b32.xlu0 %v2294, 64
        %v3403 = vpop.permute.xlu0 %3402
        %3404 = vrot.lane.b32.xlu0 %v2299, 64
        %v3405 = vpop.permute.xlu0 %3404
        %3406 = vrot.lane.b32.xlu0 %v2304, 64
        %v3407 = vpop.permute.xlu0 %3406
        %3408 = vrot.lane.b32.xlu0 %v2309, 64
        %v3409 = vpop.permute.xlu0 %3408
        %3410 = vrot.lane.b32.xlu0 %v2314, 64
        %v3411 = vpop.permute.xlu0 %3410
        %3412 = vrot.lane.b32.xlu0 %v2319, 64
        %v3413 = vpop.permute.xlu0 %3412
        %3414 = vrot.lane.b32.xlu0 %v2324, 64
        %v3415 = vpop.permute.xlu0 %3414
        %3416 = vrot.lane.b32.xlu0 %v2329, 64
        %v3417 = vpop.permute.xlu0 %3416
        %3418 = vrot.lane.b32.xlu0 %v2334, 64
        %v3419 = vpop.permute.xlu0 %3418
        %3420 = vrot.lane.b32.xlu0 %v2339, 64
        %v3421 = vpop.permute.xlu0 %3420
        %3422 = vrot.lane.b32.xlu0 %v2344, 64
        %v3423 = vpop.permute.xlu0 %3422
        %3424 = vrot.lane.b32.xlu0 %v2349, 64
        %v3425 = vpop.permute.xlu0 %3424
        %3426 = vrot.lane.b32.xlu0 %v2354, 64
        %v3427 = vpop.permute.xlu0 %3426
        %3428 = vrot.lane.b32.xlu0 %v2359, 64
        %v3429 = vpop.permute.xlu0 %3428
        %3462 = vrot.lane.b32.xlu0 %v2560, 80
        %v3463 = vpop.permute.xlu0 %3462
        %3464 = vrot.lane.b32.xlu0 %v2565, 80
        %v3465 = vpop.permute.xlu0 %3464
        %3466 = vrot.lane.b32.xlu0 %v2570, 80
        %v3467 = vpop.permute.xlu0 %3466
        %3468 = vrot.lane.b32.xlu0 %v2575, 80
        %v3469 = vpop.permute.xlu0 %3468
        %3470 = vrot.lane.b32.xlu0 %v2580, 80
        %v3471 = vpop.permute.xlu0 %3470
        %3472 = vrot.lane.b32.xlu0 %v2585, 80
        %v3473 = vpop.permute.xlu0 %3472
        %3474 = vrot.lane.b32.xlu0 %v2590, 80
        %v3475 = vpop.permute.xlu0 %3474
        %3476 = vrot.lane.b32.xlu0 %v2595, 80
        %v3477 = vpop.permute.xlu0 %3476
        %3478 = vrot.lane.b32.xlu0 %v2600, 80
        %v3479 = vpop.permute.xlu0 %3478
        %3480 = vrot.lane.b32.xlu0 %v2605, 80
        %v3481 = vpop.permute.xlu0 %3480
        %3482 = vrot.lane.b32.xlu0 %v2610, 80
        %v3483 = vpop.permute.xlu0 %3482
        %3484 = vrot.lane.b32.xlu0 %v2615, 80
        %v3485 = vpop.permute.xlu0 %3484
        %3486 = vrot.lane.b32.xlu0 %v2620, 80
        %v3487 = vpop.permute.xlu0 %3486
        %3488 = vrot.lane.b32.xlu0 %v2625, 80
        %v3489 = vpop.permute.xlu0 %3488
        %3490 = vrot.lane.b32.xlu0 %v2630, 80
        %v3491 = vpop.permute.xlu0 %3490
        %3492 = vrot.lane.b32.xlu0 %v2635, 80
        %v3493 = vpop.permute.xlu0 %3492
        %3526 = vrot.lane.b32.xlu0 %v2836, 96
        %v3527 = vpop.permute.xlu0 %3526
        %3528 = vrot.lane.b32.xlu0 %v2841, 96
        %v3529 = vpop.permute.xlu0 %3528
        %3530 = vrot.lane.b32.xlu0 %v2846, 96
        %v3531 = vpop.permute.xlu0 %3530
        %3532 = vrot.lane.b32.xlu0 %v2851, 96
        %v3533 = vpop.permute.xlu0 %3532
        %3534 = vrot.lane.b32.xlu0 %v2856, 96
        %v3535 = vpop.permute.xlu0 %3534
        %3536 = vrot.lane.b32.xlu0 %v2861, 96
        %v3537 = vpop.permute.xlu0 %3536
        %3538 = vrot.lane.b32.xlu0 %v2866, 96
        %v3539 = vpop.permute.xlu0 %3538
        %3540 = vrot.lane.b32.xlu0 %v2871, 96
        %v3541 = vpop.permute.xlu0 %3540
        %3542 = vrot.lane.b32.xlu0 %v2876, 96
        %v3543 = vpop.permute.xlu0 %3542
        %3544 = vrot.lane.b32.xlu0 %v2881, 96
        %v3545 = vpop.permute.xlu0 %3544
        %3546 = vrot.lane.b32.xlu0 %v2886, 96
        %v3547 = vpop.permute.xlu0 %3546
        %3548 = vrot.lane.b32.xlu0 %v2891, 96
        %v3549 = vpop.permute.xlu0 %3548
        %3550 = vrot.lane.b32.xlu0 %v2896, 96
        %v3551 = vpop.permute.xlu0 %3550
        %3552 = vrot.lane.b32.xlu0 %v2901, 96
        %v3553 = vpop.permute.xlu0 %3552
        %3554 = vrot.lane.b32.xlu0 %v2906, 96
        %v3555 = vpop.permute.xlu0 %3554
        %3556 = vrot.lane.b32.xlu0 %v2911, 96
        %v3557 = vpop.permute.xlu0 %3556
        %3590 = vrot.lane.b32.xlu0 %v3112, 112
        %v3591 = vpop.permute.xlu0 %3590
        %3592 = vrot.lane.b32.xlu0 %v3117, 112
        %v3593 = vpop.permute.xlu0 %3592
        %3594 = vrot.lane.b32.xlu0 %v3122, 112
        %v3595 = vpop.permute.xlu0 %3594
        %3596 = vrot.lane.b32.xlu0 %v3127, 112
        %v3597 = vpop.permute.xlu0 %3596
        %3598 = vrot.lane.b32.xlu0 %v3132, 112
        %v3599 = vpop.permute.xlu0 %3598
        %3600 = vrot.lane.b32.xlu0 %v3137, 112
        %v3601 = vpop.permute.xlu0 %3600
        %3602 = vrot.lane.b32.xlu0 %v3142, 112
        %v3603 = vpop.permute.xlu0 %3602
        %3604 = vrot.lane.b32.xlu0 %v3147, 112
        %v3605 = vpop.permute.xlu0 %3604
        %3606 = vrot.lane.b32.xlu0 %v3152, 112
        %v3607 = vpop.permute.xlu0 %3606
        %3608 = vrot.lane.b32.xlu0 %v3157, 112
        %v3609 = vpop.permute.xlu0 %3608
        %3610 = vrot.lane.b32.xlu0 %v3162, 112
        %v3611 = vpop.permute.xlu0 %3610
        %3612 = vrot.lane.b32.xlu0 %v3167, 112
        %v3613 = vpop.permute.xlu0 %3612
        %3614 = vrot.lane.b32.xlu0 %v3172, 112
        %v3615 = vpop.permute.xlu0 %3614
        %3616 = vrot.lane.b32.xlu0 %v3177, 112
        %v3617 = vpop.permute.xlu0 %3616
        %3618 = vrot.lane.b32.xlu0 %v3182, 112
        %v3619 = vpop.permute.xlu0 %3618
        %3620 = vrot.lane.b32.xlu0 %v3187, 112
        %v3621 = vpop.permute.xlu0 %3620
        %vm3638 = vcmask 130048
        %v3639 = vsel %vm3638, %v1164, %v3207
        %v3640 = vsel %vm3638, %v1169, %v3209
        %v3641 = vsel %vm3638, %v1174, %v3211
        %v3642 = vsel %vm3638, %v1179, %v3213
        %v3643 = vsel %vm3638, %v1184, %v3215
        %v3644 = vsel %vm3638, %v1189, %v3217
        %v3645 = vsel %vm3638, %v1194, %v3219
        %v3646 = vsel %vm3638, %v1199, %v3221
        %v3647 = vsel %vm3638, %v1204, %v3223
        %v3648 = vsel %vm3638, %v1209, %v3225
        %v3649 = vsel %vm3638, %v1214, %v3227
        %v3650 = vsel %vm3638, %v1219, %v3229
        %v3651 = vsel %vm3638, %v1224, %v3231
        %v3652 = vsel %vm3638, %v1229, %v3233
        %v3653 = vsel %vm3638, %v1234, %v3235
        %v3654 = vsel %vm3638, %v1239, %v3237
        %vm3655 = vcmask 261120
        %v3656 = vsel %vm3655, %v3639, %v3271
        %v3657 = vsel %vm3655, %v3640, %v3273
        %v3658 = vsel %vm3655, %v3641, %v3275
        %v3659 = vsel %vm3655, %v3642, %v3277
        %v3660 = vsel %vm3655, %v3643, %v3279
        %v3661 = vsel %vm3655, %v3644, %v3281
        %v3662 = vsel %vm3655, %v3645, %v3283
        %v3663 = vsel %vm3655, %v3646, %v3285
        %v3664 = vsel %vm3655, %v3647, %v3287
        %v3665 = vsel %vm3655, %v3648, %v3289
        %v3666 = vsel %vm3655, %v3649, %v3291
        %v3667 = vsel %vm3655, %v3650, %v3293
        %v3668 = vsel %vm3655, %v3651, %v3295
        %v3669 = vsel %vm3655, %v3652, %v3297
        %v3670 = vsel %vm3655, %v3653, %v3299
        %v3671 = vsel %vm3655, %v3654, %v3301
        %vm3672 = vcmask 392192
        %v3673 = vsel %vm3672, %v3656, %v3335
        %v3674 = vsel %vm3672, %v3657, %v3337
        %v3675 = vsel %vm3672, %v3658, %v3339
        %v3676 = vsel %vm3672, %v3659, %v3341
        %v3677 = vsel %vm3672, %v3660, %v3343
        %v3678 = vsel %vm3672, %v3661, %v3345
        %v3679 = vsel %vm3672, %v3662, %v3347
        %v3680 = vsel %vm3672, %v3663, %v3349
        %v3681 = vsel %vm3672, %v3664, %v3351
        %v3682 = vsel %vm3672, %v3665, %v3353
        %v3683 = vsel %vm3672, %v3666, %v3355
        %v3684 = vsel %vm3672, %v3667, %v3357
        %v3685 = vsel %vm3672, %v3668, %v3359
        %v3686 = vsel %vm3672, %v3669, %v3361
        %v3687 = vsel %vm3672, %v3670, %v3363
        %v3688 = vsel %vm3672, %v3671, %v3365
        %vm3689 = vcmask 523264
        %v3690 = vsel %vm3689, %v3673, %v3399
        %v3691 = vsel %vm3689, %v3674, %v3401
        %v3692 = vsel %vm3689, %v3675, %v3403
        %v3693 = vsel %vm3689, %v3676, %v3405
        %v3694 = vsel %vm3689, %v3677, %v3407
        %v3695 = vsel %vm3689, %v3678, %v3409
        %v3696 = vsel %vm3689, %v3679, %v3411
        %v3697 = vsel %vm3689, %v3680, %v3413
        %v3698 = vsel %vm3689, %v3681, %v3415
        %v3699 = vsel %vm3689, %v3682, %v3417
        %v3700 = vsel %vm3689, %v3683, %v3419
        %v3701 = vsel %vm3689, %v3684, %v3421
        %v3702 = vsel %vm3689, %v3685, %v3423
        %v3703 = vsel %vm3689, %v3686, %v3425
        %v3704 = vsel %vm3689, %v3687, %v3427
        %v3705 = vsel %vm3689, %v3688, %v3429
        %vm3706 = vcmask 654336
        %v3707 = vsel %vm3706, %v3690, %v3463
        %v3708 = vsel %vm3706, %v3691, %v3465
        %v3709 = vsel %vm3706, %v3692, %v3467
        %v3710 = vsel %vm3706, %v3693, %v3469
        %v3711 = vsel %vm3706, %v3694, %v3471
        %v3712 = vsel %vm3706, %v3695, %v3473
        %v3713 = vsel %vm3706, %v3696, %v3475
        %v3714 = vsel %vm3706, %v3697, %v3477
        %v3715 = vsel %vm3706, %v3698, %v3479
        %v3716 = vsel %vm3706, %v3699, %v3481
        %v3717 = vsel %vm3706, %v3700, %v3483
        %v3718 = vsel %vm3706, %v3701, %v3485
        %v3719 = vsel %vm3706, %v3702, %v3487
        %v3720 = vsel %vm3706, %v3703, %v3489
        %v3721 = vsel %vm3706, %v3704, %v3491
        %v3722 = vsel %vm3706, %v3705, %v3493
        %vm3723 = vcmask 785408
        %v3724 = vsel %vm3723, %v3707, %v3527
        %v3725 = vsel %vm3723, %v3708, %v3529
        %v3726 = vsel %vm3723, %v3709, %v3531
        %v3727 = vsel %vm3723, %v3710, %v3533
        %v3728 = vsel %vm3723, %v3711, %v3535
        %v3729 = vsel %vm3723, %v3712, %v3537
        %v3730 = vsel %vm3723, %v3713, %v3539
        %v3731 = vsel %vm3723, %v3714, %v3541
        %v3732 = vsel %vm3723, %v3715, %v3543
        %v3733 = vsel %vm3723, %v3716, %v3545
        %v3734 = vsel %vm3723, %v3717, %v3547
        %v3735 = vsel %vm3723, %v3718, %v3549
        %v3736 = vsel %vm3723, %v3719, %v3551
        %v3737 = vsel %vm3723, %v3720, %v3553
        %v3738 = vsel %vm3723, %v3721, %v3555
        %v3739 = vsel %vm3723, %v3722, %v3557
        %vm3740 = vcmask 916480
        %v3741 = vsel %vm3740, %v3724, %v3591
        %v3742 = vsel %vm3740, %v3725, %v3593
        %v3743 = vsel %vm3740, %v3726, %v3595
        %v3744 = vsel %vm3740, %v3727, %v3597
        %v3745 = vsel %vm3740, %v3728, %v3599
        %v3746 = vsel %vm3740, %v3729, %v3601
        %v3747 = vsel %vm3740, %v3730, %v3603
        %v3748 = vsel %vm3740, %v3731, %v3605
        %v3749 = vsel %vm3740, %v3732, %v3607
        %v3750 = vsel %vm3740, %v3733, %v3609
        %v3751 = vsel %vm3740, %v3734, %v3611
        %v3752 = vsel %vm3740, %v3735, %v3613
        %v3753 = vsel %vm3740, %v3736, %v3615
        %v3754 = vsel %vm3740, %v3737, %v3617
        %v3755 = vsel %vm3740, %v3738, %v3619
        %v3756 = vsel %vm3740, %v3739, %v3621
        %v3757 = vsel %vm842, %v488, -inf
        %v3758 = vsel %vm842, %v493, -inf
        %v3759 = vsel %vm842, %v498, -inf
        %v3760 = vsel %vm842, %v503, -inf
        %v3761 = vsel %vm842, %v508, -inf
        %v3762 = vmax.f32 %v3757, %v3761
        %v3763 = vsel %vm842, %v513, -inf
        %v3764 = vmax.f32 %v3758, %v3763
        %v3765 = vsel %vm842, %v518, -inf
        %v3766 = vmax.f32 %v3759, %v3765
        %v3767 = vsel %vm842, %v523, -inf
        %v3768 = vmax.f32 %v3760, %v3767
        %v3769 = vsel %vm842, %v528, -inf
        %v3770 = vmax.f32 %v3762, %v3769
        %v3771 = vsel %vm842, %v533, -inf
        %v3772 = vmax.f32 %v3764, %v3771
        %v3773 = vsel %vm842, %v538, -inf
        %v3774 = vmax.f32 %v3766, %v3773
        %v3775 = vsel %vm842, %v543, -inf
        %v3776 = vmax.f32 %v3768, %v3775
        %v3777 = vsel %vm842, %v548, -inf
        %v3778 = vmax.f32 %v3770, %v3777
        %v3779 = vsel %vm842, %v553, -inf
        %v3780 = vmax.f32 %v3772, %v3779
        %v3781 = vsel %vm842, %v558, -inf
        %v3782 = vmax.f32 %v3774, %v3781
        %v3783 = vsel %vm842, %v563, -inf
        %v3784 = vmax.f32 %v3776, %v3783
        %v3785 = vmax.f32 %v3778, %v3780
        %v3786 = vmax.f32 %v3782, %v3784
        %v3787 = vmax.f32 %v3785, %v3786
        %v3788 = vrot.slane %v3787, 4
        %v3789 = vmax.f32 %v3787, %v3788
        %v3790 = vrot.slane %v3789, 2
        %v3791 = vmax.f32 %v3789, %v3790
        %v3792 = vrot.slane %v3791, 1
        %v3793 = vmax.f32 %v3791, %v3792
        %v3794 = vsub.f32 %v488, %v3793
        %v3795 = vsub.f32 %v493, %v3793
        %v3796 = vsub.f32 %v498, %v3793
        %v3797 = vsub.f32 %v503, %v3793
        %v3798 = vsub.f32 %v508, %v3793
        %v3799 = vsub.f32 %v513, %v3793
        %v3800 = vsub.f32 %v518, %v3793
        %v3801 = vsub.f32 %v523, %v3793
        %v3802 = vsub.f32 %v528, %v3793
        %v3803 = vsub.f32 %v533, %v3793
        %v3804 = vsub.f32 %v538, %v3793
        %v3805 = vsub.f32 %v543, %v3793
        %v3806 = vsub.f32 %v548, %v3793
        %v3807 = vsub.f32 %v553, %v3793
        %v3808 = vsub.f32 %v558, %v3793
        %v3809 = vsub.f32 %v563, %v3793
        %v3810 = vmul.f32 %v3794, 1.442695
        %v3811 = vpow.pop %v3810
        %v3812 = vmul.f32 %v3795, 1.442695
        %v3813 = vpow.pop %v3812
        %v3814 = vmul.f32 %v3796, 1.442695
        %v3815 = vpow.pop %v3814
        %v3816 = vmul.f32 %v3797, 1.442695
        %v3817 = vpow.pop %v3816
        %v3818 = vmul.f32 %v3798, 1.442695
        %v3819 = vpow.pop %v3818
        %v3820 = vmul.f32 %v3799, 1.442695
        %v3821 = vpow.pop %v3820
        %v3822 = vmul.f32 %v3800, 1.442695
        %v3823 = vpow.pop %v3822
        %v3824 = vmul.f32 %v3801, 1.442695
        %v3825 = vpow.pop %v3824
        %v3826 = vmul.f32 %v3802, 1.442695
        %v3827 = vpow.pop %v3826
        %v3828 = vmul.f32 %v3803, 1.442695
        %v3829 = vpow.pop %v3828
        %v3830 = vmul.f32 %v3804, 1.442695
        %v3831 = vpow.pop %v3830
        %v3832 = vmul.f32 %v3805, 1.442695
        %v3833 = vpow.pop %v3832
        %v3834 = vmul.f32 %v3806, 1.442695
        %v3835 = vpow.pop %v3834
        %v3836 = vmul.f32 %v3807, 1.442695
        %v3837 = vpow.pop %v3836
        %v3838 = vmul.f32 %v3808, 1.442695
        %v3839 = vpow.pop %v3838
        %v3840 = vmul.f32 %v3809, 1.442695
        %v3841 = vpow.pop %v3840
        %v3842 = vsel %vm842, %v3811, 0.0
        %v3843 = vsel %vm842, %v3813, 0.0
        %v3844 = vadd.f32 %v3842, %v3843
        %v3845 = vsel %vm842, %v3815, 0.0
        %v3846 = vadd.f32 %v3844, %v3845
        %v3847 = vsel %vm842, %v3817, 0.0
        %v3848 = vadd.f32 %v3846, %v3847
        %v3849 = vsel %vm842, %v3819, 0.0
        %v3850 = vadd.f32 %v3848, %v3849
        %v3851 = vsel %vm842, %v3821, 0.0
        %v3852 = vadd.f32 %v3850, %v3851
        %v3853 = vsel %vm842, %v3823, 0.0
        %v3854 = vadd.f32 %v3852, %v3853
        %v3855 = vsel %vm842, %v3825, 0.0
        %v3856 = vadd.f32 %v3854, %v3855
        %v3857 = vsel %vm842, %v3827, 0.0
        %v3858 = vadd.f32 %v3856, %v3857
        %v3859 = vsel %vm842, %v3829, 0.0
        %v3860 = vadd.f32 %v3858, %v3859
        %v3861 = vsel %vm842, %v3831, 0.0
        %v3862 = vadd.f32 %v3860, %v3861
        %v3863 = vsel %vm842, %v3833, 0.0
        %v3864 = vadd.f32 %v3862, %v3863
        %v3865 = vsel %vm842, %v3835, 0.0
        %v3866 = vadd.f32 %v3864, %v3865
        %v3867 = vsel %vm842, %v3837, 0.0
        %v3868 = vadd.f32 %v3866, %v3867
        %v3869 = vsel %vm842, %v3839, 0.0
        %v3870 = vadd.f32 %v3868, %v3869
        %v3871 = vsel %vm842, %v3841, 0.0
        %v3872 = vadd.f32 %v3870, %v3871
        %v3873 = vrot.slane %v3872, 4
        %v3874 = vadd.f32 %v3872, %v3873
        %v3875 = vrot.slane %v3874, 2
        %v3876 = vadd.f32 %v3874, %v3875
        %v3877 = vrot.slane %v3876, 1
        %v3878 = vadd.f32 %v3876, %v3877
        %v3879 = vrcp.pop %v3878
        %v3880 = vmul.f32 %v3811, %v3879
        %v3881 = vmul.f32 %v3813, %v3879
        %v3882 = vmul.f32 %v3815, %v3879
        %v3883 = vmul.f32 %v3817, %v3879
        %v3884 = vmul.f32 %v3819, %v3879
        %v3885 = vmul.f32 %v3821, %v3879
        %v3886 = vmul.f32 %v3823, %v3879
        %v3887 = vmul.f32 %v3825, %v3879
        %v3888 = vmul.f32 %v3827, %v3879
        %v3889 = vmul.f32 %v3829, %v3879
        %v3890 = vmul.f32 %v3831, %v3879
        %v3891 = vmul.f32 %v3833, %v3879
        %v3892 = vmul.f32 %v3835, %v3879
        %v3893 = vmul.f32 %v3837, %v3879
        %v3894 = vmul.f32 %v3839, %v3879
        %v3895 = vmul.f32 %v3841, %v3879
        %3896 = vxpose.xlu0.b32.start [1/16] %v3880, 128
        %3897 = vxpose.xlu0.b32.cont [2/16] %v3881, 128
        %3898 = vxpose.xlu0.b32.cont [3/16] %v3882, 128
        %3899 = vxpose.xlu0.b32.cont [4/16] %v3883, 128
        %3900 = vxpose.xlu0.b32.cont [5/16] %v3884, 128
        %3901 = vxpose.xlu0.b32.cont [6/16] %v3885, 128
        %3902 = vxpose.xlu0.b32.cont [7/16] %v3886, 128
        %3903 = vxpose.xlu0.b32.cont [8/16] %v3887, 128
        %3904 = vxpose.xlu0.b32.cont [9/16] %v3888, 128
        %3905 = vxpose.xlu0.b32.cont [10/16] %v3889, 128
        %3906 = vxpose.xlu0.b32.cont [11/16] %v3890, 128
        %3907 = vxpose.xlu0.b32.cont [12/16] %v3891, 128
        %3908 = vxpose.xlu0.b32.cont [13/16] %v3892, 128
        %3909 = vxpose.xlu0.b32.cont [14/16] %v3893, 128
        %3910 = vxpose.xlu0.b32.cont [15/16] %v3894, 128
        %3911 = vxpose.xlu0.b32.end [16/16] %v3895, 128
        %v3912 = vpop.trf.xlu0
        %v3913 = vpop.trf.xlu0
        %v3914 = vpop.trf.xlu0
        %v3915 = vpop.trf.xlu0
        %v3916 = vpop.trf.xlu0
        %v3917 = vpop.trf.xlu0
        %v3918 = vpop.trf.xlu0
        %v3919 = vpop.trf.xlu0
        %v3920 = vpop.trf.xlu0
        %v3921 = vpop.trf.xlu0
        %v3922 = vpop.trf.xlu0
        %v3923 = vpop.trf.xlu0
        %v3924 = vpop.trf.xlu0
        %v3925 = vpop.trf.xlu0
        %v3926 = vpop.trf.xlu0
        %v3927 = vpop.trf.xlu0
        %v3928 = vlaneseq
        %v3929 = vshrl.u32 %v3928, 7
        %v3930 = vsub.s32 0, %v3929
        %v3931 = vrot.slane %v3912, %v3930
        %3933 = vrot.lane.b32.xlu0 %v3931, 256
        %v3934 = vpop.permute.xlu0 %3933
        %s3936 = sor.u32 256, 8
        %3937 = vrot.lane.b32.xlu0 %v3931, %s3936
        %v3938 = vpop.permute.xlu0 %3937
        %s3940 = sor.u32 256, 16
        %3941 = vrot.lane.b32.xlu0 %v3931, %s3940
        %v3942 = vpop.permute.xlu0 %3941
        %s3944 = sor.u32 256, 24
        %3945 = vrot.lane.b32.xlu0 %v3931, %s3944
        %v3946 = vpop.permute.xlu0 %3945
        %s3948 = sor.u32 256, 32
        %3949 = vrot.lane.b32.xlu0 %v3931, %s3948
        %v3950 = vpop.permute.xlu0 %3949
        %s3952 = sor.u32 256, 40
        %3953 = vrot.lane.b32.xlu0 %v3931, %s3952
        %v3954 = vpop.permute.xlu0 %3953
        %s3956 = sor.u32 256, 48
        %3957 = vrot.lane.b32.xlu0 %v3931, %s3956
        %v3958 = vpop.permute.xlu0 %3957
        %s3960 = sor.u32 256, 56
        %3961 = vrot.lane.b32.xlu0 %v3931, %s3960
        %v3962 = vpop.permute.xlu0 %3961
        %s3964 = sor.u32 256, 64
        %3965 = vrot.lane.b32.xlu0 %v3931, %s3964
        %v3966 = vpop.permute.xlu0 %3965
        %s3968 = sor.u32 256, 72
        %3969 = vrot.lane.b32.xlu0 %v3931, %s3968
        %v3970 = vpop.permute.xlu0 %3969
        %s3972 = sor.u32 256, 80
        %3973 = vrot.lane.b32.xlu0 %v3931, %s3972
        %v3974 = vpop.permute.xlu0 %3973
        %s3976 = sor.u32 256, 88
        %3977 = vrot.lane.b32.xlu0 %v3931, %s3976
        %v3978 = vpop.permute.xlu0 %3977
        %s3980 = sor.u32 256, 96
        %3981 = vrot.lane.b32.xlu0 %v3931, %s3980
        %v3982 = vpop.permute.xlu0 %3981
        %s3984 = sor.u32 256, 104
        %3985 = vrot.lane.b32.xlu0 %v3931, %s3984
        %v3986 = vpop.permute.xlu0 %3985
        %s3988 = sor.u32 256, 112
        %3989 = vrot.lane.b32.xlu0 %v3931, %s3988
        %v3990 = vpop.permute.xlu0 %3989
        %s3992 = sor.u32 256, 120
        %3993 = vrot.lane.b32.xlu0 %v3931, %s3992
        %v3994 = vpop.permute.xlu0 %3993
        %v3995 = vmul.f32 %v3934, %v826
        %v3996 = vmul.f32 %v3938, %v827
        %v3997 = vmul.f32 %v3942, %v828
        %v3998 = vmul.f32 %v3946, %v829
        %v3999 = vmul.f32 %v3950, %v830
        %v4000 = vmul.f32 %v3954, %v831
        %v4001 = vmul.f32 %v3958, %v832
        %v4002 = vmul.f32 %v3962, %v833
        %v4003 = vmul.f32 %v3966, %v834
        %v4004 = vmul.f32 %v3970, %v835
        %v4005 = vmul.f32 %v3974, %v836
        %v4006 = vmul.f32 %v3978, %v837
        %v4007 = vmul.f32 %v3982, %v838
        %v4008 = vmul.f32 %v3986, %v839
        %v4009 = vmul.f32 %v3990, %v840
        %v4010 = vmul.f32 %v3994, %v841
        %4011 = vmatprep.subr.mxu0 0.0
        %4012 = vmatpush1.msra.mxu0 %v788
        %4013 = vmatprep.subr.mxu0 0.0
        %4014 = vmatpush1.msra.mxu0 %v783
        %4015 = vmatprep.subr.mxu0 0.0
        %4016 = vmatpush1.msra.mxu0 %v778
        %4017 = vmatprep.subr.mxu0 0.0
        %4018 = vmatpush1.msra.mxu0 %v773
        %4019 = vmatprep.subr.mxu0 0.0
        %4020 = vmatpush1.msra.mxu0 %v768
        %4021 = vmatprep.subr.mxu0 0.0
        %4022 = vmatpush1.msra.mxu0 %v763
        %4023 = vmatprep.subr.mxu0 0.0
        %4024 = vmatpush1.msra.mxu0 %v758
        %4025 = vmatprep.subr.mxu0 0.0
        %4026 = vmatpush1.msra.mxu0 %v753
        %4027 = vmatprep.subr.mxu0 0.0
        %4028 = vmatpush1.msra.mxu0 %v748
        %4029 = vmatprep.subr.mxu0 0.0
        %4030 = vmatpush1.msra.mxu0 %v743
        %4031 = vmatprep.subr.mxu0 0.0
        %4032 = vmatpush1.msra.mxu0 %v738
        %4033 = vmatprep.subr.mxu0 0.0
        %4034 = vmatpush1.msra.mxu0 %v733
        %4035 = vmatprep.subr.mxu0 0.0
        %4036 = vmatpush1.msra.mxu0 %v728
        %4037 = vmatprep.subr.mxu0 0.0
        %4038 = vmatpush1.msra.mxu0 %v723
        %4039 = vmatprep.subr.mxu0 0.0
        %4040 = vmatpush1.msra.mxu0 %v718
        %4041 = vmatprep.subr.mxu0 0.0
        %4042 = vmatpush1.msra.mxu0 %v713
        %4043 = vmatprep.subr.mxu0 0.0
        %4044 = vmatpush2.msra.mxu0 0.0
        %4045 = vmatprep.subr.mxu0 0.0
        %4046 = vmatpush2.msra.mxu0 0.0
        %4047 = vmatprep.subr.mxu0 0.0
        %4048 = vmatpush2.msra.mxu0 0.0
        %4049 = vmatprep.subr.mxu0 0.0
        %4050 = vmatpush2.msra.mxu0 0.0
        %4051 = vmatprep.subr.mxu0 0.0
        %4052 = vmatpush2.msra.mxu0 0.0
        %4053 = vmatprep.subr.mxu0 0.0
        %4054 = vmatpush2.msra.mxu0 0.0
        %4055 = vmatprep.subr.mxu0 0.0
        %4056 = vmatpush2.msra.mxu0 0.0
        %4057 = vmatprep.subr.mxu0 0.0
        %4058 = vmatpush2.msra.mxu0 0.0
        %4059 = vmatprep.subr.mxu0 0.0
        %4060 = vmatpush2.msra.mxu0 0.0
        %4061 = vmatprep.subr.mxu0 0.0
        %4062 = vmatpush2.msra.mxu0 0.0
        %4063 = vmatprep.subr.mxu0 0.0
        %4064 = vmatpush2.msra.mxu0 0.0
        %4065 = vmatprep.subr.mxu0 0.0
        %4066 = vmatpush2.msra.mxu0 0.0
        %4067 = vmatprep.subr.mxu0 0.0
        %4068 = vmatpush2.msra.mxu0 0.0
        %4069 = vmatprep.subr.mxu0 0.0
        %4070 = vmatpush2.msra.mxu0 0.0
        %4071 = vmatprep.subr.mxu0 0.0
        %4072 = vmatpush2.msra.mxu0 0.0
        %4073 = vmatprep.subr.mxu0 0.0
        %4074 = vmatpush2.msra.mxu0 0.0
        %4075 = vmatprep.mubr.f32.mxu0 0.0
        %4076 = vmatmul.mubr.f32.gmra.mxu0 %v3995
        %v4077 = vpop.f32.mrf.mxu0
        %v4078 = vadd.f32 0.0, %v4077
        %v4079 = vpop.f32.mrf.mxu0
        %4080 = vmatprep.mubr.f32.mxu0 0.0
        %4081 = vmatmul.mubr.f32.gmra.mxu0 %v3996
        %v4082 = vpop.f32.mrf.mxu0
        %v4083 = vadd.f32 0.0, %v4082
        %v4084 = vpop.f32.mrf.mxu0
        %4085 = vmatprep.mubr.f32.mxu0 0.0
        %4086 = vmatmul.mubr.f32.gmra.mxu0 %v3997
        %v4087 = vpop.f32.mrf.mxu0
        %v4088 = vadd.f32 0.0, %v4087
        %v4089 = vpop.f32.mrf.mxu0
        %4090 = vmatprep.mubr.f32.mxu0 0.0
        %4091 = vmatmul.mubr.f32.gmra.mxu0 %v3998
        %v4092 = vpop.f32.mrf.mxu0
        %v4093 = vadd.f32 0.0, %v4092
        %v4094 = vpop.f32.mrf.mxu0
        %4095 = vmatprep.mubr.f32.mxu0 0.0
        %4096 = vmatmul.mubr.f32.gmra.mxu0 %v3999
        %v4097 = vpop.f32.mrf.mxu0
        %v4098 = vadd.f32 0.0, %v4097
        %v4099 = vpop.f32.mrf.mxu0
        %4100 = vmatprep.mubr.f32.mxu0 0.0
        %4101 = vmatmul.mubr.f32.gmra.mxu0 %v4000
        %v4102 = vpop.f32.mrf.mxu0
        %v4103 = vadd.f32 0.0, %v4102
        %v4104 = vpop.f32.mrf.mxu0
        %4105 = vmatprep.mubr.f32.mxu0 0.0
        %4106 = vmatmul.mubr.f32.gmra.mxu0 %v4001
        %v4107 = vpop.f32.mrf.mxu0
        %v4108 = vadd.f32 0.0, %v4107
        %v4109 = vpop.f32.mrf.mxu0
        %4110 = vmatprep.mubr.f32.mxu0 0.0
        %4111 = vmatmul.mubr.f32.gmra.mxu0 %v4002
        %v4112 = vpop.f32.mrf.mxu0
        %v4113 = vadd.f32 0.0, %v4112
        %v4114 = vpop.f32.mrf.mxu0
        %4115 = vmatprep.mubr.f32.mxu0 0.0
        %4116 = vmatmul.mubr.f32.gmra.mxu0 %v4003
        %v4117 = vpop.f32.mrf.mxu0
        %v4118 = vadd.f32 0.0, %v4117
        %v4119 = vpop.f32.mrf.mxu0
        %4120 = vmatprep.mubr.f32.mxu0 0.0
        %4121 = vmatmul.mubr.f32.gmra.mxu0 %v4004
        %v4122 = vpop.f32.mrf.mxu0
        %v4123 = vadd.f32 0.0, %v4122
        %v4124 = vpop.f32.mrf.mxu0
        %4125 = vmatprep.mubr.f32.mxu0 0.0
        %4126 = vmatmul.mubr.f32.gmra.mxu0 %v4005
        %v4127 = vpop.f32.mrf.mxu0
        %v4128 = vadd.f32 0.0, %v4127
        %v4129 = vpop.f32.mrf.mxu0
        %4130 = vmatprep.mubr.f32.mxu0 0.0
        %4131 = vmatmul.mubr.f32.gmra.mxu0 %v4006
        %v4132 = vpop.f32.mrf.mxu0
        %v4133 = vadd.f32 0.0, %v4132
        %v4134 = vpop.f32.mrf.mxu0
        %4135 = vmatprep.mubr.f32.mxu0 0.0
        %4136 = vmatmul.mubr.f32.gmra.mxu0 %v4007
        %v4137 = vpop.f32.mrf.mxu0
        %v4138 = vadd.f32 0.0, %v4137
        %v4139 = vpop.f32.mrf.mxu0
        %4140 = vmatprep.mubr.f32.mxu0 0.0
        %4141 = vmatmul.mubr.f32.gmra.mxu0 %v4008
        %v4142 = vpop.f32.mrf.mxu0
        %v4143 = vadd.f32 0.0, %v4142
        %v4144 = vpop.f32.mrf.mxu0
        %4145 = vmatprep.mubr.f32.mxu0 0.0
        %4146 = vmatmul.mubr.f32.gmra.mxu0 %v4009
        %v4147 = vpop.f32.mrf.mxu0
        %v4148 = vadd.f32 0.0, %v4147
        %v4149 = vpop.f32.mrf.mxu0
        %4150 = vmatprep.mubr.f32.mxu0 0.0
        %4151 = vmatmul.mubr.f32.gmra.mxu0 %v4010
        %v4152 = vpop.f32.mrf.mxu0
        %v4153 = vadd.f32 0.0, %v4152
        %v4154 = vpop.f32.mrf.mxu0
        %4155 = vdwg.mxu0
        %v4156 = vlaneseq
        %v4157 = vshrl.u32 %v4156, 7
        %v4158 = vsub.s32 1, %v4157
        %v4159 = vrot.slane %v3912, %v4158
        %4161 = vrot.lane.b32.xlu0 %v4159, 256
        %v4162 = vpop.permute.xlu0 %4161
        %s4164 = sor.u32 256, 8
        %4165 = vrot.lane.b32.xlu0 %v4159, %s4164
        %v4166 = vpop.permute.xlu0 %4165
        %s4168 = sor.u32 256, 16
        %4169 = vrot.lane.b32.xlu0 %v4159, %s4168
        %v4170 = vpop.permute.xlu0 %4169
        %s4172 = sor.u32 256, 24
        %4173 = vrot.lane.b32.xlu0 %v4159, %s4172
        %v4174 = vpop.permute.xlu0 %4173
        %s4176 = sor.u32 256, 32
        %4177 = vrot.lane.b32.xlu0 %v4159, %s4176
        %v4178 = vpop.permute.xlu0 %4177
        %s4180 = sor.u32 256, 40
        %4181 = vrot.lane.b32.xlu0 %v4159, %s4180
        %v4182 = vpop.permute.xlu0 %4181
        %s4184 = sor.u32 256, 48
        %4185 = vrot.lane.b32.xlu0 %v4159, %s4184
        %v4186 = vpop.permute.xlu0 %4185
        %s4188 = sor.u32 256, 56
        %4189 = vrot.lane.b32.xlu0 %v4159, %s4188
        %v4190 = vpop.permute.xlu0 %4189
        %s4192 = sor.u32 256, 64
        %4193 = vrot.lane.b32.xlu0 %v4159, %s4192
        %v4194 = vpop.permute.xlu0 %4193
        %s4196 = sor.u32 256, 72
        %4197 = vrot.lane.b32.xlu0 %v4159, %s4196
        %v4198 = vpop.permute.xlu0 %4197
        %s4200 = sor.u32 256, 80
        %4201 = vrot.lane.b32.xlu0 %v4159, %s4200
        %v4202 = vpop.permute.xlu0 %4201
        %s4204 = sor.u32 256, 88
        %4205 = vrot.lane.b32.xlu0 %v4159, %s4204
        %v4206 = vpop.permute.xlu0 %4205
        %s4208 = sor.u32 256, 96
        %4209 = vrot.lane.b32.xlu0 %v4159, %s4208
        %v4210 = vpop.permute.xlu0 %4209
        %s4212 = sor.u32 256, 104
        %4213 = vrot.lane.b32.xlu0 %v4159, %s4212
        %v4214 = vpop.permute.xlu0 %4213
        %s4216 = sor.u32 256, 112
        %4217 = vrot.lane.b32.xlu0 %v4159, %s4216
        %v4218 = vpop.permute.xlu0 %4217
        %s4220 = sor.u32 256, 120
        %4221 = vrot.lane.b32.xlu0 %v4159, %s4220
        %v4222 = vpop.permute.xlu0 %4221
        %v4223 = vmul.f32 %v4162, %v826
        %v4224 = vmul.f32 %v4166, %v827
        %v4225 = vmul.f32 %v4170, %v828
        %v4226 = vmul.f32 %v4174, %v829
        %v4227 = vmul.f32 %v4178, %v830
        %v4228 = vmul.f32 %v4182, %v831
        %v4229 = vmul.f32 %v4186, %v832
        %v4230 = vmul.f32 %v4190, %v833
        %v4231 = vmul.f32 %v4194, %v834
        %v4232 = vmul.f32 %v4198, %v835
        %v4233 = vmul.f32 %v4202, %v836
        %v4234 = vmul.f32 %v4206, %v837
        %v4235 = vmul.f32 %v4210, %v838
        %v4236 = vmul.f32 %v4214, %v839
        %v4237 = vmul.f32 %v4218, %v840
        %v4238 = vmul.f32 %v4222, %v841
        %4255 = vrot.lane.b32.xlu0 %v713, 112
        %v4256 = vpop.permute.xlu0 %4255
        %4257 = vrot.lane.b32.xlu0 %v718, 112
        %v4258 = vpop.permute.xlu0 %4257
        %4259 = vrot.lane.b32.xlu0 %v723, 112
        %v4260 = vpop.permute.xlu0 %4259
        %4261 = vrot.lane.b32.xlu0 %v728, 112
        %v4262 = vpop.permute.xlu0 %4261
        %4263 = vrot.lane.b32.xlu0 %v733, 112
        %v4264 = vpop.permute.xlu0 %4263
        %4265 = vrot.lane.b32.xlu0 %v738, 112
        %v4266 = vpop.permute.xlu0 %4265
        %4267 = vrot.lane.b32.xlu0 %v743, 112
        %v4268 = vpop.permute.xlu0 %4267
        %4269 = vrot.lane.b32.xlu0 %v748, 112
        %v4270 = vpop.permute.xlu0 %4269
        %4271 = vrot.lane.b32.xlu0 %v753, 112
        %v4272 = vpop.permute.xlu0 %4271
        %4273 = vrot.lane.b32.xlu0 %v758, 112
        %v4274 = vpop.permute.xlu0 %4273
        %4275 = vrot.lane.b32.xlu0 %v763, 112
        %v4276 = vpop.permute.xlu0 %4275
        %4277 = vrot.lane.b32.xlu0 %v768, 112
        %v4278 = vpop.permute.xlu0 %4277
        %4279 = vrot.lane.b32.xlu0 %v773, 112
        %v4280 = vpop.permute.xlu0 %4279
        %4281 = vrot.lane.b32.xlu0 %v778, 112
        %v4282 = vpop.permute.xlu0 %4281
        %4283 = vrot.lane.b32.xlu0 %v783, 112
        %v4284 = vpop.permute.xlu0 %4283
        %4285 = vrot.lane.b32.xlu0 %v788, 112
        %v4286 = vpop.permute.xlu0 %4285
        %4303 = vmatprep.subr.mxu0 0.0
        %4304 = vmatpush1.msra.mxu0 %v4286
        %4305 = vmatprep.subr.mxu0 0.0
        %4306 = vmatpush1.msra.mxu0 %v4284
        %4307 = vmatprep.subr.mxu0 0.0
        %4308 = vmatpush1.msra.mxu0 %v4282
        %4309 = vmatprep.subr.mxu0 0.0
        %4310 = vmatpush1.msra.mxu0 %v4280
        %4311 = vmatprep.subr.mxu0 0.0
        %4312 = vmatpush1.msra.mxu0 %v4278
        %4313 = vmatprep.subr.mxu0 0.0
        %4314 = vmatpush1.msra.mxu0 %v4276
        %4315 = vmatprep.subr.mxu0 0.0
        %4316 = vmatpush1.msra.mxu0 %v4274
        %4317 = vmatprep.subr.mxu0 0.0
        %4318 = vmatpush1.msra.mxu0 %v4272
        %4319 = vmatprep.subr.mxu0 0.0
        %4320 = vmatpush1.msra.mxu0 %v4270
        %4321 = vmatprep.subr.mxu0 0.0
        %4322 = vmatpush1.msra.mxu0 %v4268
        %4323 = vmatprep.subr.mxu0 0.0
        %4324 = vmatpush1.msra.mxu0 %v4266
        %4325 = vmatprep.subr.mxu0 0.0
        %4326 = vmatpush1.msra.mxu0 %v4264
        %4327 = vmatprep.subr.mxu0 0.0
        %4328 = vmatpush1.msra.mxu0 %v4262
        %4329 = vmatprep.subr.mxu0 0.0
        %4330 = vmatpush1.msra.mxu0 %v4260
        %4331 = vmatprep.subr.mxu0 0.0
        %4332 = vmatpush1.msra.mxu0 %v4258
        %4333 = vmatprep.subr.mxu0 0.0
        %4334 = vmatpush1.msra.mxu0 %v4256
        %4335 = vmatprep.subr.mxu0 0.0
        %4336 = vmatpush2.msra.mxu0 0.0
        %4337 = vmatprep.subr.mxu0 0.0
        %4338 = vmatpush2.msra.mxu0 0.0
        %4339 = vmatprep.subr.mxu0 0.0
        %4340 = vmatpush2.msra.mxu0 0.0
        %4341 = vmatprep.subr.mxu0 0.0
        %4342 = vmatpush2.msra.mxu0 0.0
        %4343 = vmatprep.subr.mxu0 0.0
        %4344 = vmatpush2.msra.mxu0 0.0
        %4345 = vmatprep.subr.mxu0 0.0
        %4346 = vmatpush2.msra.mxu0 0.0
        %4347 = vmatprep.subr.mxu0 0.0
        %4348 = vmatpush2.msra.mxu0 0.0
        %4349 = vmatprep.subr.mxu0 0.0
        %4350 = vmatpush2.msra.mxu0 0.0
        %4351 = vmatprep.subr.mxu0 0.0
        %4352 = vmatpush2.msra.mxu0 0.0
        %4353 = vmatprep.subr.mxu0 0.0
        %4354 = vmatpush2.msra.mxu0 0.0
        %4355 = vmatprep.subr.mxu0 0.0
        %4356 = vmatpush2.msra.mxu0 0.0
        %4357 = vmatprep.subr.mxu0 0.0
        %4358 = vmatpush2.msra.mxu0 0.0
        %4359 = vmatprep.subr.mxu0 0.0
        %4360 = vmatpush2.msra.mxu0 0.0
        %4361 = vmatprep.subr.mxu0 0.0
        %4362 = vmatpush2.msra.mxu0 0.0
        %4363 = vmatprep.subr.mxu0 0.0
        %4364 = vmatpush2.msra.mxu0 0.0
        %4365 = vmatprep.subr.mxu0 0.0
        %4366 = vmatpush2.msra.mxu0 0.0
        %4367 = vmatprep.mubr.f32.mxu0 0.0
        %4368 = vmatmul.mubr.f32.gmra.mxu0 %v4223
        %v4369 = vpop.f32.mrf.mxu0
        %v4370 = vadd.f32 0.0, %v4369
        %v4371 = vpop.f32.mrf.mxu0
        %4372 = vmatprep.mubr.f32.mxu0 0.0
        %4373 = vmatmul.mubr.f32.gmra.mxu0 %v4224
        %v4374 = vpop.f32.mrf.mxu0
        %v4375 = vadd.f32 0.0, %v4374
        %v4376 = vpop.f32.mrf.mxu0
        %4377 = vmatprep.mubr.f32.mxu0 0.0
        %4378 = vmatmul.mubr.f32.gmra.mxu0 %v4225
        %v4379 = vpop.f32.mrf.mxu0
        %v4380 = vadd.f32 0.0, %v4379
        %v4381 = vpop.f32.mrf.mxu0
        %4382 = vmatprep.mubr.f32.mxu0 0.0
        %4383 = vmatmul.mubr.f32.gmra.mxu0 %v4226
        %v4384 = vpop.f32.mrf.mxu0
        %v4385 = vadd.f32 0.0, %v4384
        %v4386 = vpop.f32.mrf.mxu0
        %4387 = vmatprep.mubr.f32.mxu0 0.0
        %4388 = vmatmul.mubr.f32.gmra.mxu0 %v4227
        %v4389 = vpop.f32.mrf.mxu0
        %v4390 = vadd.f32 0.0, %v4389
        %v4391 = vpop.f32.mrf.mxu0
        %4392 = vmatprep.mubr.f32.mxu0 0.0
        %4393 = vmatmul.mubr.f32.gmra.mxu0 %v4228
        %v4394 = vpop.f32.mrf.mxu0
        %v4395 = vadd.f32 0.0, %v4394
        %v4396 = vpop.f32.mrf.mxu0
        %4397 = vmatprep.mubr.f32.mxu0 0.0
        %4398 = vmatmul.mubr.f32.gmra.mxu0 %v4229
        %v4399 = vpop.f32.mrf.mxu0
        %v4400 = vadd.f32 0.0, %v4399
        %v4401 = vpop.f32.mrf.mxu0
        %4402 = vmatprep.mubr.f32.mxu0 0.0
        %4403 = vmatmul.mubr.f32.gmra.mxu0 %v4230
        %v4404 = vpop.f32.mrf.mxu0
        %v4405 = vadd.f32 0.0, %v4404
        %v4406 = vpop.f32.mrf.mxu0
        %4407 = vmatprep.mubr.f32.mxu0 0.0
        %4408 = vmatmul.mubr.f32.gmra.mxu0 %v4231
        %v4409 = vpop.f32.mrf.mxu0
        %v4410 = vadd.f32 0.0, %v4409
        %v4411 = vpop.f32.mrf.mxu0
        %4412 = vmatprep.mubr.f32.mxu0 0.0
        %4413 = vmatmul.mubr.f32.gmra.mxu0 %v4232
        %v4414 = vpop.f32.mrf.mxu0
        %v4415 = vadd.f32 0.0, %v4414
        %v4416 = vpop.f32.mrf.mxu0
        %4417 = vmatprep.mubr.f32.mxu0 0.0
        %4418 = vmatmul.mubr.f32.gmra.mxu0 %v4233
        %v4419 = vpop.f32.mrf.mxu0
        %v4420 = vadd.f32 0.0, %v4419
        %v4421 = vpop.f32.mrf.mxu0
        %4422 = vmatprep.mubr.f32.mxu0 0.0
        %4423 = vmatmul.mubr.f32.gmra.mxu0 %v4234
        %v4424 = vpop.f32.mrf.mxu0
        %v4425 = vadd.f32 0.0, %v4424
        %v4426 = vpop.f32.mrf.mxu0
        %4427 = vmatprep.mubr.f32.mxu0 0.0
        %4428 = vmatmul.mubr.f32.gmra.mxu0 %v4235
        %v4429 = vpop.f32.mrf.mxu0
        %v4430 = vadd.f32 0.0, %v4429
        %v4431 = vpop.f32.mrf.mxu0
        %4432 = vmatprep.mubr.f32.mxu0 0.0
        %4433 = vmatmul.mubr.f32.gmra.mxu0 %v4236
        %v4434 = vpop.f32.mrf.mxu0
        %v4435 = vadd.f32 0.0, %v4434
        %v4436 = vpop.f32.mrf.mxu0
        %4437 = vmatprep.mubr.f32.mxu0 0.0
        %4438 = vmatmul.mubr.f32.gmra.mxu0 %v4237
        %v4439 = vpop.f32.mrf.mxu0
        %v4440 = vadd.f32 0.0, %v4439
        %v4441 = vpop.f32.mrf.mxu0
        %4442 = vmatprep.mubr.f32.mxu0 0.0
        %4443 = vmatmul.mubr.f32.gmra.mxu0 %v4238
        %v4444 = vpop.f32.mrf.mxu0
        %v4445 = vadd.f32 0.0, %v4444
        %v4446 = vpop.f32.mrf.mxu0
        %4447 = vdwg.mxu0
        %v4448 = vlaneseq
        %v4449 = vshrl.u32 %v4448, 7
        %v4450 = vsub.s32 2, %v4449
        %v4451 = vrot.slane %v3912, %v4450
        %4453 = vrot.lane.b32.xlu0 %v4451, 256
        %v4454 = vpop.permute.xlu0 %4453
        %s4456 = sor.u32 256, 8
        %4457 = vrot.lane.b32.xlu0 %v4451, %s4456
        %v4458 = vpop.permute.xlu0 %4457
        %s4460 = sor.u32 256, 16
        %4461 = vrot.lane.b32.xlu0 %v4451, %s4460
        %v4462 = vpop.permute.xlu0 %4461
        %s4464 = sor.u32 256, 24
        %4465 = vrot.lane.b32.xlu0 %v4451, %s4464
        %v4466 = vpop.permute.xlu0 %4465
        %s4468 = sor.u32 256, 32
        %4469 = vrot.lane.b32.xlu0 %v4451, %s4468
        %v4470 = vpop.permute.xlu0 %4469
        %s4472 = sor.u32 256, 40
        %4473 = vrot.lane.b32.xlu0 %v4451, %s4472
        %v4474 = vpop.permute.xlu0 %4473
        %s4476 = sor.u32 256, 48
        %4477 = vrot.lane.b32.xlu0 %v4451, %s4476
        %v4478 = vpop.permute.xlu0 %4477
        %s4480 = sor.u32 256, 56
        %4481 = vrot.lane.b32.xlu0 %v4451, %s4480
        %v4482 = vpop.permute.xlu0 %4481
        %s4484 = sor.u32 256, 64
        %4485 = vrot.lane.b32.xlu0 %v4451, %s4484
        %v4486 = vpop.permute.xlu0 %4485
        %s4488 = sor.u32 256, 72
        %4489 = vrot.lane.b32.xlu0 %v4451, %s4488
        %v4490 = vpop.permute.xlu0 %4489
        %s4492 = sor.u32 256, 80
        %4493 = vrot.lane.b32.xlu0 %v4451, %s4492
        %v4494 = vpop.permute.xlu0 %4493
        %s4496 = sor.u32 256, 88
        %4497 = vrot.lane.b32.xlu0 %v4451, %s4496
        %v4498 = vpop.permute.xlu0 %4497
        %s4500 = sor.u32 256, 96
        %4501 = vrot.lane.b32.xlu0 %v4451, %s4500
        %v4502 = vpop.permute.xlu0 %4501
        %s4504 = sor.u32 256, 104
        %4505 = vrot.lane.b32.xlu0 %v4451, %s4504
        %v4506 = vpop.permute.xlu0 %4505
        %s4508 = sor.u32 256, 112
        %4509 = vrot.lane.b32.xlu0 %v4451, %s4508
        %v4510 = vpop.permute.xlu0 %4509
        %s4512 = sor.u32 256, 120
        %4513 = vrot.lane.b32.xlu0 %v4451, %s4512
        %v4514 = vpop.permute.xlu0 %4513
        %v4515 = vmul.f32 %v4454, %v826
        %v4516 = vmul.f32 %v4458, %v827
        %v4517 = vmul.f32 %v4462, %v828
        %v4518 = vmul.f32 %v4466, %v829
        %v4519 = vmul.f32 %v4470, %v830
        %v4520 = vmul.f32 %v4474, %v831
        %v4521 = vmul.f32 %v4478, %v832
        %v4522 = vmul.f32 %v4482, %v833
        %v4523 = vmul.f32 %v4486, %v834
        %v4524 = vmul.f32 %v4490, %v835
        %v4525 = vmul.f32 %v4494, %v836
        %v4526 = vmul.f32 %v4498, %v837
        %v4527 = vmul.f32 %v4502, %v838
        %v4528 = vmul.f32 %v4506, %v839
        %v4529 = vmul.f32 %v4510, %v840
        %v4530 = vmul.f32 %v4514, %v841
        %4531 = vrot.lane.b32.xlu0 %v713, 96
        %v4532 = vpop.permute.xlu0 %4531
        %4533 = vrot.lane.b32.xlu0 %v718, 96
        %v4534 = vpop.permute.xlu0 %4533
        %4535 = vrot.lane.b32.xlu0 %v723, 96
        %v4536 = vpop.permute.xlu0 %4535
        %4537 = vrot.lane.b32.xlu0 %v728, 96
        %v4538 = vpop.permute.xlu0 %4537
        %4539 = vrot.lane.b32.xlu0 %v733, 96
        %v4540 = vpop.permute.xlu0 %4539
        %4541 = vrot.lane.b32.xlu0 %v738, 96
        %v4542 = vpop.permute.xlu0 %4541
        %4543 = vrot.lane.b32.xlu0 %v743, 96
        %v4544 = vpop.permute.xlu0 %4543
        %4545 = vrot.lane.b32.xlu0 %v748, 96
        %v4546 = vpop.permute.xlu0 %4545
        %4547 = vrot.lane.b32.xlu0 %v753, 96
        %v4548 = vpop.permute.xlu0 %4547
        %4549 = vrot.lane.b32.xlu0 %v758, 96
        %v4550 = vpop.permute.xlu0 %4549
        %4551 = vrot.lane.b32.xlu0 %v763, 96
        %v4552 = vpop.permute.xlu0 %4551
        %4553 = vrot.lane.b32.xlu0 %v768, 96
        %v4554 = vpop.permute.xlu0 %4553
        %4555 = vrot.lane.b32.xlu0 %v773, 96
        %v4556 = vpop.permute.xlu0 %4555
        %4557 = vrot.lane.b32.xlu0 %v778, 96
        %v4558 = vpop.permute.xlu0 %4557
        %4559 = vrot.lane.b32.xlu0 %v783, 96
        %v4560 = vpop.permute.xlu0 %4559
        %4561 = vrot.lane.b32.xlu0 %v788, 96
        %v4562 = vpop.permute.xlu0 %4561
        %4579 = vmatprep.subr.mxu0 0.0
        %4580 = vmatpush1.msra.mxu0 %v4562
        %4581 = vmatprep.subr.mxu0 0.0
        %4582 = vmatpush1.msra.mxu0 %v4560
        %4583 = vmatprep.subr.mxu0 0.0
        %4584 = vmatpush1.msra.mxu0 %v4558
        %4585 = vmatprep.subr.mxu0 0.0
        %4586 = vmatpush1.msra.mxu0 %v4556
        %4587 = vmatprep.subr.mxu0 0.0
        %4588 = vmatpush1.msra.mxu0 %v4554
        %4589 = vmatprep.subr.mxu0 0.0
        %4590 = vmatpush1.msra.mxu0 %v4552
        %4591 = vmatprep.subr.mxu0 0.0
        %4592 = vmatpush1.msra.mxu0 %v4550
        %4593 = vmatprep.subr.mxu0 0.0
        %4594 = vmatpush1.msra.mxu0 %v4548
        %4595 = vmatprep.subr.mxu0 0.0
        %4596 = vmatpush1.msra.mxu0 %v4546
        %4597 = vmatprep.subr.mxu0 0.0
        %4598 = vmatpush1.msra.mxu0 %v4544
        %4599 = vmatprep.subr.mxu0 0.0
        %4600 = vmatpush1.msra.mxu0 %v4542
        %4601 = vmatprep.subr.mxu0 0.0
        %4602 = vmatpush1.msra.mxu0 %v4540
        %4603 = vmatprep.subr.mxu0 0.0
        %4604 = vmatpush1.msra.mxu0 %v4538
        %4605 = vmatprep.subr.mxu0 0.0
        %4606 = vmatpush1.msra.mxu0 %v4536
        %4607 = vmatprep.subr.mxu0 0.0
        %4608 = vmatpush1.msra.mxu0 %v4534
        %4609 = vmatprep.subr.mxu0 0.0
        %4610 = vmatpush1.msra.mxu0 %v4532
        %4611 = vmatprep.subr.mxu0 0.0
        %4612 = vmatpush2.msra.mxu0 0.0
        %4613 = vmatprep.subr.mxu0 0.0
        %4614 = vmatpush2.msra.mxu0 0.0
        %4615 = vmatprep.subr.mxu0 0.0
        %4616 = vmatpush2.msra.mxu0 0.0
        %4617 = vmatprep.subr.mxu0 0.0
        %4618 = vmatpush2.msra.mxu0 0.0
        %4619 = vmatprep.subr.mxu0 0.0
        %4620 = vmatpush2.msra.mxu0 0.0
        %4621 = vmatprep.subr.mxu0 0.0
        %4622 = vmatpush2.msra.mxu0 0.0
        %4623 = vmatprep.subr.mxu0 0.0
        %4624 = vmatpush2.msra.mxu0 0.0
        %4625 = vmatprep.subr.mxu0 0.0
        %4626 = vmatpush2.msra.mxu0 0.0
        %4627 = vmatprep.subr.mxu0 0.0
        %4628 = vmatpush2.msra.mxu0 0.0
        %4629 = vmatprep.subr.mxu0 0.0
        %4630 = vmatpush2.msra.mxu0 0.0
        %4631 = vmatprep.subr.mxu0 0.0
        %4632 = vmatpush2.msra.mxu0 0.0
        %4633 = vmatprep.subr.mxu0 0.0
        %4634 = vmatpush2.msra.mxu0 0.0
        %4635 = vmatprep.subr.mxu0 0.0
        %4636 = vmatpush2.msra.mxu0 0.0
        %4637 = vmatprep.subr.mxu0 0.0
        %4638 = vmatpush2.msra.mxu0 0.0
        %4639 = vmatprep.subr.mxu0 0.0
        %4640 = vmatpush2.msra.mxu0 0.0
        %4641 = vmatprep.subr.mxu0 0.0
        %4642 = vmatpush2.msra.mxu0 0.0
        %4643 = vmatprep.mubr.f32.mxu0 0.0
        %4644 = vmatmul.mubr.f32.gmra.mxu0 %v4515
        %v4645 = vpop.f32.mrf.mxu0
        %v4646 = vadd.f32 0.0, %v4645
        %v4647 = vpop.f32.mrf.mxu0
        %4648 = vmatprep.mubr.f32.mxu0 0.0
        %4649 = vmatmul.mubr.f32.gmra.mxu0 %v4516
        %v4650 = vpop.f32.mrf.mxu0
        %v4651 = vadd.f32 0.0, %v4650
        %v4652 = vpop.f32.mrf.mxu0
        %4653 = vmatprep.mubr.f32.mxu0 0.0
        %4654 = vmatmul.mubr.f32.gmra.mxu0 %v4517
        %v4655 = vpop.f32.mrf.mxu0
        %v4656 = vadd.f32 0.0, %v4655
        %v4657 = vpop.f32.mrf.mxu0
        %4658 = vmatprep.mubr.f32.mxu0 0.0
        %4659 = vmatmul.mubr.f32.gmra.mxu0 %v4518
        %v4660 = vpop.f32.mrf.mxu0
        %v4661 = vadd.f32 0.0, %v4660
        %v4662 = vpop.f32.mrf.mxu0
        %4663 = vmatprep.mubr.f32.mxu0 0.0
        %4664 = vmatmul.mubr.f32.gmra.mxu0 %v4519
        %v4665 = vpop.f32.mrf.mxu0
        %v4666 = vadd.f32 0.0, %v4665
        %v4667 = vpop.f32.mrf.mxu0
        %4668 = vmatprep.mubr.f32.mxu0 0.0
        %4669 = vmatmul.mubr.f32.gmra.mxu0 %v4520
        %v4670 = vpop.f32.mrf.mxu0
        %v4671 = vadd.f32 0.0, %v4670
        %v4672 = vpop.f32.mrf.mxu0
        %4673 = vmatprep.mubr.f32.mxu0 0.0
        %4674 = vmatmul.mubr.f32.gmra.mxu0 %v4521
        %v4675 = vpop.f32.mrf.mxu0
        %v4676 = vadd.f32 0.0, %v4675
        %v4677 = vpop.f32.mrf.mxu0
        %4678 = vmatprep.mubr.f32.mxu0 0.0
        %4679 = vmatmul.mubr.f32.gmra.mxu0 %v4522
        %v4680 = vpop.f32.mrf.mxu0
        %v4681 = vadd.f32 0.0, %v4680
        %v4682 = vpop.f32.mrf.mxu0
        %4683 = vmatprep.mubr.f32.mxu0 0.0
        %4684 = vmatmul.mubr.f32.gmra.mxu0 %v4523
        %v4685 = vpop.f32.mrf.mxu0
        %v4686 = vadd.f32 0.0, %v4685
        %v4687 = vpop.f32.mrf.mxu0
        %4688 = vmatprep.mubr.f32.mxu0 0.0
        %4689 = vmatmul.mubr.f32.gmra.mxu0 %v4524
        %v4690 = vpop.f32.mrf.mxu0
        %v4691 = vadd.f32 0.0, %v4690
        %v4692 = vpop.f32.mrf.mxu0
        %4693 = vmatprep.mubr.f32.mxu0 0.0
        %4694 = vmatmul.mubr.f32.gmra.mxu0 %v4525
        %v4695 = vpop.f32.mrf.mxu0
        %v4696 = vadd.f32 0.0, %v4695
        %v4697 = vpop.f32.mrf.mxu0
        %4698 = vmatprep.mubr.f32.mxu0 0.0
        %4699 = vmatmul.mubr.f32.gmra.mxu0 %v4526
        %v4700 = vpop.f32.mrf.mxu0
        %v4701 = vadd.f32 0.0, %v4700
        %v4702 = vpop.f32.mrf.mxu0
        %4703 = vmatprep.mubr.f32.mxu0 0.0
        %4704 = vmatmul.mubr.f32.gmra.mxu0 %v4527
        %v4705 = vpop.f32.mrf.mxu0
        %v4706 = vadd.f32 0.0, %v4705
        %v4707 = vpop.f32.mrf.mxu0
        %4708 = vmatprep.mubr.f32.mxu0 0.0
        %4709 = vmatmul.mubr.f32.gmra.mxu0 %v4528
        %v4710 = vpop.f32.mrf.mxu0
        %v4711 = vadd.f32 0.0, %v4710
        %v4712 = vpop.f32.mrf.mxu0
        %4713 = vmatprep.mubr.f32.mxu0 0.0
        %4714 = vmatmul.mubr.f32.gmra.mxu0 %v4529
        %v4715 = vpop.f32.mrf.mxu0
        %v4716 = vadd.f32 0.0, %v4715
        %v4717 = vpop.f32.mrf.mxu0
        %4718 = vmatprep.mubr.f32.mxu0 0.0
        %4719 = vmatmul.mubr.f32.gmra.mxu0 %v4530
        %v4720 = vpop.f32.mrf.mxu0
        %v4721 = vadd.f32 0.0, %v4720
        %v4722 = vpop.f32.mrf.mxu0
        %4723 = vdwg.mxu0
        %v4724 = vlaneseq
        %v4725 = vshrl.u32 %v4724, 7
        %v4726 = vsub.s32 3, %v4725
        %v4727 = vrot.slane %v3912, %v4726
        %4729 = vrot.lane.b32.xlu0 %v4727, 256
        %v4730 = vpop.permute.xlu0 %4729
        %s4732 = sor.u32 256, 8
        %4733 = vrot.lane.b32.xlu0 %v4727, %s4732
        %v4734 = vpop.permute.xlu0 %4733
        %s4736 = sor.u32 256, 16
        %4737 = vrot.lane.b32.xlu0 %v4727, %s4736
        %v4738 = vpop.permute.xlu0 %4737
        %s4740 = sor.u32 256, 24
        %4741 = vrot.lane.b32.xlu0 %v4727, %s4740
        %v4742 = vpop.permute.xlu0 %4741
        %s4744 = sor.u32 256, 32
        %4745 = vrot.lane.b32.xlu0 %v4727, %s4744
        %v4746 = vpop.permute.xlu0 %4745
        %s4748 = sor.u32 256, 40
        %4749 = vrot.lane.b32.xlu0 %v4727, %s4748
        %v4750 = vpop.permute.xlu0 %4749
        %s4752 = sor.u32 256, 48
        %4753 = vrot.lane.b32.xlu0 %v4727, %s4752
        %v4754 = vpop.permute.xlu0 %4753
        %s4756 = sor.u32 256, 56
        %4757 = vrot.lane.b32.xlu0 %v4727, %s4756
        %v4758 = vpop.permute.xlu0 %4757
        %s4760 = sor.u32 256, 64
        %4761 = vrot.lane.b32.xlu0 %v4727, %s4760
        %v4762 = vpop.permute.xlu0 %4761
        %s4764 = sor.u32 256, 72
        %4765 = vrot.lane.b32.xlu0 %v4727, %s4764
        %v4766 = vpop.permute.xlu0 %4765
        %s4768 = sor.u32 256, 80
        %4769 = vrot.lane.b32.xlu0 %v4727, %s4768
        %v4770 = vpop.permute.xlu0 %4769
        %s4772 = sor.u32 256, 88
        %4773 = vrot.lane.b32.xlu0 %v4727, %s4772
        %v4774 = vpop.permute.xlu0 %4773
        %s4776 = sor.u32 256, 96
        %4777 = vrot.lane.b32.xlu0 %v4727, %s4776
        %v4778 = vpop.permute.xlu0 %4777
        %s4780 = sor.u32 256, 104
        %4781 = vrot.lane.b32.xlu0 %v4727, %s4780
        %v4782 = vpop.permute.xlu0 %4781
        %s4784 = sor.u32 256, 112
        %4785 = vrot.lane.b32.xlu0 %v4727, %s4784
        %v4786 = vpop.permute.xlu0 %4785
        %s4788 = sor.u32 256, 120
        %4789 = vrot.lane.b32.xlu0 %v4727, %s4788
        %v4790 = vpop.permute.xlu0 %4789
        %v4791 = vmul.f32 %v4730, %v826
        %v4792 = vmul.f32 %v4734, %v827
        %v4793 = vmul.f32 %v4738, %v828
        %v4794 = vmul.f32 %v4742, %v829
        %v4795 = vmul.f32 %v4746, %v830
        %v4796 = vmul.f32 %v4750, %v831
        %v4797 = vmul.f32 %v4754, %v832
        %v4798 = vmul.f32 %v4758, %v833
        %v4799 = vmul.f32 %v4762, %v834
        %v4800 = vmul.f32 %v4766, %v835
        %v4801 = vmul.f32 %v4770, %v836
        %v4802 = vmul.f32 %v4774, %v837
        %v4803 = vmul.f32 %v4778, %v838
        %v4804 = vmul.f32 %v4782, %v839
        %v4805 = vmul.f32 %v4786, %v840
        %v4806 = vmul.f32 %v4790, %v841
        %4807 = vrot.lane.b32.xlu0 %v713, 80
        %v4808 = vpop.permute.xlu0 %4807
        %4809 = vrot.lane.b32.xlu0 %v718, 80
        %v4810 = vpop.permute.xlu0 %4809
        %4811 = vrot.lane.b32.xlu0 %v723, 80
        %v4812 = vpop.permute.xlu0 %4811
        %4813 = vrot.lane.b32.xlu0 %v728, 80
        %v4814 = vpop.permute.xlu0 %4813
        %4815 = vrot.lane.b32.xlu0 %v733, 80
        %v4816 = vpop.permute.xlu0 %4815
        %4817 = vrot.lane.b32.xlu0 %v738, 80
        %v4818 = vpop.permute.xlu0 %4817
        %4819 = vrot.lane.b32.xlu0 %v743, 80
        %v4820 = vpop.permute.xlu0 %4819
        %4821 = vrot.lane.b32.xlu0 %v748, 80
        %v4822 = vpop.permute.xlu0 %4821
        %4823 = vrot.lane.b32.xlu0 %v753, 80
        %v4824 = vpop.permute.xlu0 %4823
        %4825 = vrot.lane.b32.xlu0 %v758, 80
        %v4826 = vpop.permute.xlu0 %4825
        %4827 = vrot.lane.b32.xlu0 %v763, 80
        %v4828 = vpop.permute.xlu0 %4827
        %4829 = vrot.lane.b32.xlu0 %v768, 80
        %v4830 = vpop.permute.xlu0 %4829
        %4831 = vrot.lane.b32.xlu0 %v773, 80
        %v4832 = vpop.permute.xlu0 %4831
        %4833 = vrot.lane.b32.xlu0 %v778, 80
        %v4834 = vpop.permute.xlu0 %4833
        %4835 = vrot.lane.b32.xlu0 %v783, 80
        %v4836 = vpop.permute.xlu0 %4835
        %4837 = vrot.lane.b32.xlu0 %v788, 80
        %v4838 = vpop.permute.xlu0 %4837
        %4855 = vmatprep.subr.mxu0 0.0
        %4856 = vmatpush1.msra.mxu0 %v4838
        %4857 = vmatprep.subr.mxu0 0.0
        %4858 = vmatpush1.msra.mxu0 %v4836
        %4859 = vmatprep.subr.mxu0 0.0
        %4860 = vmatpush1.msra.mxu0 %v4834
        %4861 = vmatprep.subr.mxu0 0.0
        %4862 = vmatpush1.msra.mxu0 %v4832
        %4863 = vmatprep.subr.mxu0 0.0
        %4864 = vmatpush1.msra.mxu0 %v4830
        %4865 = vmatprep.subr.mxu0 0.0
        %4866 = vmatpush1.msra.mxu0 %v4828
        %4867 = vmatprep.subr.mxu0 0.0
        %4868 = vmatpush1.msra.mxu0 %v4826
        %4869 = vmatprep.subr.mxu0 0.0
        %4870 = vmatpush1.msra.mxu0 %v4824
        %4871 = vmatprep.subr.mxu0 0.0
        %4872 = vmatpush1.msra.mxu0 %v4822
        %4873 = vmatprep.subr.mxu0 0.0
        %4874 = vmatpush1.msra.mxu0 %v4820
        %4875 = vmatprep.subr.mxu0 0.0
        %4876 = vmatpush1.msra.mxu0 %v4818
        %4877 = vmatprep.subr.mxu0 0.0
        %4878 = vmatpush1.msra.mxu0 %v4816
        %4879 = vmatprep.subr.mxu0 0.0
        %4880 = vmatpush1.msra.mxu0 %v4814
        %4881 = vmatprep.subr.mxu0 0.0
        %4882 = vmatpush1.msra.mxu0 %v4812
        %4883 = vmatprep.subr.mxu0 0.0
        %4884 = vmatpush1.msra.mxu0 %v4810
        %4885 = vmatprep.subr.mxu0 0.0
        %4886 = vmatpush1.msra.mxu0 %v4808
        %4887 = vmatprep.subr.mxu0 0.0
        %4888 = vmatpush2.msra.mxu0 0.0
        %4889 = vmatprep.subr.mxu0 0.0
        %4890 = vmatpush2.msra.mxu0 0.0
        %4891 = vmatprep.subr.mxu0 0.0
        %4892 = vmatpush2.msra.mxu0 0.0
        %4893 = vmatprep.subr.mxu0 0.0
        %4894 = vmatpush2.msra.mxu0 0.0
        %4895 = vmatprep.subr.mxu0 0.0
        %4896 = vmatpush2.msra.mxu0 0.0
        %4897 = vmatprep.subr.mxu0 0.0
        %4898 = vmatpush2.msra.mxu0 0.0
        %4899 = vmatprep.subr.mxu0 0.0
        %4900 = vmatpush2.msra.mxu0 0.0
        %4901 = vmatprep.subr.mxu0 0.0
        %4902 = vmatpush2.msra.mxu0 0.0
        %4903 = vmatprep.subr.mxu0 0.0
        %4904 = vmatpush2.msra.mxu0 0.0
        %4905 = vmatprep.subr.mxu0 0.0
        %4906 = vmatpush2.msra.mxu0 0.0
        %4907 = vmatprep.subr.mxu0 0.0
        %4908 = vmatpush2.msra.mxu0 0.0
        %4909 = vmatprep.subr.mxu0 0.0
        %4910 = vmatpush2.msra.mxu0 0.0
        %4911 = vmatprep.subr.mxu0 0.0
        %4912 = vmatpush2.msra.mxu0 0.0
        %4913 = vmatprep.subr.mxu0 0.0
        %4914 = vmatpush2.msra.mxu0 0.0
        %4915 = vmatprep.subr.mxu0 0.0
        %4916 = vmatpush2.msra.mxu0 0.0
        %4917 = vmatprep.subr.mxu0 0.0
        %4918 = vmatpush2.msra.mxu0 0.0
        %4919 = vmatprep.mubr.f32.mxu0 0.0
        %4920 = vmatmul.mubr.f32.gmra.mxu0 %v4791
        %v4921 = vpop.f32.mrf.mxu0
        %v4922 = vadd.f32 0.0, %v4921
        %v4923 = vpop.f32.mrf.mxu0
        %4924 = vmatprep.mubr.f32.mxu0 0.0
        %4925 = vmatmul.mubr.f32.gmra.mxu0 %v4792
        %v4926 = vpop.f32.mrf.mxu0
        %v4927 = vadd.f32 0.0, %v4926
        %v4928 = vpop.f32.mrf.mxu0
        %4929 = vmatprep.mubr.f32.mxu0 0.0
        %4930 = vmatmul.mubr.f32.gmra.mxu0 %v4793
        %v4931 = vpop.f32.mrf.mxu0
        %v4932 = vadd.f32 0.0, %v4931
        %v4933 = vpop.f32.mrf.mxu0
        %4934 = vmatprep.mubr.f32.mxu0 0.0
        %4935 = vmatmul.mubr.f32.gmra.mxu0 %v4794
        %v4936 = vpop.f32.mrf.mxu0
        %v4937 = vadd.f32 0.0, %v4936
        %v4938 = vpop.f32.mrf.mxu0
        %4939 = vmatprep.mubr.f32.mxu0 0.0
        %4940 = vmatmul.mubr.f32.gmra.mxu0 %v4795
        %v4941 = vpop.f32.mrf.mxu0
        %v4942 = vadd.f32 0.0, %v4941
        %v4943 = vpop.f32.mrf.mxu0
        %4944 = vmatprep.mubr.f32.mxu0 0.0
        %4945 = vmatmul.mubr.f32.gmra.mxu0 %v4796
        %v4946 = vpop.f32.mrf.mxu0
        %v4947 = vadd.f32 0.0, %v4946
        %v4948 = vpop.f32.mrf.mxu0
        %4949 = vmatprep.mubr.f32.mxu0 0.0
        %4950 = vmatmul.mubr.f32.gmra.mxu0 %v4797
        %v4951 = vpop.f32.mrf.mxu0
        %v4952 = vadd.f32 0.0, %v4951
        %v4953 = vpop.f32.mrf.mxu0
        %4954 = vmatprep.mubr.f32.mxu0 0.0
        %4955 = vmatmul.mubr.f32.gmra.mxu0 %v4798
        %v4956 = vpop.f32.mrf.mxu0
        %v4957 = vadd.f32 0.0, %v4956
        %v4958 = vpop.f32.mrf.mxu0
        %4959 = vmatprep.mubr.f32.mxu0 0.0
        %4960 = vmatmul.mubr.f32.gmra.mxu0 %v4799
        %v4961 = vpop.f32.mrf.mxu0
        %v4962 = vadd.f32 0.0, %v4961
        %v4963 = vpop.f32.mrf.mxu0
        %4964 = vmatprep.mubr.f32.mxu0 0.0
        %4965 = vmatmul.mubr.f32.gmra.mxu0 %v4800
        %v4966 = vpop.f32.mrf.mxu0
        %v4967 = vadd.f32 0.0, %v4966
        %v4968 = vpop.f32.mrf.mxu0
        %4969 = vmatprep.mubr.f32.mxu0 0.0
        %4970 = vmatmul.mubr.f32.gmra.mxu0 %v4801
        %v4971 = vpop.f32.mrf.mxu0
        %v4972 = vadd.f32 0.0, %v4971
        %v4973 = vpop.f32.mrf.mxu0
        %4974 = vmatprep.mubr.f32.mxu0 0.0
        %4975 = vmatmul.mubr.f32.gmra.mxu0 %v4802
        %v4976 = vpop.f32.mrf.mxu0
        %v4977 = vadd.f32 0.0, %v4976
        %v4978 = vpop.f32.mrf.mxu0
        %4979 = vmatprep.mubr.f32.mxu0 0.0
        %4980 = vmatmul.mubr.f32.gmra.mxu0 %v4803
        %v4981 = vpop.f32.mrf.mxu0
        %v4982 = vadd.f32 0.0, %v4981
        %v4983 = vpop.f32.mrf.mxu0
        %4984 = vmatprep.mubr.f32.mxu0 0.0
        %4985 = vmatmul.mubr.f32.gmra.mxu0 %v4804
        %v4986 = vpop.f32.mrf.mxu0
        %v4987 = vadd.f32 0.0, %v4986
        %v4988 = vpop.f32.mrf.mxu0
        %4989 = vmatprep.mubr.f32.mxu0 0.0
        %4990 = vmatmul.mubr.f32.gmra.mxu0 %v4805
        %v4991 = vpop.f32.mrf.mxu0
        %v4992 = vadd.f32 0.0, %v4991
        %v4993 = vpop.f32.mrf.mxu0
        %4994 = vmatprep.mubr.f32.mxu0 0.0
        %4995 = vmatmul.mubr.f32.gmra.mxu0 %v4806
        %v4996 = vpop.f32.mrf.mxu0
        %v4997 = vadd.f32 0.0, %v4996
        %v4998 = vpop.f32.mrf.mxu0
        %4999 = vdwg.mxu0
        %v5000 = vlaneseq
        %v5001 = vshrl.u32 %v5000, 7
        %v5002 = vsub.s32 4, %v5001
        %v5003 = vrot.slane %v3912, %v5002
        %5005 = vrot.lane.b32.xlu0 %v5003, 256
        %v5006 = vpop.permute.xlu0 %5005
        %s5008 = sor.u32 256, 8
        %5009 = vrot.lane.b32.xlu0 %v5003, %s5008
        %v5010 = vpop.permute.xlu0 %5009
        %s5012 = sor.u32 256, 16
        %5013 = vrot.lane.b32.xlu0 %v5003, %s5012
        %v5014 = vpop.permute.xlu0 %5013
        %s5016 = sor.u32 256, 24
        %5017 = vrot.lane.b32.xlu0 %v5003, %s5016
        %v5018 = vpop.permute.xlu0 %5017
        %s5020 = sor.u32 256, 32
        %5021 = vrot.lane.b32.xlu0 %v5003, %s5020
        %v5022 = vpop.permute.xlu0 %5021
        %s5024 = sor.u32 256, 40
        %5025 = vrot.lane.b32.xlu0 %v5003, %s5024
        %v5026 = vpop.permute.xlu0 %5025
        %s5028 = sor.u32 256, 48
        %5029 = vrot.lane.b32.xlu0 %v5003, %s5028
        %v5030 = vpop.permute.xlu0 %5029
        %s5032 = sor.u32 256, 56
        %5033 = vrot.lane.b32.xlu0 %v5003, %s5032
        %v5034 = vpop.permute.xlu0 %5033
        %s5036 = sor.u32 256, 64
        %5037 = vrot.lane.b32.xlu0 %v5003, %s5036
        %v5038 = vpop.permute.xlu0 %5037
        %s5040 = sor.u32 256, 72
        %5041 = vrot.lane.b32.xlu0 %v5003, %s5040
        %v5042 = vpop.permute.xlu0 %5041
        %s5044 = sor.u32 256, 80
        %5045 = vrot.lane.b32.xlu0 %v5003, %s5044
        %v5046 = vpop.permute.xlu0 %5045
        %s5048 = sor.u32 256, 88
        %5049 = vrot.lane.b32.xlu0 %v5003, %s5048
        %v5050 = vpop.permute.xlu0 %5049
        %s5052 = sor.u32 256, 96
        %5053 = vrot.lane.b32.xlu0 %v5003, %s5052
        %v5054 = vpop.permute.xlu0 %5053
        %s5056 = sor.u32 256, 104
        %5057 = vrot.lane.b32.xlu0 %v5003, %s5056
        %v5058 = vpop.permute.xlu0 %5057
        %s5060 = sor.u32 256, 112
        %5061 = vrot.lane.b32.xlu0 %v5003, %s5060
        %v5062 = vpop.permute.xlu0 %5061
        %s5064 = sor.u32 256, 120
        %5065 = vrot.lane.b32.xlu0 %v5003, %s5064
        %v5066 = vpop.permute.xlu0 %5065
        %v5067 = vmul.f32 %v5006, %v826
        %v5068 = vmul.f32 %v5010, %v827
        %v5069 = vmul.f32 %v5014, %v828
        %v5070 = vmul.f32 %v5018, %v829
        %v5071 = vmul.f32 %v5022, %v830
        %v5072 = vmul.f32 %v5026, %v831
        %v5073 = vmul.f32 %v5030, %v832
        %v5074 = vmul.f32 %v5034, %v833
        %v5075 = vmul.f32 %v5038, %v834
        %v5076 = vmul.f32 %v5042, %v835
        %v5077 = vmul.f32 %v5046, %v836
        %v5078 = vmul.f32 %v5050, %v837
        %v5079 = vmul.f32 %v5054, %v838
        %v5080 = vmul.f32 %v5058, %v839
        %v5081 = vmul.f32 %v5062, %v840
        %v5082 = vmul.f32 %v5066, %v841
        %5083 = vrot.lane.b32.xlu0 %v713, 64
        %v5084 = vpop.permute.xlu0 %5083
        %5085 = vrot.lane.b32.xlu0 %v718, 64
        %v5086 = vpop.permute.xlu0 %5085
        %5087 = vrot.lane.b32.xlu0 %v723, 64
        %v5088 = vpop.permute.xlu0 %5087
        %5089 = vrot.lane.b32.xlu0 %v728, 64
        %v5090 = vpop.permute.xlu0 %5089
        %5091 = vrot.lane.b32.xlu0 %v733, 64
        %v5092 = vpop.permute.xlu0 %5091
        %5093 = vrot.lane.b32.xlu0 %v738, 64
        %v5094 = vpop.permute.xlu0 %5093
        %5095 = vrot.lane.b32.xlu0 %v743, 64
        %v5096 = vpop.permute.xlu0 %5095
        %5097 = vrot.lane.b32.xlu0 %v748, 64
        %v5098 = vpop.permute.xlu0 %5097
        %5099 = vrot.lane.b32.xlu0 %v753, 64
        %v5100 = vpop.permute.xlu0 %5099
        %5101 = vrot.lane.b32.xlu0 %v758, 64
        %v5102 = vpop.permute.xlu0 %5101
        %5103 = vrot.lane.b32.xlu0 %v763, 64
        %v5104 = vpop.permute.xlu0 %5103
        %5105 = vrot.lane.b32.xlu0 %v768, 64
        %v5106 = vpop.permute.xlu0 %5105
        %5107 = vrot.lane.b32.xlu0 %v773, 64
        %v5108 = vpop.permute.xlu0 %5107
        %5109 = vrot.lane.b32.xlu0 %v778, 64
        %v5110 = vpop.permute.xlu0 %5109
        %5111 = vrot.lane.b32.xlu0 %v783, 64
        %v5112 = vpop.permute.xlu0 %5111
        %5113 = vrot.lane.b32.xlu0 %v788, 64
        %v5114 = vpop.permute.xlu0 %5113
        %5131 = vmatprep.subr.mxu0 0.0
        %5132 = vmatpush1.msra.mxu0 %v5114
        %5133 = vmatprep.subr.mxu0 0.0
        %5134 = vmatpush1.msra.mxu0 %v5112
        %5135 = vmatprep.subr.mxu0 0.0
        %5136 = vmatpush1.msra.mxu0 %v5110
        %5137 = vmatprep.subr.mxu0 0.0
        %5138 = vmatpush1.msra.mxu0 %v5108
        %5139 = vmatprep.subr.mxu0 0.0
        %5140 = vmatpush1.msra.mxu0 %v5106
        %5141 = vmatprep.subr.mxu0 0.0
        %5142 = vmatpush1.msra.mxu0 %v5104
        %5143 = vmatprep.subr.mxu0 0.0
        %5144 = vmatpush1.msra.mxu0 %v5102
        %5145 = vmatprep.subr.mxu0 0.0
        %5146 = vmatpush1.msra.mxu0 %v5100
        %5147 = vmatprep.subr.mxu0 0.0
        %5148 = vmatpush1.msra.mxu0 %v5098
        %5149 = vmatprep.subr.mxu0 0.0
        %5150 = vmatpush1.msra.mxu0 %v5096
        %5151 = vmatprep.subr.mxu0 0.0
        %5152 = vmatpush1.msra.mxu0 %v5094
        %5153 = vmatprep.subr.mxu0 0.0
        %5154 = vmatpush1.msra.mxu0 %v5092
        %5155 = vmatprep.subr.mxu0 0.0
        %5156 = vmatpush1.msra.mxu0 %v5090
        %5157 = vmatprep.subr.mxu0 0.0
        %5158 = vmatpush1.msra.mxu0 %v5088
        %5159 = vmatprep.subr.mxu0 0.0
        %5160 = vmatpush1.msra.mxu0 %v5086
        %5161 = vmatprep.subr.mxu0 0.0
        %5162 = vmatpush1.msra.mxu0 %v5084
        %5163 = vmatprep.subr.mxu0 0.0
        %5164 = vmatpush2.msra.mxu0 0.0
        %5165 = vmatprep.subr.mxu0 0.0
        %5166 = vmatpush2.msra.mxu0 0.0
        %5167 = vmatprep.subr.mxu0 0.0
        %5168 = vmatpush2.msra.mxu0 0.0
        %5169 = vmatprep.subr.mxu0 0.0
        %5170 = vmatpush2.msra.mxu0 0.0
        %5171 = vmatprep.subr.mxu0 0.0
        %5172 = vmatpush2.msra.mxu0 0.0
        %5173 = vmatprep.subr.mxu0 0.0
        %5174 = vmatpush2.msra.mxu0 0.0
        %5175 = vmatprep.subr.mxu0 0.0
        %5176 = vmatpush2.msra.mxu0 0.0
        %5177 = vmatprep.subr.mxu0 0.0
        %5178 = vmatpush2.msra.mxu0 0.0
        %5179 = vmatprep.subr.mxu0 0.0
        %5180 = vmatpush2.msra.mxu0 0.0
        %5181 = vmatprep.subr.mxu0 0.0
        %5182 = vmatpush2.msra.mxu0 0.0
        %5183 = vmatprep.subr.mxu0 0.0
        %5184 = vmatpush2.msra.mxu0 0.0
        %5185 = vmatprep.subr.mxu0 0.0
        %5186 = vmatpush2.msra.mxu0 0.0
        %5187 = vmatprep.subr.mxu0 0.0
        %5188 = vmatpush2.msra.mxu0 0.0
        %5189 = vmatprep.subr.mxu0 0.0
        %5190 = vmatpush2.msra.mxu0 0.0
        %5191 = vmatprep.subr.mxu0 0.0
        %5192 = vmatpush2.msra.mxu0 0.0
        %5193 = vmatprep.subr.mxu0 0.0
        %5194 = vmatpush2.msra.mxu0 0.0
        %5195 = vmatprep.mubr.f32.mxu0 0.0
        %5196 = vmatmul.mubr.f32.gmra.mxu0 %v5067
        %v5197 = vpop.f32.mrf.mxu0
        %v5198 = vadd.f32 0.0, %v5197
        %v5199 = vpop.f32.mrf.mxu0
        %5200 = vmatprep.mubr.f32.mxu0 0.0
        %5201 = vmatmul.mubr.f32.gmra.mxu0 %v5068
        %v5202 = vpop.f32.mrf.mxu0
        %v5203 = vadd.f32 0.0, %v5202
        %v5204 = vpop.f32.mrf.mxu0
        %5205 = vmatprep.mubr.f32.mxu0 0.0
        %5206 = vmatmul.mubr.f32.gmra.mxu0 %v5069
        %v5207 = vpop.f32.mrf.mxu0
        %v5208 = vadd.f32 0.0, %v5207
        %v5209 = vpop.f32.mrf.mxu0
        %5210 = vmatprep.mubr.f32.mxu0 0.0
        %5211 = vmatmul.mubr.f32.gmra.mxu0 %v5070
        %v5212 = vpop.f32.mrf.mxu0
        %v5213 = vadd.f32 0.0, %v5212
        %v5214 = vpop.f32.mrf.mxu0
        %5215 = vmatprep.mubr.f32.mxu0 0.0
        %5216 = vmatmul.mubr.f32.gmra.mxu0 %v5071
        %v5217 = vpop.f32.mrf.mxu0
        %v5218 = vadd.f32 0.0, %v5217
        %v5219 = vpop.f32.mrf.mxu0
        %5220 = vmatprep.mubr.f32.mxu0 0.0
        %5221 = vmatmul.mubr.f32.gmra.mxu0 %v5072
        %v5222 = vpop.f32.mrf.mxu0
        %v5223 = vadd.f32 0.0, %v5222
        %v5224 = vpop.f32.mrf.mxu0
        %5225 = vmatprep.mubr.f32.mxu0 0.0
        %5226 = vmatmul.mubr.f32.gmra.mxu0 %v5073
        %v5227 = vpop.f32.mrf.mxu0
        %v5228 = vadd.f32 0.0, %v5227
        %v5229 = vpop.f32.mrf.mxu0
        %5230 = vmatprep.mubr.f32.mxu0 0.0
        %5231 = vmatmul.mubr.f32.gmra.mxu0 %v5074
        %v5232 = vpop.f32.mrf.mxu0
        %v5233 = vadd.f32 0.0, %v5232
        %v5234 = vpop.f32.mrf.mxu0
        %5235 = vmatprep.mubr.f32.mxu0 0.0
        %5236 = vmatmul.mubr.f32.gmra.mxu0 %v5075
        %v5237 = vpop.f32.mrf.mxu0
        %v5238 = vadd.f32 0.0, %v5237
        %v5239 = vpop.f32.mrf.mxu0
        %5240 = vmatprep.mubr.f32.mxu0 0.0
        %5241 = vmatmul.mubr.f32.gmra.mxu0 %v5076
        %v5242 = vpop.f32.mrf.mxu0
        %v5243 = vadd.f32 0.0, %v5242
        %v5244 = vpop.f32.mrf.mxu0
        %5245 = vmatprep.mubr.f32.mxu0 0.0
        %5246 = vmatmul.mubr.f32.gmra.mxu0 %v5077
        %v5247 = vpop.f32.mrf.mxu0
        %v5248 = vadd.f32 0.0, %v5247
        %v5249 = vpop.f32.mrf.mxu0
        %5250 = vmatprep.mubr.f32.mxu0 0.0
        %5251 = vmatmul.mubr.f32.gmra.mxu0 %v5078
        %v5252 = vpop.f32.mrf.mxu0
        %v5253 = vadd.f32 0.0, %v5252
        %v5254 = vpop.f32.mrf.mxu0
        %5255 = vmatprep.mubr.f32.mxu0 0.0
        %5256 = vmatmul.mubr.f32.gmra.mxu0 %v5079
        %v5257 = vpop.f32.mrf.mxu0
        %v5258 = vadd.f32 0.0, %v5257
        %v5259 = vpop.f32.mrf.mxu0
        %5260 = vmatprep.mubr.f32.mxu0 0.0
        %5261 = vmatmul.mubr.f32.gmra.mxu0 %v5080
        %v5262 = vpop.f32.mrf.mxu0
        %v5263 = vadd.f32 0.0, %v5262
        %v5264 = vpop.f32.mrf.mxu0
        %5265 = vmatprep.mubr.f32.mxu0 0.0
        %5266 = vmatmul.mubr.f32.gmra.mxu0 %v5081
        %v5267 = vpop.f32.mrf.mxu0
        %v5268 = vadd.f32 0.0, %v5267
        %v5269 = vpop.f32.mrf.mxu0
        %5270 = vmatprep.mubr.f32.mxu0 0.0
        %5271 = vmatmul.mubr.f32.gmra.mxu0 %v5082
        %v5272 = vpop.f32.mrf.mxu0
        %v5273 = vadd.f32 0.0, %v5272
        %v5274 = vpop.f32.mrf.mxu0
        %5275 = vdwg.mxu0
        %v5276 = vlaneseq
        %v5277 = vshrl.u32 %v5276, 7
        %v5278 = vsub.s32 5, %v5277
        %v5279 = vrot.slane %v3912, %v5278
        %5281 = vrot.lane.b32.xlu0 %v5279, 256
        %v5282 = vpop.permute.xlu0 %5281
        %s5284 = sor.u32 256, 8
        %5285 = vrot.lane.b32.xlu0 %v5279, %s5284
        %v5286 = vpop.permute.xlu0 %5285
        %s5288 = sor.u32 256, 16
        %5289 = vrot.lane.b32.xlu0 %v5279, %s5288
        %v5290 = vpop.permute.xlu0 %5289
        %s5292 = sor.u32 256, 24
        %5293 = vrot.lane.b32.xlu0 %v5279, %s5292
        %v5294 = vpop.permute.xlu0 %5293
        %s5296 = sor.u32 256, 32
        %5297 = vrot.lane.b32.xlu0 %v5279, %s5296
        %v5298 = vpop.permute.xlu0 %5297
        %s5300 = sor.u32 256, 40
        %5301 = vrot.lane.b32.xlu0 %v5279, %s5300
        %v5302 = vpop.permute.xlu0 %5301
        %s5304 = sor.u32 256, 48
        %5305 = vrot.lane.b32.xlu0 %v5279, %s5304
        %v5306 = vpop.permute.xlu0 %5305
        %s5308 = sor.u32 256, 56
        %5309 = vrot.lane.b32.xlu0 %v5279, %s5308
        %v5310 = vpop.permute.xlu0 %5309
        %s5312 = sor.u32 256, 64
        %5313 = vrot.lane.b32.xlu0 %v5279, %s5312
        %v5314 = vpop.permute.xlu0 %5313
        %s5316 = sor.u32 256, 72
        %5317 = vrot.lane.b32.xlu0 %v5279, %s5316
        %v5318 = vpop.permute.xlu0 %5317
        %s5320 = sor.u32 256, 80
        %5321 = vrot.lane.b32.xlu0 %v5279, %s5320
        %v5322 = vpop.permute.xlu0 %5321
        %s5324 = sor.u32 256, 88
        %5325 = vrot.lane.b32.xlu0 %v5279, %s5324
        %v5326 = vpop.permute.xlu0 %5325
        %s5328 = sor.u32 256, 96
        %5329 = vrot.lane.b32.xlu0 %v5279, %s5328
        %v5330 = vpop.permute.xlu0 %5329
        %s5332 = sor.u32 256, 104
        %5333 = vrot.lane.b32.xlu0 %v5279, %s5332
        %v5334 = vpop.permute.xlu0 %5333
        %s5336 = sor.u32 256, 112
        %5337 = vrot.lane.b32.xlu0 %v5279, %s5336
        %v5338 = vpop.permute.xlu0 %5337
        %s5340 = sor.u32 256, 120
        %5341 = vrot.lane.b32.xlu0 %v5279, %s5340
        %v5342 = vpop.permute.xlu0 %5341
        %v5343 = vmul.f32 %v5282, %v826
        %v5344 = vmul.f32 %v5286, %v827
        %v5345 = vmul.f32 %v5290, %v828
        %v5346 = vmul.f32 %v5294, %v829
        %v5347 = vmul.f32 %v5298, %v830
        %v5348 = vmul.f32 %v5302, %v831
        %v5349 = vmul.f32 %v5306, %v832
        %v5350 = vmul.f32 %v5310, %v833
        %v5351 = vmul.f32 %v5314, %v834
        %v5352 = vmul.f32 %v5318, %v835
        %v5353 = vmul.f32 %v5322, %v836
        %v5354 = vmul.f32 %v5326, %v837
        %v5355 = vmul.f32 %v5330, %v838
        %v5356 = vmul.f32 %v5334, %v839
        %v5357 = vmul.f32 %v5338, %v840
        %v5358 = vmul.f32 %v5342, %v841
        %5359 = vrot.lane.b32.xlu0 %v713, 48
        %v5360 = vpop.permute.xlu0 %5359
        %5361 = vrot.lane.b32.xlu0 %v718, 48
        %v5362 = vpop.permute.xlu0 %5361
        %5363 = vrot.lane.b32.xlu0 %v723, 48
        %v5364 = vpop.permute.xlu0 %5363
        %5365 = vrot.lane.b32.xlu0 %v728, 48
        %v5366 = vpop.permute.xlu0 %5365
        %5367 = vrot.lane.b32.xlu0 %v733, 48
        %v5368 = vpop.permute.xlu0 %5367
        %5369 = vrot.lane.b32.xlu0 %v738, 48
        %v5370 = vpop.permute.xlu0 %5369
        %5371 = vrot.lane.b32.xlu0 %v743, 48
        %v5372 = vpop.permute.xlu0 %5371
        %5373 = vrot.lane.b32.xlu0 %v748, 48
        %v5374 = vpop.permute.xlu0 %5373
        %5375 = vrot.lane.b32.xlu0 %v753, 48
        %v5376 = vpop.permute.xlu0 %5375
        %5377 = vrot.lane.b32.xlu0 %v758, 48
        %v5378 = vpop.permute.xlu0 %5377
        %5379 = vrot.lane.b32.xlu0 %v763, 48
        %v5380 = vpop.permute.xlu0 %5379
        %5381 = vrot.lane.b32.xlu0 %v768, 48
        %v5382 = vpop.permute.xlu0 %5381
        %5383 = vrot.lane.b32.xlu0 %v773, 48
        %v5384 = vpop.permute.xlu0 %5383
        %5385 = vrot.lane.b32.xlu0 %v778, 48
        %v5386 = vpop.permute.xlu0 %5385
        %5387 = vrot.lane.b32.xlu0 %v783, 48
        %v5388 = vpop.permute.xlu0 %5387
        %5389 = vrot.lane.b32.xlu0 %v788, 48
        %v5390 = vpop.permute.xlu0 %5389
        %5407 = vmatprep.subr.mxu0 0.0
        %5408 = vmatpush1.msra.mxu0 %v5390
        %5409 = vmatprep.subr.mxu0 0.0
        %5410 = vmatpush1.msra.mxu0 %v5388
        %5411 = vmatprep.subr.mxu0 0.0
        %5412 = vmatpush1.msra.mxu0 %v5386
        %5413 = vmatprep.subr.mxu0 0.0
        %5414 = vmatpush1.msra.mxu0 %v5384
        %5415 = vmatprep.subr.mxu0 0.0
        %5416 = vmatpush1.msra.mxu0 %v5382
        %5417 = vmatprep.subr.mxu0 0.0
        %5418 = vmatpush1.msra.mxu0 %v5380
        %5419 = vmatprep.subr.mxu0 0.0
        %5420 = vmatpush1.msra.mxu0 %v5378
        %5421 = vmatprep.subr.mxu0 0.0
        %5422 = vmatpush1.msra.mxu0 %v5376
        %5423 = vmatprep.subr.mxu0 0.0
        %5424 = vmatpush1.msra.mxu0 %v5374
        %5425 = vmatprep.subr.mxu0 0.0
        %5426 = vmatpush1.msra.mxu0 %v5372
        %5427 = vmatprep.subr.mxu0 0.0
        %5428 = vmatpush1.msra.mxu0 %v5370
        %5429 = vmatprep.subr.mxu0 0.0
        %5430 = vmatpush1.msra.mxu0 %v5368
        %5431 = vmatprep.subr.mxu0 0.0
        %5432 = vmatpush1.msra.mxu0 %v5366
        %5433 = vmatprep.subr.mxu0 0.0
        %5434 = vmatpush1.msra.mxu0 %v5364
        %5435 = vmatprep.subr.mxu0 0.0
        %5436 = vmatpush1.msra.mxu0 %v5362
        %5437 = vmatprep.subr.mxu0 0.0
        %5438 = vmatpush1.msra.mxu0 %v5360
        %5439 = vmatprep.subr.mxu0 0.0
        %5440 = vmatpush2.msra.mxu0 0.0
        %5441 = vmatprep.subr.mxu0 0.0
        %5442 = vmatpush2.msra.mxu0 0.0
        %5443 = vmatprep.subr.mxu0 0.0
        %5444 = vmatpush2.msra.mxu0 0.0
        %5445 = vmatprep.subr.mxu0 0.0
        %5446 = vmatpush2.msra.mxu0 0.0
        %5447 = vmatprep.subr.mxu0 0.0
        %5448 = vmatpush2.msra.mxu0 0.0
        %5449 = vmatprep.subr.mxu0 0.0
        %5450 = vmatpush2.msra.mxu0 0.0
        %5451 = vmatprep.subr.mxu0 0.0
        %5452 = vmatpush2.msra.mxu0 0.0
        %5453 = vmatprep.subr.mxu0 0.0
        %5454 = vmatpush2.msra.mxu0 0.0
        %5455 = vmatprep.subr.mxu0 0.0
        %5456 = vmatpush2.msra.mxu0 0.0
        %5457 = vmatprep.subr.mxu0 0.0
        %5458 = vmatpush2.msra.mxu0 0.0
        %5459 = vmatprep.subr.mxu0 0.0
        %5460 = vmatpush2.msra.mxu0 0.0
        %5461 = vmatprep.subr.mxu0 0.0
        %5462 = vmatpush2.msra.mxu0 0.0
        %5463 = vmatprep.subr.mxu0 0.0
        %5464 = vmatpush2.msra.mxu0 0.0
        %5465 = vmatprep.subr.mxu0 0.0
        %5466 = vmatpush2.msra.mxu0 0.0
        %5467 = vmatprep.subr.mxu0 0.0
        %5468 = vmatpush2.msra.mxu0 0.0
        %5469 = vmatprep.subr.mxu0 0.0
        %5470 = vmatpush2.msra.mxu0 0.0
        %5471 = vmatprep.mubr.f32.mxu0 0.0
        %5472 = vmatmul.mubr.f32.gmra.mxu0 %v5343
        %v5473 = vpop.f32.mrf.mxu0
        %v5474 = vadd.f32 0.0, %v5473
        %v5475 = vpop.f32.mrf.mxu0
        %5476 = vmatprep.mubr.f32.mxu0 0.0
        %5477 = vmatmul.mubr.f32.gmra.mxu0 %v5344
        %v5478 = vpop.f32.mrf.mxu0
        %v5479 = vadd.f32 0.0, %v5478
        %v5480 = vpop.f32.mrf.mxu0
        %5481 = vmatprep.mubr.f32.mxu0 0.0
        %5482 = vmatmul.mubr.f32.gmra.mxu0 %v5345
        %v5483 = vpop.f32.mrf.mxu0
        %v5484 = vadd.f32 0.0, %v5483
        %v5485 = vpop.f32.mrf.mxu0
        %5486 = vmatprep.mubr.f32.mxu0 0.0
        %5487 = vmatmul.mubr.f32.gmra.mxu0 %v5346
        %v5488 = vpop.f32.mrf.mxu0
        %v5489 = vadd.f32 0.0, %v5488
        %v5490 = vpop.f32.mrf.mxu0
        %5491 = vmatprep.mubr.f32.mxu0 0.0
        %5492 = vmatmul.mubr.f32.gmra.mxu0 %v5347
        %v5493 = vpop.f32.mrf.mxu0
        %v5494 = vadd.f32 0.0, %v5493
        %v5495 = vpop.f32.mrf.mxu0
        %5496 = vmatprep.mubr.f32.mxu0 0.0
        %5497 = vmatmul.mubr.f32.gmra.mxu0 %v5348
        %v5498 = vpop.f32.mrf.mxu0
        %v5499 = vadd.f32 0.0, %v5498
        %v5500 = vpop.f32.mrf.mxu0
        %5501 = vmatprep.mubr.f32.mxu0 0.0
        %5502 = vmatmul.mubr.f32.gmra.mxu0 %v5349
        %v5503 = vpop.f32.mrf.mxu0
        %v5504 = vadd.f32 0.0, %v5503
        %v5505 = vpop.f32.mrf.mxu0
        %5506 = vmatprep.mubr.f32.mxu0 0.0
        %5507 = vmatmul.mubr.f32.gmra.mxu0 %v5350
        %v5508 = vpop.f32.mrf.mxu0
        %v5509 = vadd.f32 0.0, %v5508
        %v5510 = vpop.f32.mrf.mxu0
        %5511 = vmatprep.mubr.f32.mxu0 0.0
        %5512 = vmatmul.mubr.f32.gmra.mxu0 %v5351
        %v5513 = vpop.f32.mrf.mxu0
        %v5514 = vadd.f32 0.0, %v5513
        %v5515 = vpop.f32.mrf.mxu0
        %5516 = vmatprep.mubr.f32.mxu0 0.0
        %5517 = vmatmul.mubr.f32.gmra.mxu0 %v5352
        %v5518 = vpop.f32.mrf.mxu0
        %v5519 = vadd.f32 0.0, %v5518
        %v5520 = vpop.f32.mrf.mxu0
        %5521 = vmatprep.mubr.f32.mxu0 0.0
        %5522 = vmatmul.mubr.f32.gmra.mxu0 %v5353
        %v5523 = vpop.f32.mrf.mxu0
        %v5524 = vadd.f32 0.0, %v5523
        %v5525 = vpop.f32.mrf.mxu0
        %5526 = vmatprep.mubr.f32.mxu0 0.0
        %5527 = vmatmul.mubr.f32.gmra.mxu0 %v5354
        %v5528 = vpop.f32.mrf.mxu0
        %v5529 = vadd.f32 0.0, %v5528
        %v5530 = vpop.f32.mrf.mxu0
        %5531 = vmatprep.mubr.f32.mxu0 0.0
        %5532 = vmatmul.mubr.f32.gmra.mxu0 %v5355
        %v5533 = vpop.f32.mrf.mxu0
        %v5534 = vadd.f32 0.0, %v5533
        %v5535 = vpop.f32.mrf.mxu0
        %5536 = vmatprep.mubr.f32.mxu0 0.0
        %5537 = vmatmul.mubr.f32.gmra.mxu0 %v5356
        %v5538 = vpop.f32.mrf.mxu0
        %v5539 = vadd.f32 0.0, %v5538
        %v5540 = vpop.f32.mrf.mxu0
        %5541 = vmatprep.mubr.f32.mxu0 0.0
        %5542 = vmatmul.mubr.f32.gmra.mxu0 %v5357
        %v5543 = vpop.f32.mrf.mxu0
        %v5544 = vadd.f32 0.0, %v5543
        %v5545 = vpop.f32.mrf.mxu0
        %5546 = vmatprep.mubr.f32.mxu0 0.0
        %5547 = vmatmul.mubr.f32.gmra.mxu0 %v5358
        %v5548 = vpop.f32.mrf.mxu0
        %v5549 = vadd.f32 0.0, %v5548
        %v5550 = vpop.f32.mrf.mxu0
        %5551 = vdwg.mxu0
        %v5552 = vlaneseq
        %v5553 = vshrl.u32 %v5552, 7
        %v5554 = vsub.s32 6, %v5553
        %v5555 = vrot.slane %v3912, %v5554
        %5557 = vrot.lane.b32.xlu0 %v5555, 256
        %v5558 = vpop.permute.xlu0 %5557
        %s5560 = sor.u32 256, 8
        %5561 = vrot.lane.b32.xlu0 %v5555, %s5560
        %v5562 = vpop.permute.xlu0 %5561
        %s5564 = sor.u32 256, 16
        %5565 = vrot.lane.b32.xlu0 %v5555, %s5564
        %v5566 = vpop.permute.xlu0 %5565
        %s5568 = sor.u32 256, 24
        %5569 = vrot.lane.b32.xlu0 %v5555, %s5568
        %v5570 = vpop.permute.xlu0 %5569
        %s5572 = sor.u32 256, 32
        %5573 = vrot.lane.b32.xlu0 %v5555, %s5572
        %v5574 = vpop.permute.xlu0 %5573
        %s5576 = sor.u32 256, 40
        %5577 = vrot.lane.b32.xlu0 %v5555, %s5576
        %v5578 = vpop.permute.xlu0 %5577
        %s5580 = sor.u32 256, 48
        %5581 = vrot.lane.b32.xlu0 %v5555, %s5580
        %v5582 = vpop.permute.xlu0 %5581
        %s5584 = sor.u32 256, 56
        %5585 = vrot.lane.b32.xlu0 %v5555, %s5584
        %v5586 = vpop.permute.xlu0 %5585
        %s5588 = sor.u32 256, 64
        %5589 = vrot.lane.b32.xlu0 %v5555, %s5588
        %v5590 = vpop.permute.xlu0 %5589
        %s5592 = sor.u32 256, 72
        %5593 = vrot.lane.b32.xlu0 %v5555, %s5592
        %v5594 = vpop.permute.xlu0 %5593
        %s5596 = sor.u32 256, 80
        %5597 = vrot.lane.b32.xlu0 %v5555, %s5596
        %v5598 = vpop.permute.xlu0 %5597
        %s5600 = sor.u32 256, 88
        %5601 = vrot.lane.b32.xlu0 %v5555, %s5600
        %v5602 = vpop.permute.xlu0 %5601
        %s5604 = sor.u32 256, 96
        %5605 = vrot.lane.b32.xlu0 %v5555, %s5604
        %v5606 = vpop.permute.xlu0 %5605
        %s5608 = sor.u32 256, 104
        %5609 = vrot.lane.b32.xlu0 %v5555, %s5608
        %v5610 = vpop.permute.xlu0 %5609
        %s5612 = sor.u32 256, 112
        %5613 = vrot.lane.b32.xlu0 %v5555, %s5612
        %v5614 = vpop.permute.xlu0 %5613
        %s5616 = sor.u32 256, 120
        %5617 = vrot.lane.b32.xlu0 %v5555, %s5616
        %v5618 = vpop.permute.xlu0 %5617
        %v5619 = vmul.f32 %v5558, %v826
        %v5620 = vmul.f32 %v5562, %v827
        %v5621 = vmul.f32 %v5566, %v828
        %v5622 = vmul.f32 %v5570, %v829
        %v5623 = vmul.f32 %v5574, %v830
        %v5624 = vmul.f32 %v5578, %v831
        %v5625 = vmul.f32 %v5582, %v832
        %v5626 = vmul.f32 %v5586, %v833
        %v5627 = vmul.f32 %v5590, %v834
        %v5628 = vmul.f32 %v5594, %v835
        %v5629 = vmul.f32 %v5598, %v836
        %v5630 = vmul.f32 %v5602, %v837
        %v5631 = vmul.f32 %v5606, %v838
        %v5632 = vmul.f32 %v5610, %v839
        %v5633 = vmul.f32 %v5614, %v840
        %v5634 = vmul.f32 %v5618, %v841
        %5635 = vrot.lane.b32.xlu0 %v713, 32
        %v5636 = vpop.permute.xlu0 %5635
        %5637 = vrot.lane.b32.xlu0 %v718, 32
        %v5638 = vpop.permute.xlu0 %5637
        %5639 = vrot.lane.b32.xlu0 %v723, 32
        %v5640 = vpop.permute.xlu0 %5639
        %5641 = vrot.lane.b32.xlu0 %v728, 32
        %v5642 = vpop.permute.xlu0 %5641
        %5643 = vrot.lane.b32.xlu0 %v733, 32
        %v5644 = vpop.permute.xlu0 %5643
        %5645 = vrot.lane.b32.xlu0 %v738, 32
        %v5646 = vpop.permute.xlu0 %5645
        %5647 = vrot.lane.b32.xlu0 %v743, 32
        %v5648 = vpop.permute.xlu0 %5647
        %5649 = vrot.lane.b32.xlu0 %v748, 32
        %v5650 = vpop.permute.xlu0 %5649
        %5651 = vrot.lane.b32.xlu0 %v753, 32
        %v5652 = vpop.permute.xlu0 %5651
        %5653 = vrot.lane.b32.xlu0 %v758, 32
        %v5654 = vpop.permute.xlu0 %5653
        %5655 = vrot.lane.b32.xlu0 %v763, 32
        %v5656 = vpop.permute.xlu0 %5655
        %5657 = vrot.lane.b32.xlu0 %v768, 32
        %v5658 = vpop.permute.xlu0 %5657
        %5659 = vrot.lane.b32.xlu0 %v773, 32
        %v5660 = vpop.permute.xlu0 %5659
        %5661 = vrot.lane.b32.xlu0 %v778, 32
        %v5662 = vpop.permute.xlu0 %5661
        %5663 = vrot.lane.b32.xlu0 %v783, 32
        %v5664 = vpop.permute.xlu0 %5663
        %5665 = vrot.lane.b32.xlu0 %v788, 32
        %v5666 = vpop.permute.xlu0 %5665
        %5683 = vmatprep.subr.mxu0 0.0
        %5684 = vmatpush1.msra.mxu0 %v5666
        %5685 = vmatprep.subr.mxu0 0.0
        %5686 = vmatpush1.msra.mxu0 %v5664
        %5687 = vmatprep.subr.mxu0 0.0
        %5688 = vmatpush1.msra.mxu0 %v5662
        %5689 = vmatprep.subr.mxu0 0.0
        %5690 = vmatpush1.msra.mxu0 %v5660
        %5691 = vmatprep.subr.mxu0 0.0
        %5692 = vmatpush1.msra.mxu0 %v5658
        %5693 = vmatprep.subr.mxu0 0.0
        %5694 = vmatpush1.msra.mxu0 %v5656
        %5695 = vmatprep.subr.mxu0 0.0
        %5696 = vmatpush1.msra.mxu0 %v5654
        %5697 = vmatprep.subr.mxu0 0.0
        %5698 = vmatpush1.msra.mxu0 %v5652
        %5699 = vmatprep.subr.mxu0 0.0
        %5700 = vmatpush1.msra.mxu0 %v5650
        %5701 = vmatprep.subr.mxu0 0.0
        %5702 = vmatpush1.msra.mxu0 %v5648
        %5703 = vmatprep.subr.mxu0 0.0
        %5704 = vmatpush1.msra.mxu0 %v5646
        %5705 = vmatprep.subr.mxu0 0.0
        %5706 = vmatpush1.msra.mxu0 %v5644
        %5707 = vmatprep.subr.mxu0 0.0
        %5708 = vmatpush1.msra.mxu0 %v5642
        %5709 = vmatprep.subr.mxu0 0.0
        %5710 = vmatpush1.msra.mxu0 %v5640
        %5711 = vmatprep.subr.mxu0 0.0
        %5712 = vmatpush1.msra.mxu0 %v5638
        %5713 = vmatprep.subr.mxu0 0.0
        %5714 = vmatpush1.msra.mxu0 %v5636
        %5715 = vmatprep.subr.mxu0 0.0
        %5716 = vmatpush2.msra.mxu0 0.0
        %5717 = vmatprep.subr.mxu0 0.0
        %5718 = vmatpush2.msra.mxu0 0.0
        %5719 = vmatprep.subr.mxu0 0.0
        %5720 = vmatpush2.msra.mxu0 0.0
        %5721 = vmatprep.subr.mxu0 0.0
        %5722 = vmatpush2.msra.mxu0 0.0
        %5723 = vmatprep.subr.mxu0 0.0
        %5724 = vmatpush2.msra.mxu0 0.0
        %5725 = vmatprep.subr.mxu0 0.0
        %5726 = vmatpush2.msra.mxu0 0.0
        %5727 = vmatprep.subr.mxu0 0.0
        %5728 = vmatpush2.msra.mxu0 0.0
        %5729 = vmatprep.subr.mxu0 0.0
        %5730 = vmatpush2.msra.mxu0 0.0
        %5731 = vmatprep.subr.mxu0 0.0
        %5732 = vmatpush2.msra.mxu0 0.0
        %5733 = vmatprep.subr.mxu0 0.0
        %5734 = vmatpush2.msra.mxu0 0.0
        %5735 = vmatprep.subr.mxu0 0.0
        %5736 = vmatpush2.msra.mxu0 0.0
        %5737 = vmatprep.subr.mxu0 0.0
        %5738 = vmatpush2.msra.mxu0 0.0
        %5739 = vmatprep.subr.mxu0 0.0
        %5740 = vmatpush2.msra.mxu0 0.0
        %5741 = vmatprep.subr.mxu0 0.0
        %5742 = vmatpush2.msra.mxu0 0.0
        %5743 = vmatprep.subr.mxu0 0.0
        %5744 = vmatpush2.msra.mxu0 0.0
        %5745 = vmatprep.subr.mxu0 0.0
        %5746 = vmatpush2.msra.mxu0 0.0
        %5747 = vmatprep.mubr.f32.mxu0 0.0
        %5748 = vmatmul.mubr.f32.gmra.mxu0 %v5619
        %v5749 = vpop.f32.mrf.mxu0
        %v5750 = vadd.f32 0.0, %v5749
        %v5751 = vpop.f32.mrf.mxu0
        %5752 = vmatprep.mubr.f32.mxu0 0.0
        %5753 = vmatmul.mubr.f32.gmra.mxu0 %v5620
        %v5754 = vpop.f32.mrf.mxu0
        %v5755 = vadd.f32 0.0, %v5754
        %v5756 = vpop.f32.mrf.mxu0
        %5757 = vmatprep.mubr.f32.mxu0 0.0
        %5758 = vmatmul.mubr.f32.gmra.mxu0 %v5621
        %v5759 = vpop.f32.mrf.mxu0
        %v5760 = vadd.f32 0.0, %v5759
        %v5761 = vpop.f32.mrf.mxu0
        %5762 = vmatprep.mubr.f32.mxu0 0.0
        %5763 = vmatmul.mubr.f32.gmra.mxu0 %v5622
        %v5764 = vpop.f32.mrf.mxu0
        %v5765 = vadd.f32 0.0, %v5764
        %v5766 = vpop.f32.mrf.mxu0
        %5767 = vmatprep.mubr.f32.mxu0 0.0
        %5768 = vmatmul.mubr.f32.gmra.mxu0 %v5623
        %v5769 = vpop.f32.mrf.mxu0
        %v5770 = vadd.f32 0.0, %v5769
        %v5771 = vpop.f32.mrf.mxu0
        %5772 = vmatprep.mubr.f32.mxu0 0.0
        %5773 = vmatmul.mubr.f32.gmra.mxu0 %v5624
        %v5774 = vpop.f32.mrf.mxu0
        %v5775 = vadd.f32 0.0, %v5774
        %v5776 = vpop.f32.mrf.mxu0
        %5777 = vmatprep.mubr.f32.mxu0 0.0
        %5778 = vmatmul.mubr.f32.gmra.mxu0 %v5625
        %v5779 = vpop.f32.mrf.mxu0
        %v5780 = vadd.f32 0.0, %v5779
        %v5781 = vpop.f32.mrf.mxu0
        %5782 = vmatprep.mubr.f32.mxu0 0.0
        %5783 = vmatmul.mubr.f32.gmra.mxu0 %v5626
        %v5784 = vpop.f32.mrf.mxu0
        %v5785 = vadd.f32 0.0, %v5784
        %v5786 = vpop.f32.mrf.mxu0
        %5787 = vmatprep.mubr.f32.mxu0 0.0
        %5788 = vmatmul.mubr.f32.gmra.mxu0 %v5627
        %v5789 = vpop.f32.mrf.mxu0
        %v5790 = vadd.f32 0.0, %v5789
        %v5791 = vpop.f32.mrf.mxu0
        %5792 = vmatprep.mubr.f32.mxu0 0.0
        %5793 = vmatmul.mubr.f32.gmra.mxu0 %v5628
        %v5794 = vpop.f32.mrf.mxu0
        %v5795 = vadd.f32 0.0, %v5794
        %v5796 = vpop.f32.mrf.mxu0
        %5797 = vmatprep.mubr.f32.mxu0 0.0
        %5798 = vmatmul.mubr.f32.gmra.mxu0 %v5629
        %v5799 = vpop.f32.mrf.mxu0
        %v5800 = vadd.f32 0.0, %v5799
        %v5801 = vpop.f32.mrf.mxu0
        %5802 = vmatprep.mubr.f32.mxu0 0.0
        %5803 = vmatmul.mubr.f32.gmra.mxu0 %v5630
        %v5804 = vpop.f32.mrf.mxu0
        %v5805 = vadd.f32 0.0, %v5804
        %v5806 = vpop.f32.mrf.mxu0
        %5807 = vmatprep.mubr.f32.mxu0 0.0
        %5808 = vmatmul.mubr.f32.gmra.mxu0 %v5631
        %v5809 = vpop.f32.mrf.mxu0
        %v5810 = vadd.f32 0.0, %v5809
        %v5811 = vpop.f32.mrf.mxu0
        %5812 = vmatprep.mubr.f32.mxu0 0.0
        %5813 = vmatmul.mubr.f32.gmra.mxu0 %v5632
        %v5814 = vpop.f32.mrf.mxu0
        %v5815 = vadd.f32 0.0, %v5814
        %v5816 = vpop.f32.mrf.mxu0
        %5817 = vmatprep.mubr.f32.mxu0 0.0
        %5818 = vmatmul.mubr.f32.gmra.mxu0 %v5633
        %v5819 = vpop.f32.mrf.mxu0
        %v5820 = vadd.f32 0.0, %v5819
        %v5821 = vpop.f32.mrf.mxu0
        %5822 = vmatprep.mubr.f32.mxu0 0.0
        %5823 = vmatmul.mubr.f32.gmra.mxu0 %v5634
        %v5824 = vpop.f32.mrf.mxu0
        %v5825 = vadd.f32 0.0, %v5824
        %v5826 = vpop.f32.mrf.mxu0
        %5827 = vdwg.mxu0
        %v5828 = vlaneseq
        %v5829 = vshrl.u32 %v5828, 7
        %v5830 = vsub.s32 7, %v5829
        %v5831 = vrot.slane %v3912, %v5830
        %5833 = vrot.lane.b32.xlu0 %v5831, 256
        %v5834 = vpop.permute.xlu0 %5833
        %s5836 = sor.u32 256, 8
        %5837 = vrot.lane.b32.xlu0 %v5831, %s5836
        %v5838 = vpop.permute.xlu0 %5837
        %s5840 = sor.u32 256, 16
        %5841 = vrot.lane.b32.xlu0 %v5831, %s5840
        %v5842 = vpop.permute.xlu0 %5841
        %s5844 = sor.u32 256, 24
        %5845 = vrot.lane.b32.xlu0 %v5831, %s5844
        %v5846 = vpop.permute.xlu0 %5845
        %s5848 = sor.u32 256, 32
        %5849 = vrot.lane.b32.xlu0 %v5831, %s5848
        %v5850 = vpop.permute.xlu0 %5849
        %s5852 = sor.u32 256, 40
        %5853 = vrot.lane.b32.xlu0 %v5831, %s5852
        %v5854 = vpop.permute.xlu0 %5853
        %s5856 = sor.u32 256, 48
        %5857 = vrot.lane.b32.xlu0 %v5831, %s5856
        %v5858 = vpop.permute.xlu0 %5857
        %s5860 = sor.u32 256, 56
        %5861 = vrot.lane.b32.xlu0 %v5831, %s5860
        %v5862 = vpop.permute.xlu0 %5861
        %s5864 = sor.u32 256, 64
        %5865 = vrot.lane.b32.xlu0 %v5831, %s5864
        %v5866 = vpop.permute.xlu0 %5865
        %s5868 = sor.u32 256, 72
        %5869 = vrot.lane.b32.xlu0 %v5831, %s5868
        %v5870 = vpop.permute.xlu0 %5869
        %s5872 = sor.u32 256, 80
        %5873 = vrot.lane.b32.xlu0 %v5831, %s5872
        %v5874 = vpop.permute.xlu0 %5873
        %s5876 = sor.u32 256, 88
        %5877 = vrot.lane.b32.xlu0 %v5831, %s5876
        %v5878 = vpop.permute.xlu0 %5877
        %s5880 = sor.u32 256, 96
        %5881 = vrot.lane.b32.xlu0 %v5831, %s5880
        %v5882 = vpop.permute.xlu0 %5881
        %s5884 = sor.u32 256, 104
        %5885 = vrot.lane.b32.xlu0 %v5831, %s5884
        %v5886 = vpop.permute.xlu0 %5885
        %s5888 = sor.u32 256, 112
        %5889 = vrot.lane.b32.xlu0 %v5831, %s5888
        %v5890 = vpop.permute.xlu0 %5889
        %s5892 = sor.u32 256, 120
        %5893 = vrot.lane.b32.xlu0 %v5831, %s5892
        %v5894 = vpop.permute.xlu0 %5893
        %v5895 = vmul.f32 %v5834, %v826
        %v5896 = vmul.f32 %v5838, %v827
        %v5897 = vmul.f32 %v5842, %v828
        %v5898 = vmul.f32 %v5846, %v829
        %v5899 = vmul.f32 %v5850, %v830
        %v5900 = vmul.f32 %v5854, %v831
        %v5901 = vmul.f32 %v5858, %v832
        %v5902 = vmul.f32 %v5862, %v833
        %v5903 = vmul.f32 %v5866, %v834
        %v5904 = vmul.f32 %v5870, %v835
        %v5905 = vmul.f32 %v5874, %v836
        %v5906 = vmul.f32 %v5878, %v837
        %v5907 = vmul.f32 %v5882, %v838
        %v5908 = vmul.f32 %v5886, %v839
        %v5909 = vmul.f32 %v5890, %v840
        %v5910 = vmul.f32 %v5894, %v841
        %5911 = vrot.lane.b32.xlu0 %v713, 16
        %v5912 = vpop.permute.xlu0 %5911
        %5913 = vrot.lane.b32.xlu0 %v718, 16
        %v5914 = vpop.permute.xlu0 %5913
        %5915 = vrot.lane.b32.xlu0 %v723, 16
        %v5916 = vpop.permute.xlu0 %5915
        %5917 = vrot.lane.b32.xlu0 %v728, 16
        %v5918 = vpop.permute.xlu0 %5917
        %5919 = vrot.lane.b32.xlu0 %v733, 16
        %v5920 = vpop.permute.xlu0 %5919
        %5921 = vrot.lane.b32.xlu0 %v738, 16
        %v5922 = vpop.permute.xlu0 %5921
        %5923 = vrot.lane.b32.xlu0 %v743, 16
        %v5924 = vpop.permute.xlu0 %5923
        %5925 = vrot.lane.b32.xlu0 %v748, 16
        %v5926 = vpop.permute.xlu0 %5925
        %5927 = vrot.lane.b32.xlu0 %v753, 16
        %v5928 = vpop.permute.xlu0 %5927
        %5929 = vrot.lane.b32.xlu0 %v758, 16
        %v5930 = vpop.permute.xlu0 %5929
        %5931 = vrot.lane.b32.xlu0 %v763, 16
        %v5932 = vpop.permute.xlu0 %5931
        %5933 = vrot.lane.b32.xlu0 %v768, 16
        %v5934 = vpop.permute.xlu0 %5933
        %5935 = vrot.lane.b32.xlu0 %v773, 16
        %v5936 = vpop.permute.xlu0 %5935
        %5937 = vrot.lane.b32.xlu0 %v778, 16
        %v5938 = vpop.permute.xlu0 %5937
        %5939 = vrot.lane.b32.xlu0 %v783, 16
        %v5940 = vpop.permute.xlu0 %5939
        %5941 = vrot.lane.b32.xlu0 %v788, 16
        %v5942 = vpop.permute.xlu0 %5941
        %5959 = vmatprep.subr.mxu0 0.0
        %5960 = vmatpush1.msra.mxu0 %v5942
        %5961 = vmatprep.subr.mxu0 0.0
        %5962 = vmatpush1.msra.mxu0 %v5940
        %5963 = vmatprep.subr.mxu0 0.0
        %5964 = vmatpush1.msra.mxu0 %v5938
        %5965 = vmatprep.subr.mxu0 0.0
        %5966 = vmatpush1.msra.mxu0 %v5936
        %5967 = vmatprep.subr.mxu0 0.0
        %5968 = vmatpush1.msra.mxu0 %v5934
        %5969 = vmatprep.subr.mxu0 0.0
        %5970 = vmatpush1.msra.mxu0 %v5932
        %5971 = vmatprep.subr.mxu0 0.0
        %5972 = vmatpush1.msra.mxu0 %v5930
        %5973 = vmatprep.subr.mxu0 0.0
        %5974 = vmatpush1.msra.mxu0 %v5928
        %5975 = vmatprep.subr.mxu0 0.0
        %5976 = vmatpush1.msra.mxu0 %v5926
        %5977 = vmatprep.subr.mxu0 0.0
        %5978 = vmatpush1.msra.mxu0 %v5924
        %5979 = vmatprep.subr.mxu0 0.0
        %5980 = vmatpush1.msra.mxu0 %v5922
        %5981 = vmatprep.subr.mxu0 0.0
        %5982 = vmatpush1.msra.mxu0 %v5920
        %5983 = vmatprep.subr.mxu0 0.0
        %5984 = vmatpush1.msra.mxu0 %v5918
        %5985 = vmatprep.subr.mxu0 0.0
        %5986 = vmatpush1.msra.mxu0 %v5916
        %5987 = vmatprep.subr.mxu0 0.0
        %5988 = vmatpush1.msra.mxu0 %v5914
        %5989 = vmatprep.subr.mxu0 0.0
        %5990 = vmatpush1.msra.mxu0 %v5912
        %5991 = vmatprep.subr.mxu0 0.0
        %5992 = vmatpush2.msra.mxu0 0.0
        %5993 = vmatprep.subr.mxu0 0.0
        %5994 = vmatpush2.msra.mxu0 0.0
        %5995 = vmatprep.subr.mxu0 0.0
        %5996 = vmatpush2.msra.mxu0 0.0
        %5997 = vmatprep.subr.mxu0 0.0
        %5998 = vmatpush2.msra.mxu0 0.0
        %5999 = vmatprep.subr.mxu0 0.0
        %6000 = vmatpush2.msra.mxu0 0.0
        %6001 = vmatprep.subr.mxu0 0.0
        %6002 = vmatpush2.msra.mxu0 0.0
        %6003 = vmatprep.subr.mxu0 0.0
        %6004 = vmatpush2.msra.mxu0 0.0
        %6005 = vmatprep.subr.mxu0 0.0
        %6006 = vmatpush2.msra.mxu0 0.0
        %6007 = vmatprep.subr.mxu0 0.0
        %6008 = vmatpush2.msra.mxu0 0.0
        %6009 = vmatprep.subr.mxu0 0.0
        %6010 = vmatpush2.msra.mxu0 0.0
        %6011 = vmatprep.subr.mxu0 0.0
        %6012 = vmatpush2.msra.mxu0 0.0
        %6013 = vmatprep.subr.mxu0 0.0
        %6014 = vmatpush2.msra.mxu0 0.0
        %6015 = vmatprep.subr.mxu0 0.0
        %6016 = vmatpush2.msra.mxu0 0.0
        %6017 = vmatprep.subr.mxu0 0.0
        %6018 = vmatpush2.msra.mxu0 0.0
        %6019 = vmatprep.subr.mxu0 0.0
        %6020 = vmatpush2.msra.mxu0 0.0
        %6021 = vmatprep.subr.mxu0 0.0
        %6022 = vmatpush2.msra.mxu0 0.0
        %6023 = vmatprep.mubr.f32.mxu0 0.0
        %6024 = vmatmul.mubr.f32.gmra.mxu0 %v5895
        %v6025 = vpop.f32.mrf.mxu0
        %v6026 = vadd.f32 0.0, %v6025
        %v6027 = vpop.f32.mrf.mxu0
        %6028 = vmatprep.mubr.f32.mxu0 0.0
        %6029 = vmatmul.mubr.f32.gmra.mxu0 %v5896
        %v6030 = vpop.f32.mrf.mxu0
        %v6031 = vadd.f32 0.0, %v6030
        %v6032 = vpop.f32.mrf.mxu0
        %6033 = vmatprep.mubr.f32.mxu0 0.0
        %6034 = vmatmul.mubr.f32.gmra.mxu0 %v5897
        %v6035 = vpop.f32.mrf.mxu0
        %v6036 = vadd.f32 0.0, %v6035
        %v6037 = vpop.f32.mrf.mxu0
        %6038 = vmatprep.mubr.f32.mxu0 0.0
        %6039 = vmatmul.mubr.f32.gmra.mxu0 %v5898
        %v6040 = vpop.f32.mrf.mxu0
        %v6041 = vadd.f32 0.0, %v6040
        %v6042 = vpop.f32.mrf.mxu0
        %6043 = vmatprep.mubr.f32.mxu0 0.0
        %6044 = vmatmul.mubr.f32.gmra.mxu0 %v5899
        %v6045 = vpop.f32.mrf.mxu0
        %v6046 = vadd.f32 0.0, %v6045
        %v6047 = vpop.f32.mrf.mxu0
        %6048 = vmatprep.mubr.f32.mxu0 0.0
        %6049 = vmatmul.mubr.f32.gmra.mxu0 %v5900
        %v6050 = vpop.f32.mrf.mxu0
        %v6051 = vadd.f32 0.0, %v6050
        %v6052 = vpop.f32.mrf.mxu0
        %6053 = vmatprep.mubr.f32.mxu0 0.0
        %6054 = vmatmul.mubr.f32.gmra.mxu0 %v5901
        %v6055 = vpop.f32.mrf.mxu0
        %v6056 = vadd.f32 0.0, %v6055
        %v6057 = vpop.f32.mrf.mxu0
        %6058 = vmatprep.mubr.f32.mxu0 0.0
        %6059 = vmatmul.mubr.f32.gmra.mxu0 %v5902
        %v6060 = vpop.f32.mrf.mxu0
        %v6061 = vadd.f32 0.0, %v6060
        %v6062 = vpop.f32.mrf.mxu0
        %6063 = vmatprep.mubr.f32.mxu0 0.0
        %6064 = vmatmul.mubr.f32.gmra.mxu0 %v5903
        %v6065 = vpop.f32.mrf.mxu0
        %v6066 = vadd.f32 0.0, %v6065
        %v6067 = vpop.f32.mrf.mxu0
        %6068 = vmatprep.mubr.f32.mxu0 0.0
        %6069 = vmatmul.mubr.f32.gmra.mxu0 %v5904
        %v6070 = vpop.f32.mrf.mxu0
        %v6071 = vadd.f32 0.0, %v6070
        %v6072 = vpop.f32.mrf.mxu0
        %6073 = vmatprep.mubr.f32.mxu0 0.0
        %6074 = vmatmul.mubr.f32.gmra.mxu0 %v5905
        %v6075 = vpop.f32.mrf.mxu0
        %v6076 = vadd.f32 0.0, %v6075
        %v6077 = vpop.f32.mrf.mxu0
        %6078 = vmatprep.mubr.f32.mxu0 0.0
        %6079 = vmatmul.mubr.f32.gmra.mxu0 %v5906
        %v6080 = vpop.f32.mrf.mxu0
        %v6081 = vadd.f32 0.0, %v6080
        %v6082 = vpop.f32.mrf.mxu0
        %6083 = vmatprep.mubr.f32.mxu0 0.0
        %6084 = vmatmul.mubr.f32.gmra.mxu0 %v5907
        %v6085 = vpop.f32.mrf.mxu0
        %v6086 = vadd.f32 0.0, %v6085
        %v6087 = vpop.f32.mrf.mxu0
        %6088 = vmatprep.mubr.f32.mxu0 0.0
        %6089 = vmatmul.mubr.f32.gmra.mxu0 %v5908
        %v6090 = vpop.f32.mrf.mxu0
        %v6091 = vadd.f32 0.0, %v6090
        %v6092 = vpop.f32.mrf.mxu0
        %6093 = vmatprep.mubr.f32.mxu0 0.0
        %6094 = vmatmul.mubr.f32.gmra.mxu0 %v5909
        %v6095 = vpop.f32.mrf.mxu0
        %v6096 = vadd.f32 0.0, %v6095
        %v6097 = vpop.f32.mrf.mxu0
        %6098 = vmatprep.mubr.f32.mxu0 0.0
        %6099 = vmatmul.mubr.f32.gmra.mxu0 %v5910
        %v6100 = vpop.f32.mrf.mxu0
        %v6101 = vadd.f32 0.0, %v6100
        %v6102 = vpop.f32.mrf.mxu0
        %6103 = vdwg.mxu0
        %6120 = vrot.lane.b32.xlu0 %v4370, 16
        %v6121 = vpop.permute.xlu0 %6120
        %6122 = vrot.lane.b32.xlu0 %v4375, 16
        %v6123 = vpop.permute.xlu0 %6122
        %6124 = vrot.lane.b32.xlu0 %v4380, 16
        %v6125 = vpop.permute.xlu0 %6124
        %6126 = vrot.lane.b32.xlu0 %v4385, 16
        %v6127 = vpop.permute.xlu0 %6126
        %6128 = vrot.lane.b32.xlu0 %v4390, 16
        %v6129 = vpop.permute.xlu0 %6128
        %6130 = vrot.lane.b32.xlu0 %v4395, 16
        %v6131 = vpop.permute.xlu0 %6130
        %6132 = vrot.lane.b32.xlu0 %v4400, 16
        %v6133 = vpop.permute.xlu0 %6132
        %6134 = vrot.lane.b32.xlu0 %v4405, 16
        %v6135 = vpop.permute.xlu0 %6134
        %6136 = vrot.lane.b32.xlu0 %v4410, 16
        %v6137 = vpop.permute.xlu0 %6136
        %6138 = vrot.lane.b32.xlu0 %v4415, 16
        %v6139 = vpop.permute.xlu0 %6138
        %6140 = vrot.lane.b32.xlu0 %v4420, 16
        %v6141 = vpop.permute.xlu0 %6140
        %6142 = vrot.lane.b32.xlu0 %v4425, 16
        %v6143 = vpop.permute.xlu0 %6142
        %6144 = vrot.lane.b32.xlu0 %v4430, 16
        %v6145 = vpop.permute.xlu0 %6144
        %6146 = vrot.lane.b32.xlu0 %v4435, 16
        %v6147 = vpop.permute.xlu0 %6146
        %6148 = vrot.lane.b32.xlu0 %v4440, 16
        %v6149 = vpop.permute.xlu0 %6148
        %6150 = vrot.lane.b32.xlu0 %v4445, 16
        %v6151 = vpop.permute.xlu0 %6150
        %6184 = vrot.lane.b32.xlu0 %v4646, 32
        %v6185 = vpop.permute.xlu0 %6184
        %6186 = vrot.lane.b32.xlu0 %v4651, 32
        %v6187 = vpop.permute.xlu0 %6186
        %6188 = vrot.lane.b32.xlu0 %v4656, 32
        %v6189 = vpop.permute.xlu0 %6188
        %6190 = vrot.lane.b32.xlu0 %v4661, 32
        %v6191 = vpop.permute.xlu0 %6190
        %6192 = vrot.lane.b32.xlu0 %v4666, 32
        %v6193 = vpop.permute.xlu0 %6192
        %6194 = vrot.lane.b32.xlu0 %v4671, 32
        %v6195 = vpop.permute.xlu0 %6194
        %6196 = vrot.lane.b32.xlu0 %v4676, 32
        %v6197 = vpop.permute.xlu0 %6196
        %6198 = vrot.lane.b32.xlu0 %v4681, 32
        %v6199 = vpop.permute.xlu0 %6198
        %6200 = vrot.lane.b32.xlu0 %v4686, 32
        %v6201 = vpop.permute.xlu0 %6200
        %6202 = vrot.lane.b32.xlu0 %v4691, 32
        %v6203 = vpop.permute.xlu0 %6202
        %6204 = vrot.lane.b32.xlu0 %v4696, 32
        %v6205 = vpop.permute.xlu0 %6204
        %6206 = vrot.lane.b32.xlu0 %v4701, 32
        %v6207 = vpop.permute.xlu0 %6206
        %6208 = vrot.lane.b32.xlu0 %v4706, 32
        %v6209 = vpop.permute.xlu0 %6208
        %6210 = vrot.lane.b32.xlu0 %v4711, 32
        %v6211 = vpop.permute.xlu0 %6210
        %6212 = vrot.lane.b32.xlu0 %v4716, 32
        %v6213 = vpop.permute.xlu0 %6212
        %6214 = vrot.lane.b32.xlu0 %v4721, 32
        %v6215 = vpop.permute.xlu0 %6214
        %6248 = vrot.lane.b32.xlu0 %v4922, 48
        %v6249 = vpop.permute.xlu0 %6248
        %6250 = vrot.lane.b32.xlu0 %v4927, 48
        %v6251 = vpop.permute.xlu0 %6250
        %6252 = vrot.lane.b32.xlu0 %v4932, 48
        %v6253 = vpop.permute.xlu0 %6252
        %6254 = vrot.lane.b32.xlu0 %v4937, 48
        %v6255 = vpop.permute.xlu0 %6254
        %6256 = vrot.lane.b32.xlu0 %v4942, 48
        %v6257 = vpop.permute.xlu0 %6256
        %6258 = vrot.lane.b32.xlu0 %v4947, 48
        %v6259 = vpop.permute.xlu0 %6258
        %6260 = vrot.lane.b32.xlu0 %v4952, 48
        %v6261 = vpop.permute.xlu0 %6260
        %6262 = vrot.lane.b32.xlu0 %v4957, 48
        %v6263 = vpop.permute.xlu0 %6262
        %6264 = vrot.lane.b32.xlu0 %v4962, 48
        %v6265 = vpop.permute.xlu0 %6264
        %6266 = vrot.lane.b32.xlu0 %v4967, 48
        %v6267 = vpop.permute.xlu0 %6266
        %6268 = vrot.lane.b32.xlu0 %v4972, 48
        %v6269 = vpop.permute.xlu0 %6268
        %6270 = vrot.lane.b32.xlu0 %v4977, 48
        %v6271 = vpop.permute.xlu0 %6270
        %6272 = vrot.lane.b32.xlu0 %v4982, 48
        %v6273 = vpop.permute.xlu0 %6272
        %6274 = vrot.lane.b32.xlu0 %v4987, 48
        %v6275 = vpop.permute.xlu0 %6274
        %6276 = vrot.lane.b32.xlu0 %v4992, 48
        %v6277 = vpop.permute.xlu0 %6276
        %6278 = vrot.lane.b32.xlu0 %v4997, 48
        %v6279 = vpop.permute.xlu0 %6278
        %6312 = vrot.lane.b32.xlu0 %v5198, 64
        %v6313 = vpop.permute.xlu0 %6312
        %6314 = vrot.lane.b32.xlu0 %v5203, 64
        %v6315 = vpop.permute.xlu0 %6314
        %6316 = vrot.lane.b32.xlu0 %v5208, 64
        %v6317 = vpop.permute.xlu0 %6316
        %6318 = vrot.lane.b32.xlu0 %v5213, 64
        %v6319 = vpop.permute.xlu0 %6318
        %6320 = vrot.lane.b32.xlu0 %v5218, 64
        %v6321 = vpop.permute.xlu0 %6320
        %6322 = vrot.lane.b32.xlu0 %v5223, 64
        %v6323 = vpop.permute.xlu0 %6322
        %6324 = vrot.lane.b32.xlu0 %v5228, 64
        %v6325 = vpop.permute.xlu0 %6324
        %6326 = vrot.lane.b32.xlu0 %v5233, 64
        %v6327 = vpop.permute.xlu0 %6326
        %6328 = vrot.lane.b32.xlu0 %v5238, 64
        %v6329 = vpop.permute.xlu0 %6328
        %6330 = vrot.lane.b32.xlu0 %v5243, 64
        %v6331 = vpop.permute.xlu0 %6330
        %6332 = vrot.lane.b32.xlu0 %v5248, 64
        %v6333 = vpop.permute.xlu0 %6332
        %6334 = vrot.lane.b32.xlu0 %v5253, 64
        %v6335 = vpop.permute.xlu0 %6334
        %6336 = vrot.lane.b32.xlu0 %v5258, 64
        %v6337 = vpop.permute.xlu0 %6336
        %6338 = vrot.lane.b32.xlu0 %v5263, 64
        %v6339 = vpop.permute.xlu0 %6338
        %6340 = vrot.lane.b32.xlu0 %v5268, 64
        %v6341 = vpop.permute.xlu0 %6340
        %6342 = vrot.lane.b32.xlu0 %v5273, 64
        %v6343 = vpop.permute.xlu0 %6342
        %6376 = vrot.lane.b32.xlu0 %v5474, 80
        %v6377 = vpop.permute.xlu0 %6376
        %6378 = vrot.lane.b32.xlu0 %v5479, 80
        %v6379 = vpop.permute.xlu0 %6378
        %6380 = vrot.lane.b32.xlu0 %v5484, 80
        %v6381 = vpop.permute.xlu0 %6380
        %6382 = vrot.lane.b32.xlu0 %v5489, 80
        %v6383 = vpop.permute.xlu0 %6382
        %6384 = vrot.lane.b32.xlu0 %v5494, 80
        %v6385 = vpop.permute.xlu0 %6384
        %6386 = vrot.lane.b32.xlu0 %v5499, 80
        %v6387 = vpop.permute.xlu0 %6386
        %6388 = vrot.lane.b32.xlu0 %v5504, 80
        %v6389 = vpop.permute.xlu0 %6388
        %6390 = vrot.lane.b32.xlu0 %v5509, 80
        %v6391 = vpop.permute.xlu0 %6390
        %6392 = vrot.lane.b32.xlu0 %v5514, 80
        %v6393 = vpop.permute.xlu0 %6392
        %6394 = vrot.lane.b32.xlu0 %v5519, 80
        %v6395 = vpop.permute.xlu0 %6394
        %6396 = vrot.lane.b32.xlu0 %v5524, 80
        %v6397 = vpop.permute.xlu0 %6396
        %6398 = vrot.lane.b32.xlu0 %v5529, 80
        %v6399 = vpop.permute.xlu0 %6398
        %6400 = vrot.lane.b32.xlu0 %v5534, 80
        %v6401 = vpop.permute.xlu0 %6400
        %6402 = vrot.lane.b32.xlu0 %v5539, 80
        %v6403 = vpop.permute.xlu0 %6402
        %6404 = vrot.lane.b32.xlu0 %v5544, 80
        %v6405 = vpop.permute.xlu0 %6404
        %6406 = vrot.lane.b32.xlu0 %v5549, 80
        %v6407 = vpop.permute.xlu0 %6406
        %6440 = vrot.lane.b32.xlu0 %v5750, 96
        %v6441 = vpop.permute.xlu0 %6440
        %6442 = vrot.lane.b32.xlu0 %v5755, 96
        %v6443 = vpop.permute.xlu0 %6442
        %6444 = vrot.lane.b32.xlu0 %v5760, 96
        %v6445 = vpop.permute.xlu0 %6444
        %6446 = vrot.lane.b32.xlu0 %v5765, 96
        %v6447 = vpop.permute.xlu0 %6446
        %6448 = vrot.lane.b32.xlu0 %v5770, 96
        %v6449 = vpop.permute.xlu0 %6448
        %6450 = vrot.lane.b32.xlu0 %v5775, 96
        %v6451 = vpop.permute.xlu0 %6450
        %6452 = vrot.lane.b32.xlu0 %v5780, 96
        %v6453 = vpop.permute.xlu0 %6452
        %6454 = vrot.lane.b32.xlu0 %v5785, 96
        %v6455 = vpop.permute.xlu0 %6454
        %6456 = vrot.lane.b32.xlu0 %v5790, 96
        %v6457 = vpop.permute.xlu0 %6456
        %6458 = vrot.lane.b32.xlu0 %v5795, 96
        %v6459 = vpop.permute.xlu0 %6458
        %6460 = vrot.lane.b32.xlu0 %v5800, 96
        %v6461 = vpop.permute.xlu0 %6460
        %6462 = vrot.lane.b32.xlu0 %v5805, 96
        %v6463 = vpop.permute.xlu0 %6462
        %6464 = vrot.lane.b32.xlu0 %v5810, 96
        %v6465 = vpop.permute.xlu0 %6464
        %6466 = vrot.lane.b32.xlu0 %v5815, 96
        %v6467 = vpop.permute.xlu0 %6466
        %6468 = vrot.lane.b32.xlu0 %v5820, 96
        %v6469 = vpop.permute.xlu0 %6468
        %6470 = vrot.lane.b32.xlu0 %v5825, 96
        %v6471 = vpop.permute.xlu0 %6470
        %6504 = vrot.lane.b32.xlu0 %v6026, 112
        %v6505 = vpop.permute.xlu0 %6504
        %6506 = vrot.lane.b32.xlu0 %v6031, 112
        %v6507 = vpop.permute.xlu0 %6506
        %6508 = vrot.lane.b32.xlu0 %v6036, 112
        %v6509 = vpop.permute.xlu0 %6508
        %6510 = vrot.lane.b32.xlu0 %v6041, 112
        %v6511 = vpop.permute.xlu0 %6510
        %6512 = vrot.lane.b32.xlu0 %v6046, 112
        %v6513 = vpop.permute.xlu0 %6512
        %6514 = vrot.lane.b32.xlu0 %v6051, 112
        %v6515 = vpop.permute.xlu0 %6514
        %6516 = vrot.lane.b32.xlu0 %v6056, 112
        %v6517 = vpop.permute.xlu0 %6516
        %6518 = vrot.lane.b32.xlu0 %v6061, 112
        %v6519 = vpop.permute.xlu0 %6518
        %6520 = vrot.lane.b32.xlu0 %v6066, 112
        %v6521 = vpop.permute.xlu0 %6520
        %6522 = vrot.lane.b32.xlu0 %v6071, 112
        %v6523 = vpop.permute.xlu0 %6522
        %6524 = vrot.lane.b32.xlu0 %v6076, 112
        %v6525 = vpop.permute.xlu0 %6524
        %6526 = vrot.lane.b32.xlu0 %v6081, 112
        %v6527 = vpop.permute.xlu0 %6526
        %6528 = vrot.lane.b32.xlu0 %v6086, 112
        %v6529 = vpop.permute.xlu0 %6528
        %6530 = vrot.lane.b32.xlu0 %v6091, 112
        %v6531 = vpop.permute.xlu0 %6530
        %6532 = vrot.lane.b32.xlu0 %v6096, 112
        %v6533 = vpop.permute.xlu0 %6532
        %6534 = vrot.lane.b32.xlu0 %v6101, 112
        %v6535 = vpop.permute.xlu0 %6534
        %v6552 = vsel %vm3638, %v4078, %v6121
        %v6553 = vsel %vm3638, %v4083, %v6123
        %v6554 = vsel %vm3638, %v4088, %v6125
        %v6555 = vsel %vm3638, %v4093, %v6127
        %v6556 = vsel %vm3638, %v4098, %v6129
        %v6557 = vsel %vm3638, %v4103, %v6131
        %v6558 = vsel %vm3638, %v4108, %v6133
        %v6559 = vsel %vm3638, %v4113, %v6135
        %v6560 = vsel %vm3638, %v4118, %v6137
        %v6561 = vsel %vm3638, %v4123, %v6139
        %v6562 = vsel %vm3638, %v4128, %v6141
        %v6563 = vsel %vm3638, %v4133, %v6143
        %v6564 = vsel %vm3638, %v4138, %v6145
        %v6565 = vsel %vm3638, %v4143, %v6147
        %v6566 = vsel %vm3638, %v4148, %v6149
        %v6567 = vsel %vm3638, %v4153, %v6151
        %v6568 = vsel %vm3655, %v6552, %v6185
        %v6569 = vsel %vm3655, %v6553, %v6187
        %v6570 = vsel %vm3655, %v6554, %v6189
        %v6571 = vsel %vm3655, %v6555, %v6191
        %v6572 = vsel %vm3655, %v6556, %v6193
        %v6573 = vsel %vm3655, %v6557, %v6195
        %v6574 = vsel %vm3655, %v6558, %v6197
        %v6575 = vsel %vm3655, %v6559, %v6199
        %v6576 = vsel %vm3655, %v6560, %v6201
        %v6577 = vsel %vm3655, %v6561, %v6203
        %v6578 = vsel %vm3655, %v6562, %v6205
        %v6579 = vsel %vm3655, %v6563, %v6207
        %v6580 = vsel %vm3655, %v6564, %v6209
        %v6581 = vsel %vm3655, %v6565, %v6211
        %v6582 = vsel %vm3655, %v6566, %v6213
        %v6583 = vsel %vm3655, %v6567, %v6215
        %v6584 = vsel %vm3672, %v6568, %v6249
        %v6585 = vsel %vm3672, %v6569, %v6251
        %v6586 = vsel %vm3672, %v6570, %v6253
        %v6587 = vsel %vm3672, %v6571, %v6255
        %v6588 = vsel %vm3672, %v6572, %v6257
        %v6589 = vsel %vm3672, %v6573, %v6259
        %v6590 = vsel %vm3672, %v6574, %v6261
        %v6591 = vsel %vm3672, %v6575, %v6263
        %v6592 = vsel %vm3672, %v6576, %v6265
        %v6593 = vsel %vm3672, %v6577, %v6267
        %v6594 = vsel %vm3672, %v6578, %v6269
        %v6595 = vsel %vm3672, %v6579, %v6271
        %v6596 = vsel %vm3672, %v6580, %v6273
        %v6597 = vsel %vm3672, %v6581, %v6275
        %v6598 = vsel %vm3672, %v6582, %v6277
        %v6599 = vsel %vm3672, %v6583, %v6279
        %v6600 = vsel %vm3689, %v6584, %v6313
        %v6601 = vsel %vm3689, %v6585, %v6315
        %v6602 = vsel %vm3689, %v6586, %v6317
        %v6603 = vsel %vm3689, %v6587, %v6319
        %v6604 = vsel %vm3689, %v6588, %v6321
        %v6605 = vsel %vm3689, %v6589, %v6323
        %v6606 = vsel %vm3689, %v6590, %v6325
        %v6607 = vsel %vm3689, %v6591, %v6327
        %v6608 = vsel %vm3689, %v6592, %v6329
        %v6609 = vsel %vm3689, %v6593, %v6331
        %v6610 = vsel %vm3689, %v6594, %v6333
        %v6611 = vsel %vm3689, %v6595, %v6335
        %v6612 = vsel %vm3689, %v6596, %v6337
        %v6613 = vsel %vm3689, %v6597, %v6339
        %v6614 = vsel %vm3689, %v6598, %v6341
        %v6615 = vsel %vm3689, %v6599, %v6343
        %v6616 = vsel %vm3706, %v6600, %v6377
        %v6617 = vsel %vm3706, %v6601, %v6379
        %v6618 = vsel %vm3706, %v6602, %v6381
        %v6619 = vsel %vm3706, %v6603, %v6383
        %v6620 = vsel %vm3706, %v6604, %v6385
        %v6621 = vsel %vm3706, %v6605, %v6387
        %v6622 = vsel %vm3706, %v6606, %v6389
        %v6623 = vsel %vm3706, %v6607, %v6391
        %v6624 = vsel %vm3706, %v6608, %v6393
        %v6625 = vsel %vm3706, %v6609, %v6395
        %v6626 = vsel %vm3706, %v6610, %v6397
        %v6627 = vsel %vm3706, %v6611, %v6399
        %v6628 = vsel %vm3706, %v6612, %v6401
        %v6629 = vsel %vm3706, %v6613, %v6403
        %v6630 = vsel %vm3706, %v6614, %v6405
        %v6631 = vsel %vm3706, %v6615, %v6407
        %v6632 = vsel %vm3723, %v6616, %v6441
        %v6633 = vsel %vm3723, %v6617, %v6443
        %v6634 = vsel %vm3723, %v6618, %v6445
        %v6635 = vsel %vm3723, %v6619, %v6447
        %v6636 = vsel %vm3723, %v6620, %v6449
        %v6637 = vsel %vm3723, %v6621, %v6451
        %v6638 = vsel %vm3723, %v6622, %v6453
        %v6639 = vsel %vm3723, %v6623, %v6455
        %v6640 = vsel %vm3723, %v6624, %v6457
        %v6641 = vsel %vm3723, %v6625, %v6459
        %v6642 = vsel %vm3723, %v6626, %v6461
        %v6643 = vsel %vm3723, %v6627, %v6463
        %v6644 = vsel %vm3723, %v6628, %v6465
        %v6645 = vsel %vm3723, %v6629, %v6467
        %v6646 = vsel %vm3723, %v6630, %v6469
        %v6647 = vsel %vm3723, %v6631, %v6471
        %v6648 = vsel %vm3740, %v6632, %v6505
        %v6649 = vsel %vm3740, %v6633, %v6507
        %v6650 = vsel %vm3740, %v6634, %v6509
        %v6651 = vsel %vm3740, %v6635, %v6511
        %v6652 = vsel %vm3740, %v6636, %v6513
        %v6653 = vsel %vm3740, %v6637, %v6515
        %v6654 = vsel %vm3740, %v6638, %v6517
        %v6655 = vsel %vm3740, %v6639, %v6519
        %v6656 = vsel %vm3740, %v6640, %v6521
        %v6657 = vsel %vm3740, %v6641, %v6523
        %v6658 = vsel %vm3740, %v6642, %v6525
        %v6659 = vsel %vm3740, %v6643, %v6527
        %v6660 = vsel %vm3740, %v6644, %v6529
        %v6661 = vsel %vm3740, %v6645, %v6531
        %v6662 = vsel %vm3740, %v6646, %v6533
        %v6663 = vsel %vm3740, %v6647, %v6535
        %v6665 = vlaneseq
        %v6666 = vshrl.u32 %v6665, 7
        %v6667 = vsub.s32 0, %v6666
        %v6668 = vrot.slane %v340, %v6667
        %6670 = vmatprep.subr.mxu0 0.0
        %6671 = vmatpush1.msra.mxu0 %v339
        %6672 = vmatprep.subr.mxu0 0.0
        %6673 = vmatpush1.msra.mxu0 %v338
        %6674 = vmatprep.subr.mxu0 0.0
        %6675 = vmatpush1.msra.mxu0 %v337
        %6676 = vmatprep.subr.mxu0 0.0
        %6677 = vmatpush1.msra.mxu0 %v336
        %6678 = vmatprep.subr.mxu0 0.0
        %6679 = vmatpush1.msra.mxu0 %v335
        %6680 = vmatprep.subr.mxu0 0.0
        %6681 = vmatpush1.msra.mxu0 %v334
        %6682 = vmatprep.subr.mxu0 0.0
        %6683 = vmatpush1.msra.mxu0 %v333
        %6684 = vmatprep.subr.mxu0 0.0
        %6685 = vmatpush1.msra.mxu0 %v332
        %6686 = vmatprep.subr.mxu0 0.0
        %6687 = vmatpush1.msra.mxu0 %v331
        %6688 = vmatprep.subr.mxu0 0.0
        %6689 = vmatpush1.msra.mxu0 %v330
        %6690 = vmatprep.subr.mxu0 0.0
        %6691 = vmatpush1.msra.mxu0 %v329
        %6692 = vmatprep.subr.mxu0 0.0
        %6693 = vmatpush1.msra.mxu0 %v328
        %6694 = vmatprep.subr.mxu0 0.0
        %6695 = vmatpush1.msra.mxu0 %v327
        %6696 = vmatprep.subr.mxu0 0.0
        %6697 = vmatpush1.msra.mxu0 %v326
        %6698 = vmatprep.subr.mxu0 0.0
        %6699 = vmatpush1.msra.mxu0 %v325
        %6700 = vmatprep.subr.mxu0 0.0
        %6701 = vmatpush1.msra.mxu0 %v324
        %6702 = vmatprep.subr.mxu0 0.0
        %6703 = vmatpush2.msra.mxu0 0.0
        %6704 = vmatprep.subr.mxu0 0.0
        %6705 = vmatpush2.msra.mxu0 0.0
        %6706 = vmatprep.subr.mxu0 0.0
        %6707 = vmatpush2.msra.mxu0 0.0
        %6708 = vmatprep.subr.mxu0 0.0
        %6709 = vmatpush2.msra.mxu0 0.0
        %6710 = vmatprep.subr.mxu0 0.0
        %6711 = vmatpush2.msra.mxu0 0.0
        %6712 = vmatprep.subr.mxu0 0.0
        %6713 = vmatpush2.msra.mxu0 0.0
        %6714 = vmatprep.subr.mxu0 0.0
        %6715 = vmatpush2.msra.mxu0 0.0
        %6716 = vmatprep.subr.mxu0 0.0
        %6717 = vmatpush2.msra.mxu0 0.0
        %6718 = vmatprep.subr.mxu0 0.0
        %6719 = vmatpush2.msra.mxu0 0.0
        %6720 = vmatprep.subr.mxu0 0.0
        %6721 = vmatpush2.msra.mxu0 0.0
        %6722 = vmatprep.subr.mxu0 0.0
        %6723 = vmatpush2.msra.mxu0 0.0
        %6724 = vmatprep.subr.mxu0 0.0
        %6725 = vmatpush2.msra.mxu0 0.0
        %6726 = vmatprep.subr.mxu0 0.0
        %6727 = vmatpush2.msra.mxu0 0.0
        %6728 = vmatprep.subr.mxu0 0.0
        %6729 = vmatpush2.msra.mxu0 0.0
        %6730 = vmatprep.subr.mxu0 0.0
        %6731 = vmatpush2.msra.mxu0 0.0
        %6732 = vmatprep.subr.mxu0 0.0
        %6733 = vmatpush2.msra.mxu0 0.0
        %6734 = vmatprep.mubr.f32.mxu0 0.0
        %6735 = vmatmul.mubr.f32.gmra.mxu0 %v3741
        %v6736 = vpop.f32.mrf.mxu0
        %v6737 = vadd.f32 %v6668, %v6736
        %v6738 = vpop.f32.mrf.mxu0
        %6739 = vmatprep.mubr.f32.mxu0 0.0
        %6740 = vmatmul.mubr.f32.gmra.mxu0 %v3742
        %v6741 = vpop.f32.mrf.mxu0
        %v6742 = vadd.f32 %v6668, %v6741
        %v6743 = vpop.f32.mrf.mxu0
        %6744 = vmatprep.mubr.f32.mxu0 0.0
        %6745 = vmatmul.mubr.f32.gmra.mxu0 %v3743
        %v6746 = vpop.f32.mrf.mxu0
        %v6747 = vadd.f32 %v6668, %v6746
        %v6748 = vpop.f32.mrf.mxu0
        %6749 = vmatprep.mubr.f32.mxu0 0.0
        %6750 = vmatmul.mubr.f32.gmra.mxu0 %v3744
        %v6751 = vpop.f32.mrf.mxu0
        %v6752 = vadd.f32 %v6668, %v6751
        %v6753 = vpop.f32.mrf.mxu0
        %6754 = vmatprep.mubr.f32.mxu0 0.0
        %6755 = vmatmul.mubr.f32.gmra.mxu0 %v3745
        %v6756 = vpop.f32.mrf.mxu0
        %v6757 = vadd.f32 %v6668, %v6756
        %v6758 = vpop.f32.mrf.mxu0
        %6759 = vmatprep.mubr.f32.mxu0 0.0
        %6760 = vmatmul.mubr.f32.gmra.mxu0 %v3746
        %v6761 = vpop.f32.mrf.mxu0
        %v6762 = vadd.f32 %v6668, %v6761
        %v6763 = vpop.f32.mrf.mxu0
        %6764 = vmatprep.mubr.f32.mxu0 0.0
        %6765 = vmatmul.mubr.f32.gmra.mxu0 %v3747
        %v6766 = vpop.f32.mrf.mxu0
        %v6767 = vadd.f32 %v6668, %v6766
        %v6768 = vpop.f32.mrf.mxu0
        %6769 = vmatprep.mubr.f32.mxu0 0.0
        %6770 = vmatmul.mubr.f32.gmra.mxu0 %v3748
        %v6771 = vpop.f32.mrf.mxu0
        %v6772 = vadd.f32 %v6668, %v6771
        %v6773 = vpop.f32.mrf.mxu0
        %6774 = vmatprep.mubr.f32.mxu0 0.0
        %6775 = vmatmul.mubr.f32.gmra.mxu0 %v3749
        %v6776 = vpop.f32.mrf.mxu0
        %v6777 = vadd.f32 %v6668, %v6776
        %v6778 = vpop.f32.mrf.mxu0
        %6779 = vmatprep.mubr.f32.mxu0 0.0
        %6780 = vmatmul.mubr.f32.gmra.mxu0 %v3750
        %v6781 = vpop.f32.mrf.mxu0
        %v6782 = vadd.f32 %v6668, %v6781
        %v6783 = vpop.f32.mrf.mxu0
        %6784 = vmatprep.mubr.f32.mxu0 0.0
        %6785 = vmatmul.mubr.f32.gmra.mxu0 %v3751
        %v6786 = vpop.f32.mrf.mxu0
        %v6787 = vadd.f32 %v6668, %v6786
        %v6788 = vpop.f32.mrf.mxu0
        %6789 = vmatprep.mubr.f32.mxu0 0.0
        %6790 = vmatmul.mubr.f32.gmra.mxu0 %v3752
        %v6791 = vpop.f32.mrf.mxu0
        %v6792 = vadd.f32 %v6668, %v6791
        %v6793 = vpop.f32.mrf.mxu0
        %6794 = vmatprep.mubr.f32.mxu0 0.0
        %6795 = vmatmul.mubr.f32.gmra.mxu0 %v3753
        %v6796 = vpop.f32.mrf.mxu0
        %v6797 = vadd.f32 %v6668, %v6796
        %v6798 = vpop.f32.mrf.mxu0
        %6799 = vmatprep.mubr.f32.mxu0 0.0
        %6800 = vmatmul.mubr.f32.gmra.mxu0 %v3754
        %v6801 = vpop.f32.mrf.mxu0
        %v6802 = vadd.f32 %v6668, %v6801
        %v6803 = vpop.f32.mrf.mxu0
        %6804 = vmatprep.mubr.f32.mxu0 0.0
        %6805 = vmatmul.mubr.f32.gmra.mxu0 %v3755
        %v6806 = vpop.f32.mrf.mxu0
        %v6807 = vadd.f32 %v6668, %v6806
        %v6808 = vpop.f32.mrf.mxu0
        %6809 = vmatprep.mubr.f32.mxu0 0.0
        %6810 = vmatmul.mubr.f32.gmra.mxu0 %v3756
        %v6811 = vpop.f32.mrf.mxu0
        %v6812 = vadd.f32 %v6668, %v6811
        %v6813 = vpop.f32.mrf.mxu0
        %6814 = vmatprep.mubr.f32.mxu0 0.0
        %6815 = vmatmul.mubr.f32.gmra.mxu0 %v6648
        %v6816 = vpop.f32.mrf.mxu0
        %v6817 = vadd.f32 %v6668, %v6816
        %v6818 = vpop.f32.mrf.mxu0
        %6819 = vmatprep.mubr.f32.mxu0 0.0
        %6820 = vmatmul.mubr.f32.gmra.mxu0 %v6649
        %v6821 = vpop.f32.mrf.mxu0
        %v6822 = vadd.f32 %v6668, %v6821
        %v6823 = vpop.f32.mrf.mxu0
        %6824 = vmatprep.mubr.f32.mxu0 0.0
        %6825 = vmatmul.mubr.f32.gmra.mxu0 %v6650
        %v6826 = vpop.f32.mrf.mxu0
        %v6827 = vadd.f32 %v6668, %v6826
        %v6828 = vpop.f32.mrf.mxu0
        %6829 = vmatprep.mubr.f32.mxu0 0.0
        %6830 = vmatmul.mubr.f32.gmra.mxu0 %v6651
        %v6831 = vpop.f32.mrf.mxu0
        %v6832 = vadd.f32 %v6668, %v6831
        %v6833 = vpop.f32.mrf.mxu0
        %6834 = vmatprep.mubr.f32.mxu0 0.0
        %6835 = vmatmul.mubr.f32.gmra.mxu0 %v6652
        %v6836 = vpop.f32.mrf.mxu0
        %v6837 = vadd.f32 %v6668, %v6836
        %v6838 = vpop.f32.mrf.mxu0
        %6839 = vmatprep.mubr.f32.mxu0 0.0
        %6840 = vmatmul.mubr.f32.gmra.mxu0 %v6653
        %v6841 = vpop.f32.mrf.mxu0
        %v6842 = vadd.f32 %v6668, %v6841
        %v6843 = vpop.f32.mrf.mxu0
        %6844 = vmatprep.mubr.f32.mxu0 0.0
        %6845 = vmatmul.mubr.f32.gmra.mxu0 %v6654
        %v6846 = vpop.f32.mrf.mxu0
        %v6847 = vadd.f32 %v6668, %v6846
        %v6848 = vpop.f32.mrf.mxu0
        %6849 = vmatprep.mubr.f32.mxu0 0.0
        %6850 = vmatmul.mubr.f32.gmra.mxu0 %v6655
        %v6851 = vpop.f32.mrf.mxu0
        %v6852 = vadd.f32 %v6668, %v6851
        %v6853 = vpop.f32.mrf.mxu0
        %6854 = vmatprep.mubr.f32.mxu0 0.0
        %6855 = vmatmul.mubr.f32.gmra.mxu0 %v6656
        %v6856 = vpop.f32.mrf.mxu0
        %v6857 = vadd.f32 %v6668, %v6856
        %v6858 = vpop.f32.mrf.mxu0
        %6859 = vmatprep.mubr.f32.mxu0 0.0
        %6860 = vmatmul.mubr.f32.gmra.mxu0 %v6657
        %v6861 = vpop.f32.mrf.mxu0
        %v6862 = vadd.f32 %v6668, %v6861
        %v6863 = vpop.f32.mrf.mxu0
        %6864 = vmatprep.mubr.f32.mxu0 0.0
        %6865 = vmatmul.mubr.f32.gmra.mxu0 %v6658
        %v6866 = vpop.f32.mrf.mxu0
        %v6867 = vadd.f32 %v6668, %v6866
        %v6868 = vpop.f32.mrf.mxu0
        %6869 = vmatprep.mubr.f32.mxu0 0.0
        %6870 = vmatmul.mubr.f32.gmra.mxu0 %v6659
        %v6871 = vpop.f32.mrf.mxu0
        %v6872 = vadd.f32 %v6668, %v6871
        %v6873 = vpop.f32.mrf.mxu0
        %6874 = vmatprep.mubr.f32.mxu0 0.0
        %6875 = vmatmul.mubr.f32.gmra.mxu0 %v6660
        %v6876 = vpop.f32.mrf.mxu0
        %v6877 = vadd.f32 %v6668, %v6876
        %v6878 = vpop.f32.mrf.mxu0
        %6879 = vmatprep.mubr.f32.mxu0 0.0
        %6880 = vmatmul.mubr.f32.gmra.mxu0 %v6661
        %v6881 = vpop.f32.mrf.mxu0
        %v6882 = vadd.f32 %v6668, %v6881
        %v6883 = vpop.f32.mrf.mxu0
        %6884 = vmatprep.mubr.f32.mxu0 0.0
        %6885 = vmatmul.mubr.f32.gmra.mxu0 %v6662
        %v6886 = vpop.f32.mrf.mxu0
        %v6887 = vadd.f32 %v6668, %v6886
        %v6888 = vpop.f32.mrf.mxu0
        %6889 = vmatprep.mubr.f32.mxu0 0.0
        %6890 = vmatmul.mubr.f32.gmra.mxu0 %v6663
        %v6891 = vpop.f32.mrf.mxu0
        %v6892 = vadd.f32 %v6668, %v6891
        %v6893 = vpop.f32.mrf.mxu0
        %6894 = vdwg.mxu0
        %6895 = vst [vmem:[%s257] sm:$0xff] %v6737
        %6896 = vst [vmem:[%s257 + $0x8] sm:$0xff] %v6742
        %6897 = vst [vmem:[%s257 + $0x10] sm:$0xff] %v6747
        %6898 = vst [vmem:[%s257 + $0x18] sm:$0xff] %v6752
        %6899 = vst [vmem:[%s257 + $0x20] sm:$0xff] %v6757
        %6900 = vst [vmem:[%s257 + $0x28] sm:$0xff] %v6762
        %6901 = vst [vmem:[%s257 + $0x30] sm:$0xff] %v6767
        %6902 = vst [vmem:[%s257 + $0x38] sm:$0xff] %v6772
        %6903 = vst [vmem:[%s257 + $0x40] sm:$0xff] %v6777
        %6904 = vst [vmem:[%s257 + $0x48] sm:$0xff] %v6782
        %6905 = vst [vmem:[%s257 + $0x50] sm:$0xff] %v6787
        %6906 = vst [vmem:[%s257 + $0x58] sm:$0xff] %v6792
        %6907 = vst [vmem:[%s257 + $0x60] sm:$0xff] %v6797
        %6908 = vst [vmem:[%s257 + $0x68] sm:$0xff] %v6802
        %6909 = vst [vmem:[%s257 + $0x70] sm:$0xff] %v6807
        %6910 = vst [vmem:[%s257 + $0x78] sm:$0xff] %v6812
        %6911 = vst [vmem:[%s257 + $0x80] sm:$0xff] %v6817
        %6912 = vst [vmem:[%s257 + $0x88] sm:$0xff] %v6822
        %6913 = vst [vmem:[%s257 + $0x90] sm:$0xff] %v6827
        %6914 = vst [vmem:[%s257 + $0x98] sm:$0xff] %v6832
        %6915 = vst [vmem:[%s257 + $0xa0] sm:$0xff] %v6837
        %6916 = vst [vmem:[%s257 + $0xa8] sm:$0xff] %v6842
        %6917 = vst [vmem:[%s257 + $0xb0] sm:$0xff] %v6847
        %6918 = vst [vmem:[%s257 + $0xb8] sm:$0xff] %v6852
        %6919 = vst [vmem:[%s257 + $0xc0] sm:$0xff] %v6857
        %6920 = vst [vmem:[%s257 + $0xc8] sm:$0xff] %v6862
        %6921 = vst [vmem:[%s257 + $0xd0] sm:$0xff] %v6867
        %6922 = vst [vmem:[%s257 + $0xd8] sm:$0xff] %v6872
        %6923 = vst [vmem:[%s257 + $0xe0] sm:$0xff] %v6877
        %6924 = vst [vmem:[%s257 + $0xe8] sm:$0xff] %v6882
        %6925 = vst [vmem:[%s257 + $0xf0] sm:$0xff] %v6887
        %6926 = vst [vmem:[%s257 + $0xf8] sm:$0xff] %v6892
        %s6927 = sand.u32 %s141, 1
        %s6928 = scalar_lea.sflag [#allocation4], %s6927
        %s6929 = sand.u32 %s141, 1
        %s6930 = smul.addr %s6929, 256
        %s6931 = scalar_lea.vmem [#allocation7], %s6930
        // Predicated region
        $region49: #{tpu_custom_call.1} parent=39 // pred_check
          %p6932 = pneg %p151
        $region50: #{tpu_custom_call.1} parent=39 // pred_check_branch
          %6934 = sbr.rel (%p6932) target = $region52
        $region51: #{tpu_custom_call.1} parent=39 // pred_region
          %s6935 = smul.u32 32, %s23
          %s6937 = ssub.s32 4096, 4096
          %6938 = vsyncadd %s6928, %s6937
          %s6939 = smul.addr %s6935, 128
          %s6940 = scalar_lea.hbm %s5, %s6939
          %s6941 = sshll.u32 %s6931, 4
          %s6942 = int_to_ptr.vmem [resolvable:$true] %s6941
          %6947 = dma.vmem_to_hbm [thread:$0]  %s6942, 4096, %s6940, %s6928, 128, 128, 8
        $region52: #{tpu_custom_call.1} parent=39 // pred_fallthru
          _
      $region40: #{tpu_custom_call.1} parent=5 // pred_fallthru
        _
      %p6948 = scmp.le.s32.totalorder 2, %s18
      // Predicated region
      $region53: #{tpu_custom_call.1} parent=5 // pred_check
        %p6949 = pneg %p6948
      $region54: #{tpu_custom_call.1} parent=5 // pred_check_branch
        %6951 = sbr.rel (%p6949) target = $region56
      $region55: #{tpu_custom_call.1} parent=5 // pred_region
        %s6952 = ssub.s32 %s18, 2
        // Predicated region
        $region57: #{tpu_custom_call.1} parent=55 // pred_check
          %p6953 = pneg %p157
        $region58: #{tpu_custom_call.1} parent=55 // pred_check_branch
          %6955 = sbr.rel (%p6953) target = $region60
        $region59: #{tpu_custom_call.1} parent=55 // pred_region
          %s6956 = sand.u32 %s142, 1
          %s6957 = scalar_lea.sflag [#allocation4], %s6956
          %s6958 = sand.u32 %s142, 1
          %s6959 = smul.addr %s6958, 256
          %s6960 = scalar_lea.vmem [#allocation7], %s6959
          %6961 = dma.done %s6957, 4096
        $region60: #{tpu_custom_call.1} parent=55 // pred_fallthru
          _
      $region56: #{tpu_custom_call.1} parent=5 // pred_fallthru
        _
    $region6: #{tpu_custom_call.1} parent=1 // loop_footer
      %s22 = sadd.s32 1, %s18
    $region7: #{tpu_custom_call.1} parent=1 // loop_footer_branch
      %17 = sbr.rel target = $region3
    $region8: #{tpu_custom_call.1} parent=1 // loop_exit
      _
    %6962 = vsyncpa [#allocation3], 1
    %s6963 = scalar_lea.sflag [#allocation3], 1
    %6964 = vsyncpa %s6963, 1
    %6965 = vsyncpa [#allocation6], 1
    %6966 = vsyncpa [#allocation4], 1
    %s6967 = scalar_lea.sflag [#allocation4], 1
    %6968 = vsyncpa %s6967, 1

</llo_original>
